<compile_context>
chip_gen: v5e
topology: v5e:2x2
jax: 0.10.0
libtpu: 0.0.40
codegen_flags: <defaults>
</compile_context>

<pallas_src>
import jax
import jax.numpy as jnp
from jax import lax
from jax.experimental import pallas as pl
from jax.experimental.pallas import tpu as pltpu

EPS = 1e-5
LANE = 128
MXU_DT = jnp.bfloat16            # MXU operand dtype (f32 accumulation everywhere)


def _default_vmem_limit():
    # <= ~48 MiB on 64 MiB parts (v7x), ~100 MiB on 128 MiB parts (v5e/v6e).
    try:
        cap = int(pltpu.get_tpu_info().vmem_capacity_bytes)
    except Exception:
        cap = 128 * 1024 * 1024
    return min(cap * 3 // 4, 100 * 1024 * 1024)


VMEM_LIMIT = _default_vmem_limit()


# ------------------------------ small helpers ------------------------------ #
def _round_up(x, m):
    return (x + m - 1) // m * m


def _largest_divisor_leq(n, cap):
    cap = max(1, min(n, cap))
    for d in range(cap, 0, -1):
        if n % d == 0:
            return d
    return 1


def _pick_nt(cout_p, rows):
    """Largest multiple-of-128 divisor of cout_p whose f32 register accumulator
    (rows x nt) stays <= ~128 KiB (about half the vreg file)."""
    nt = cout_p
    while nt > 128 and (cout_p % nt != 0 or rows * nt * 4 > 128 * 1024):
        nt -= 128
    return nt


def _phase_decompose(xp, s):
    """Split a spatially padded NHWC image into s*s stride phases so that a
    stride-s 3x3 tap becomes a contiguous (unit-stride) slice of one phase.
    Total bytes == input bytes (this replaces the 9x im2col materialization)."""
    n, hp, wp, c = xp.shape
    if s == 1:
        return xp                                        # (N, Hp, Wp, C)
    hq = -(-hp // s) * s
    wq = -(-wp // s) * s
    xp = jnp.pad(xp, ((0, 0), (0, hq - hp), (0, wq - wp), (0, 0)))
    x6 = xp.reshape(n, hq // s, s, wq // s, s, c)
    x6 = jnp.transpose(x6, (0, 2, 4, 1, 3, 5))           # (N, s, s, Hq/s, Wq/s, C)
    return x6.reshape(n * s * s, hq // s, wq // s, c)    # phase-major per image


def _pack_conv3x3(w_hwio, cin_p, cout_p):
    kh, kw, ci, co = w_hwio.shape
    w = jnp.pad(w_hwio, ((0, 0), (0, 0), (0, cin_p - ci), (0, cout_p - co)))
    return w.reshape(kh * kw, cin_p, cout_p).astype(MXU_DT)   # (9, Cin_p, Cout_p)


def _bn_affine(stats, gamma, beta, count, c_pad):
    """Fold global batch mean/var (from partial sums) + gamma/beta into a single
    per-channel (scale, shift) pair, packed as one (2, C) array.
    NOTE: gamma/beta are zero-padded, so padded lanes get scale=shift=0 (they must
    stay zero so no rsqrt(eps)-scaled garbage leaks into the next conv)."""
    tot = jnp.sum(stats.astype(jnp.float32), axis=(0, 1))      # (2, C)
    mean = tot[0] / count
    var = jnp.maximum(tot[1] / count - mean * mean, 0.0)       # biased var
    inv = lax.rsqrt(var + EPS)
    g = jnp.pad(gamma.astype(jnp.float32), (0, c_pad - gamma.shape[0]))
    b = jnp.pad(beta.astype(jnp.float32), (0, c_pad - beta.shape[0]))
    scale = g * inv
    shift = b - mean * scale
    return jnp.stack([scale, shift]).astype(jnp.float32)       # (2, C)


# ------------------------------ Pallas kernels ------------------------------ #
def _make_conv3x3_kernel(*, stride, tr, wout, hout, cin_p, cout_p, nt,
                         in_affine, fuse_shortcut):
    """Fused 3x3 conv (9-tap register-accumulated MXU matmuls) + per-tile
    per-channel (sum, sum^2) BN statistics.

    in_affine:     apply previous-BN scale/shift + ReLU to the input and rebuild
                   its zero padding in a bf16 VMEM scratch (once per image).
    fuse_shortcut: also emit the 1x1 'downsample' conv (= centre tap) + stats.
    """
    s = stride
    rows = tr * wout
    n_sub = cout_p // nt

    def kernel(*refs):
        it = iter(refs)
        x_ref = next(it)
        w_ref = next(it)
        aff_ref = next(it) if in_affine else None
        wd_ref = next(it) if fuse_shortcut else None
        y_ref = next(it)
        st_ref = next(it)
        if fuse_shortcut:
            ysc_ref = next(it)
            stsc_ref = next(it)
        pad_ref = next(it) if in_affine else None

        r = pl.program_id(1)
        row0 = r * tr

        if in_affine:
            # Once per image (r is the inner, SEQUENTIAL grid axis): apply the
            # previous BatchNorm affine + ReLU and embed the result into a
            # zero-BORDERED bf16 VMEM image so the taps see correct zero padding.
            @pl.when(r == 0)
            def _build_padded_input():
                zrow = jnp.zeros((1, wout + 2, cin_p), pad_ref.dtype)
                zcol = jnp.zeros((hout + 2, 1, cin_p), pad_ref.dtype)
                pad_ref[pl.ds(0, 1), :, :] = zrow
                pad_ref[pl.ds(hout + 1, 1), :, :] = zrow
                pad_ref[:, pl.ds(0, 1), :] = zcol
                pad_ref[:, pl.ds(wout + 1, 1), :] = zcol
                aff = aff_ref[...]                                  # (2, Cin_p)
                scale = aff[0:1, :].reshape(1, 1, cin_p)
                shift = aff[1:2, :].reshape(1, 1, cin_p)
                img = x_ref[0].astype(jnp.float32)                  # (H, W, Cin_p)
                pad_ref[pl.ds(1, hout), pl.ds(1, wout), :] = jnp.maximum(
                    img * scale + shift, 0.0).astype(pad_ref.dtype)

        def tap_lhs(di, dj):
            if in_affine:
                xs = pad_ref[pl.ds(row0 + di, tr), pl.ds(dj, wout), :]
            else:
                ph = (di % s) * s + (dj % s)
                xs = x_ref[ph, pl.ds(row0 + di // s, tr),
                           pl.ds(dj // s, wout), :]
            return xs.reshape(rows, cin_p).astype(MXU_DT)

        def emit(acc, out_ref, stat_ref, c0):
            out_ref[:, :, :, pl.ds(c0, nt)] = acc.reshape(
                1, tr, wout, nt).astype(out_ref.dtype)
            ssum = jnp.sum(acc, axis=0, keepdims=True)
            ssq = jnp.sum(acc * acc, axis=0, keepdims=True)
            stat_ref[:, :, :, pl.ds(c0, nt)] = jnp.concatenate(
                [ssum, ssq], axis=0).reshape(1, 1, 2, nt)

        # cout sub-tiles (register-accumulated 9-tap conv per sub-tile).
        for nb in range(n_sub):
            c0 = nb * nt
            acc = None
            accsc = None
            for di in range(3):
                for dj in range(3):
                    xs = tap_lhs(di, dj)
                    wt = w_ref[di * 3 + dj, :, pl.ds(c0, nt)]
                    part = jnp.dot(xs, wt, preferred_element_type=jnp.float32)
                    acc = part if acc is None else acc + part
                    if fuse_shortcut and di == 1 and dj == 1:
                        # centre tap == the 1x1 stride-s downsample conv input
                        wsc = wd_ref[:, pl.ds(c0, nt)]
                        accsc = jnp.dot(xs, wsc,
                                        preferred_element_type=jnp.float32)
            emit(acc, y_ref, st_ref, c0)
            if fuse_shortcut:
                emit(accsc, ysc_ref, stsc_ref, c0)

    return kernel


def _add_bn_relu_kernel(y_ref, sc_ref, affy_ref, affsc_ref, o_ref):
    """out = relu( (y * s_y + b_y) + (sc * s_sc + b_sc) ), per-channel affines."""
    affy = affy_ref[...]
    affsc = affsc_ref[...]
    y = y_ref[...].astype(jnp.float32)
    sc = sc_ref[...].astype(jnp.float32)
    res = y * affy[0:1, :] + affy[1:2, :]
    sct = sc * affsc[0:1, :] + affsc[1:2, :]
    o_ref[...] = jnp.maximum(res + sct, 0.0).astype(o_ref.dtype)


# ------------------------------ Pallas wrappers ----------------------------- #
def conv3x3_bn_stats(x_in, w_taps, *, stride, hout, wout, nbatch,
                     in_affine=None, w_short=None):
    """One fused pallas_call: 3x3 conv (+ optional fused input BN-apply + ReLU,
    + optional fused 1x1 shortcut conv), producing raw conv outputs plus per-tile
    per-channel (sum, sum^2) partial BatchNorm statistics."""
    cin_p = x_in.shape[-1]
    cout_p = w_taps.shape[-1]
    use_affine = in_affine is not None
    fuse_short = w_short is not None
    assert not (use_affine and stride != 1)

    # Row tile sized so one register accumulator (rows x nt f32) stays ~128 KiB.
    tr = _largest_divisor_leq(hout, max(1, 256 // max(wout, 1)))
    nrt = hout // tr
    rows = tr * wout
    nt = _pick_nt(cout_p, rows)
    s2 = stride * stride

    in_specs = []
    args = []
    if use_affine:
        in_specs.append(pl.BlockSpec((1, hout, wout, cin_p),
                                     lambda i, r: (i, 0, 0, 0)))
    else:
        hpl, wpl = x_in.shape[1], x_in.shape[2]
        in_specs.append(pl.BlockSpec((s2, hpl, wpl, cin_p),
                                     lambda i, r: (i, 0, 0, 0)))
    args.append(x_in)
    in_specs.append(pl.BlockSpec((9, cin_p, cout_p), lambda i, r: (0, 0, 0)))
    args.append(w_taps)
    if use_affine:
        in_specs.append(pl.BlockSpec((2, cin_p), lambda i, r: (0, 0)))
        args.append(in_affine)
    if fuse_short:
        in_specs.append(pl.BlockSpec((cin_p, cout_p), lambda i, r: (0, 0)))
        args.append(w_short)

    out_shape = [jax.ShapeDtypeStruct((nbatch, hout, wout, cout_p), MXU_DT),
                 jax.ShapeDtypeStruct((nbatch, nrt, 2, cout_p), jnp.float32)]
    out_specs = [pl.BlockSpec((1, tr, wout, cout_p), lambda i, r: (i, r, 0, 0)),
                 pl.BlockSpec((1, 1, 2, cout_p), lambda i, r: (i, r, 0, 0))]
    if fuse_short:
        # Shortcut raw output kept in bf16 (element-wise consumer only).
        out_shape += [jax.ShapeDtypeStruct((nbatch, hout, wout, cout_p), MXU_DT),
                      jax.ShapeDtypeStruct((nbatch, nrt, 2, cout_p), jnp.float32)]
        out_specs += [pl.BlockSpec((1, tr, wout, cout_p), lambda i, r: (i, r, 0, 0)),
                      pl.BlockSpec((1, 1, 2, cout_p), lambda i, r: (i, r, 0, 0))]

    scratch = []
    if use_affine:
        # bf16 padded image (read 9x per tile, written once per image).
        scratch.append(pltpu.VMEM((hout + 2, wout + 2, cin_p), MXU_DT))

    # conv1 has no cross-row-tile state -> both axes parallel (v7x dual TC);
    # conv2's r==0 pad build requires r sequential ("arbitrary").
    dims_sem = ("parallel", "arbitrary") if use_affine else ("parallel", "parallel")

    kernel = _make_conv3x3_kernel(stride=stride, tr=tr, wout=wout, hout=hout,
                                  cin_p=cin_p, cout_p=cout_p, nt=nt,
                                  in_affine=use_affine, fuse_shortcut=fuse_short)
    return pl.pallas_call(
        kernel,
        out_shape=tuple(out_shape),
        grid=(nbatch, nrt),
        in_specs=in_specs,
        out_specs=tuple(out_specs),
        scratch_shapes=tuple(scratch),
        compiler_params=pltpu.CompilerParams(
            dimension_semantics=dims_sem,
            vmem_limit_bytes=VMEM_LIMIT),
    )(*args)


def final_add_relu(y2_2d, sc_2d, aff_y, aff_sc):
    """Fused bn2-apply + shortcut-BN-apply + residual add + ReLU.
    Lane-dense tiles, bf16 in / bf16 out (stage is HBM-roofline bound)."""
    m, c = y2_2d.shape
    tm = min(2048, _round_up(m, 8))
    mp = _round_up(m, tm)
    if mp != m:
        y2_2d = jnp.pad(y2_2d, ((0, mp - m), (0, 0)))
        sc_2d = jnp.pad(sc_2d, ((0, mp - m), (0, 0)))
    out = pl.pallas_call(
        _add_bn_relu_kernel,
        out_shape=jax.ShapeDtypeStruct((mp, c), MXU_DT),
        grid=(mp // tm,),
        in_specs=[pl.BlockSpec((tm, c), lambda i: (i, 0)),
                  pl.BlockSpec((tm, c), lambda i: (i, 0)),
                  pl.BlockSpec((2, c), lambda i: (0, 0)),
                  pl.BlockSpec((2, c), lambda i: (0, 0))],
        out_specs=pl.BlockSpec((tm, c), lambda i: (i, 0)),
        compiler_params=pltpu.CompilerParams(
            dimension_semantics=("parallel",),
            vmem_limit_bytes=VMEM_LIMIT),
    )(y2_2d, sc_2d, aff_y, aff_sc)
    return out[:m]


# --------------------------------- forward ---------------------------------- #
def basic_block_forward(x_nchw, params, stride):
    """Equivalent of BasicBlock.forward (training-mode batch-statistics BN).
    Output is bf16 NCHW (MXU operands are bf16; accumulation/BN math in f32)."""
    x = jnp.transpose(x_nchw, (0, 2, 3, 1)).astype(jnp.float32)   # NCHW -> NHWC
    n, h, w, cin = x.shape
    cout = params["w1"].shape[-1]
    cip = _round_up(cin, LANE)
    cop = _round_up(cout, LANE)
    h1 = (h - 1) // stride + 1
    w1 = (w - 1) // stride + 1
    count = float(n * h1 * w1)
    has_ds = (cin != cout) or (stride != 1)

    # Lane-dense channel pad + spatial zero pad + stride-phase decomposition.
    xc = jnp.pad(x, ((0, 0), (0, 0), (0, 0), (0, cip - cin)))
    xp = jnp.pad(xc, ((0, 0), (1, 1), (1, 1), (0, 0)))
    xph = _phase_decompose(xp, stride).astype(MXU_DT)

    w1t = _pack_conv3x3(params["w1"], cip, cop)
    w2t = _pack_conv3x3(params["w2"], cop, cop)

    # conv1 (+ fused 1x1 downsample conv) + partial BN statistics.
    if has_ds:
        wd = jnp.pad(params["wd"],
                     ((0, cip - cin), (0, cop - cout))).astype(MXU_DT)
        y1_raw, st1, sc_raw, std = conv3x3_bn_stats(
            xph, w1t, stride=stride, hout=h1, wout=w1, nbatch=n, w_short=wd)
    else:
        y1_raw, st1 = conv3x3_bn_stats(
            xph, w1t, stride=stride, hout=h1, wout=w1, nbatch=n)

    aff1 = _bn_affine(st1, params["g1"], params["b1"], count, cop)

    # conv2 with bn1-apply + ReLU fused in-kernel (no extra y1 HBM pass).
    y2_raw, st2 = conv3x3_bn_stats(
        y1_raw, w2t, stride=1, hout=h1, wout=w1, nbatch=n, in_affine=aff1)
    aff2 = _bn_affine(st2, params["g2"], params["b2"], count, cop)

    if has_ds:
        aff_sc = _bn_affine(std, params["gd"], params["bd"], count, cop)
        sc2d = sc_raw.reshape(n * h1 * w1, cop)            # bf16
    else:
        aff_sc = jnp.stack([jnp.ones((cop,), jnp.float32),
                            jnp.zeros((cop,), jnp.float32)])
        sc2d = xc.reshape(n * h1 * w1, cop).astype(MXU_DT)  # identity shortcut

    m = n * h1 * w1
    out2d = final_add_relu(y2_raw.reshape(m, cop), sc2d, aff2, aff_sc)
    out = out2d.reshape(n, h1, w1, cop)[..., :cout]
    return jnp.transpose(out, (0, 3, 1, 2))                 # NHWC -> NCHW (bf16)


# ---------------------------- pure-JAX reference ----------------------------- #
def reference_forward(x_nchw, params, stride):
    def conv(x, wgt, s, pad):
        return lax.conv_general_dilated(
            x, wgt, (s, s), ((pad, pad), (pad, pad)),
            dimension_numbers=("NCHW", "HWIO", "NCHW"))

    def bn(x, g, b):
        mean = jnp.mean(x, axis=(0, 2, 3), keepdims=True)
        var = jnp.mean(jnp.square(x - mean), axis=(0, 2, 3), keepdims=True)
        return ((x - mean) * lax.rsqrt(var + EPS) * g.reshape(1, -1, 1, 1)
                + b.reshape(1, -1, 1, 1))

    cin = x_nchw.shape[1]
    cout = params["w1"].shape[-1]
    r = conv(x_nchw, params["w1"], stride, 1)
    r = jnp.maximum(bn(r, params["g1"], params["b1"]), 0.0)
    r = conv(r, params["w2"], 1, 1)
    r = bn(r, params["g2"], params["b2"])
    if (cin != cout) or (stride != 1):
        sc = conv(x_nchw, params["wd"].reshape(1, 1, cin, cout), stride, 0)
        sc = bn(sc, params["gd"], params["bd"])
    else:
        sc = x_nchw
    return jnp.maximum(sc + r, 0.0)


# ----------------------------------- main ------------------------------------ #
if __name__ == "__main__":
    key = jax.random.PRNGKey(0)

    def make_params(k, cin, cout, has_ds):
        ks = jax.random.split(k, 8)
        p = {
            "w1": 0.1 * jax.random.normal(ks[0], (3, 3, cin, cout), jnp.float32),
            "g1": 1.0 + 0.1 * jax.random.normal(ks[1], (cout,), jnp.float32),
            "b1": 0.1 * jax.random.normal(ks[2], (cout,), jnp.float32),
            "w2": 0.1 * jax.random.normal(ks[3], (3, 3, cout, cout), jnp.float32),
            "g2": 1.0 + 0.1 * jax.random.normal(ks[4], (cout,), jnp.float32),
            "b2": 0.1 * jax.random.normal(ks[5], (cout,), jnp.float32),
        }
        if has_ds:
            p["wd"] = 0.1 * jax.random.normal(ks[6], (cin, cout), jnp.float32)
            p["gd"] = 1.0 + 0.1 * jax.random.normal(ks[7], (cout,), jnp.float32)
            p["bd"] = 0.05 * jnp.ones((cout,), jnp.float32)
        return p

    fwd = jax.jit(basic_block_forward, static_argnums=(2,))

    # bf16 MXU operands / bf16 output -> compare against the f32 reference with a
    # bf16-level tolerance (an indexing/fusion bug would produce O(1) errors).
    TOL = 1e-1

    # Case 1: downsample path (stride 2, channel change) -- the primary config.
    k1, k2, k3, k4 = jax.random.split(key, 4)
    params_ds = make_params(k1, 4, 8, has_ds=True)
    x_ds = jax.random.normal(k2, (2, 4, 16, 16), jnp.float32)
    out_ds = jax.block_until_ready(fwd(x_ds, params_ds, 2))
    ref_ds = jax.block_until_ready(reference_forward(x_ds, params_ds, 2))
    assert out_ds.shape == (2, 8, 8, 8), out_ds.shape
    err_ds = float(jnp.max(jnp.abs(out_ds.astype(jnp.float32) - ref_ds)))
    if err_ds > TOL:
        raise AssertionError(f"downsample-path mismatch: max_err={err_ds}")

    # Case 2: identity-shortcut path (stride 1, same channels).
    params_id = make_params(k3, 8, 8, has_ds=False)
    x_id = jax.random.normal(k4, (2, 8, 16, 16), jnp.float32)
    out_id = jax.block_until_ready(fwd(x_id, params_id, 1))
    ref_id = jax.block_until_ready(reference_forward(x_id, params_id, 1))
    assert out_id.shape == (2, 8, 16, 16), out_id.shape
    err_id = float(jnp.max(jnp.abs(out_id.astype(jnp.float32) - ref_id)))
    if err_id > TOL:
        raise AssertionError(f"identity-path mismatch: max_err={err_id}")

    print("KERNEL_OK")
</pallas_src>

<mosaic_0001>
module attributes {stable_mosaic.version = 11 : i64} {
  func.func @kernel(%arg0: i32, %arg1: i32, %arg2: memref<4x9x9x128xbf16, #tpu.memory_space<vmem>>, %arg3: memref<9x128x128xbf16, #tpu.memory_space<vmem>>, %arg4: memref<128x128xbf16, #tpu.memory_space<vmem>>, %arg5: memref<1x8x8x128xbf16, #tpu.memory_space<vmem>>, %arg6: memref<1x1x2x128xf32, #tpu.memory_space<vmem>>, %arg7: memref<1x8x8x128xbf16, #tpu.memory_space<vmem>>, %arg8: memref<1x1x2x128xf32, #tpu.memory_space<vmem>>) attributes {dimension_semantics = [#tpu.dimension_semantics<parallel>, #tpu.dimension_semantics<parallel>], iteration_bounds = array<i64: 2, 1>, scalar_prefetch = 0 : i64, scratch_operands = 0 : i64, tpu.core_type = #tpu.core_type<tc>, window_params = [{transform_indices = @transform_0, window_bounds = array<i64: 4, 9, 9, 128>}, {pipeline_mode = #tpu.pipeline_mode<synchronous>, transform_indices = @transform_1, window_bounds = array<i64: 9, 128, 128>}, {pipeline_mode = #tpu.pipeline_mode<synchronous>, transform_indices = @transform_2, window_bounds = array<i64: 128, 128>}, {transform_indices = @transform_3, window_bounds = array<i64: 1, 8, 8, 128>}, {transform_indices = @transform_4, window_bounds = array<i64: 1, 1, 2, 128>}, {transform_indices = @transform_5, window_bounds = array<i64: 1, 8, 8, 128>}, {transform_indices = @transform_6, window_bounds = array<i64: 1, 1, 2, 128>}]} {
    %c8_i32 = arith.constant 8 : i32
    %0 = arith.muli %arg1, %c8_i32 : i32
    %c0_i32 = arith.constant 0 : i32
    %1 = arith.addi %0, %c0_i32 : i32
    %c0 = arith.constant 0 : index
    %2 = arith.index_cast %1 : i32 to index
    %c0_0 = arith.constant 0 : index
    %c0_1 = arith.constant 0 : index
    %3 = vector.load %arg2[%c0, %2, %c0_0, %c0_1] : memref<4x9x9x128xbf16, #tpu.memory_space<vmem>>, vector<1x8x8x128xbf16>
    %4 = vector.shape_cast %3 : vector<1x8x8x128xbf16> to vector<8x8x128xbf16>
    %5 = vector.shape_cast %4 : vector<8x8x128xbf16> to vector<64x128xbf16>
    %c0_2 = arith.constant 0 : index
    %c0_3 = arith.constant 0 : index
    %c0_4 = arith.constant 0 : index
    %6 = vector.load %arg3[%c0_2, %c0_3, %c0_4] : memref<9x128x128xbf16, #tpu.memory_space<vmem>>, vector<1x128x128xbf16>
    %7 = vector.shape_cast %6 : vector<1x128x128xbf16> to vector<128x128xbf16>
    %cst = arith.constant dense<0.000000e+00> : vector<64x128xf32>
    %8 = tpu.matmul %5, %7, %cst {dimension_numbers = #tpu.dot_dimension_numbers<[1], [0], [0], [1], [0, 0, 1, 1], [], []>} : vector<64x128xbf16>, vector<128x128xbf16>, vector<64x128xf32> -> vector<64x128xf32>
    %c0_i32_5 = arith.constant 0 : i32
    %9 = arith.addi %0, %c0_i32_5 : i32
    %c1 = arith.constant 1 : index
    %10 = arith.index_cast %9 : i32 to index
    %c0_6 = arith.constant 0 : index
    %c0_7 = arith.constant 0 : index
    %11 = vector.load %arg2[%c1, %10, %c0_6, %c0_7] : memref<4x9x9x128xbf16, #tpu.memory_space<vmem>>, vector<1x8x8x128xbf16>
    %12 = vector.shape_cast %11 : vector<1x8x8x128xbf16> to vector<8x8x128xbf16>
    %13 = vector.shape_cast %12 : vector<8x8x128xbf16> to vector<64x128xbf16>
    %c1_8 = arith.constant 1 : index
    %c0_9 = arith.constant 0 : index
    %c0_10 = arith.constant 0 : index
    %14 = vector.load %arg3[%c1_8, %c0_9, %c0_10] : memref<9x128x128xbf16, #tpu.memory_space<vmem>>, vector<1x128x128xbf16>
    %15 = vector.shape_cast %14 : vector<1x128x128xbf16> to vector<128x128xbf16>
    %cst_11 = arith.constant dense<0.000000e+00> : vector<64x128xf32>
    %16 = tpu.matmul %13, %15, %cst_11 {dimension_numbers = #tpu.dot_dimension_numbers<[1], [0], [0], [1], [0, 0, 1, 1], [], []>} : vector<64x128xbf16>, vector<128x128xbf16>, vector<64x128xf32> -> vector<64x128xf32>
    %17 = arith.addf %8, %16 : vector<64x128xf32>
    %c0_i32_12 = arith.constant 0 : i32
    %18 = arith.addi %0, %c0_i32_12 : i32
    %c0_13 = arith.constant 0 : index
    %19 = arith.index_cast %18 : i32 to index
    %c1_14 = arith.constant 1 : index
    %c0_15 = arith.constant 0 : index
    %20 = vector.load %arg2[%c0_13, %19, %c1_14, %c0_15] : memref<4x9x9x128xbf16, #tpu.memory_space<vmem>>, vector<1x8x8x128xbf16>
    %21 = vector.shape_cast %20 : vector<1x8x8x128xbf16> to vector<8x8x128xbf16>
    %22 = vector.shape_cast %21 : vector<8x8x128xbf16> to vector<64x128xbf16>
    %c2 = arith.constant 2 : index
    %c0_16 = arith.constant 0 : index
    %c0_17 = arith.constant 0 : index
    %23 = vector.load %arg3[%c2, %c0_16, %c0_17] : memref<9x128x128xbf16, #tpu.memory_space<vmem>>, vector<1x128x128xbf16>
    %24 = vector.shape_cast %23 : vector<1x128x128xbf16> to vector<128x128xbf16>
    %cst_18 = arith.constant dense<0.000000e+00> : vector<64x128xf32>
    %25 = tpu.matmul %22, %24, %cst_18 {dimension_numbers = #tpu.dot_dimension_numbers<[1], [0], [0], [1], [0, 0, 1, 1], [], []>} : vector<64x128xbf16>, vector<128x128xbf16>, vector<64x128xf32> -> vector<64x128xf32>
    %26 = arith.addf %17, %25 : vector<64x128xf32>
    %c0_i32_19 = arith.constant 0 : i32
    %27 = arith.addi %0, %c0_i32_19 : i32
    %c2_20 = arith.constant 2 : index
    %28 = arith.index_cast %27 : i32 to index
    %c0_21 = arith.constant 0 : index
    %c0_22 = arith.constant 0 : index
    %29 = vector.load %arg2[%c2_20, %28, %c0_21, %c0_22] : memref<4x9x9x128xbf16, #tpu.memory_space<vmem>>, vector<1x8x8x128xbf16>
    %30 = vector.shape_cast %29 : vector<1x8x8x128xbf16> to vector<8x8x128xbf16>
    %31 = vector.shape_cast %30 : vector<8x8x128xbf16> to vector<64x128xbf16>
    %c3 = arith.constant 3 : index
    %c0_23 = arith.constant 0 : index
    %c0_24 = arith.constant 0 : index
    %32 = vector.load %arg3[%c3, %c0_23, %c0_24] : memref<9x128x128xbf16, #tpu.memory_space<vmem>>, vector<1x128x128xbf16>
    %33 = vector.shape_cast %32 : vector<1x128x128xbf16> to vector<128x128xbf16>
    %cst_25 = arith.constant dense<0.000000e+00> : vector<64x128xf32>
    %34 = tpu.matmul %31, %33, %cst_25 {dimension_numbers = #tpu.dot_dimension_numbers<[1], [0], [0], [1], [0, 0, 1, 1], [], []>} : vector<64x128xbf16>, vector<128x128xbf16>, vector<64x128xf32> -> vector<64x128xf32>
    %35 = arith.addf %26, %34 : vector<64x128xf32>
    %c0_i32_26 = arith.constant 0 : i32
    %36 = arith.addi %0, %c0_i32_26 : i32
    %c3_27 = arith.constant 3 : index
    %37 = arith.index_cast %36 : i32 to index
    %c0_28 = arith.constant 0 : index
    %c0_29 = arith.constant 0 : index
    %38 = vector.load %arg2[%c3_27, %37, %c0_28, %c0_29] : memref<4x9x9x128xbf16, #tpu.memory_space<vmem>>, vector<1x8x8x128xbf16>
    %39 = vector.shape_cast %38 : vector<1x8x8x128xbf16> to vector<8x8x128xbf16>
    %40 = vector.shape_cast %39 : vector<8x8x128xbf16> to vector<64x128xbf16>
    %c4 = arith.constant 4 : index
    %c0_30 = arith.constant 0 : index
    %c0_31 = arith.constant 0 : index
    %41 = vector.load %arg3[%c4, %c0_30, %c0_31] : memref<9x128x128xbf16, #tpu.memory_space<vmem>>, vector<1x128x128xbf16>
    %42 = vector.shape_cast %41 : vector<1x128x128xbf16> to vector<128x128xbf16>
    %cst_32 = arith.constant dense<0.000000e+00> : vector<64x128xf32>
    %43 = tpu.matmul %40, %42, %cst_32 {dimension_numbers = #tpu.dot_dimension_numbers<[1], [0], [0], [1], [0, 0, 1, 1], [], []>} : vector<64x128xbf16>, vector<128x128xbf16>, vector<64x128xf32> -> vector<64x128xf32>
    %44 = arith.addf %35, %43 : vector<64x128xf32>
    %c0_33 = arith.constant 0 : index
    %c0_34 = arith.constant 0 : index
    %45 = vector.load %arg4[%c0_33, %c0_34] : memref<128x128xbf16, #tpu.memory_space<vmem>>, vector<128x128xbf16>
    %cst_35 = arith.constant dense<0.000000e+00> : vector<64x128xf32>
    %46 = tpu.matmul %40, %45, %cst_35 {dimension_numbers = #tpu.dot_dimension_numbers<[1], [0], [0], [1], [0, 0, 1, 1], [], []>} : vector<64x128xbf16>, vector<128x128xbf16>, vector<64x128xf32> -> vector<64x128xf32>
    %c0_i32_36 = arith.constant 0 : i32
    %47 = arith.addi %0, %c0_i32_36 : i32
    %c2_37 = arith.constant 2 : index
    %48 = arith.index_cast %47 : i32 to index
    %c1_38 = arith.constant 1 : index
    %c0_39 = arith.constant 0 : index
    %49 = vector.load %arg2[%c2_37, %48, %c1_38, %c0_39] : memref<4x9x9x128xbf16, #tpu.memory_space<vmem>>, vector<1x8x8x128xbf16>
    %50 = vector.shape_cast %49 : vector<1x8x8x128xbf16> to vector<8x8x128xbf16>
    %51 = vector.shape_cast %50 : vector<8x8x128xbf16> to vector<64x128xbf16>
    %c5 = arith.constant 5 : index
    %c0_40 = arith.constant 0 : index
    %c0_41 = arith.constant 0 : index
    %52 = vector.load %arg3[%c5, %c0_40, %c0_41] : memref<9x128x128xbf16, #tpu.memory_space<vmem>>, vector<1x128x128xbf16>
    %53 = vector.shape_cast %52 : vector<1x128x128xbf16> to vector<128x128xbf16>
    %cst_42 = arith.constant dense<0.000000e+00> : vector<64x128xf32>
    %54 = tpu.matmul %51, %53, %cst_42 {dimension_numbers = #tpu.dot_dimension_numbers<[1], [0], [0], [1], [0, 0, 1, 1], [], []>} : vector<64x128xbf16>, vector<128x128xbf16>, vector<64x128xf32> -> vector<64x128xf32>
    %55 = arith.addf %44, %54 : vector<64x128xf32>
    %c1_i32 = arith.constant 1 : i32
    %56 = arith.addi %0, %c1_i32 : i32
    %c0_43 = arith.constant 0 : index
    %57 = arith.index_cast %56 : i32 to index
    %c0_44 = arith.constant 0 : index
    %c0_45 = arith.constant 0 : index
    %58 = vector.load %arg2[%c0_43, %57, %c0_44, %c0_45] : memref<4x9x9x128xbf16, #tpu.memory_space<vmem>>, vector<1x8x8x128xbf16>
    %59 = vector.shape_cast %58 : vector<1x8x8x128xbf16> to vector<8x8x128xbf16>
    %60 = vector.shape_cast %59 : vector<8x8x128xbf16> to vector<64x128xbf16>
    %c6 = arith.constant 6 : index
    %c0_46 = arith.constant 0 : index
    %c0_47 = arith.constant 0 : index
    %61 = vector.load %arg3[%c6, %c0_46, %c0_47] : memref<9x128x128xbf16, #tpu.memory_space<vmem>>, vector<1x128x128xbf16>
    %62 = vector.shape_cast %61 : vector<1x128x128xbf16> to vector<128x128xbf16>
    %cst_48 = arith.constant dense<0.000000e+00> : vector<64x128xf32>
    %63 = tpu.matmul %60, %62, %cst_48 {dimension_numbers = #tpu.dot_dimension_numbers<[1], [0], [0], [1], [0, 0, 1, 1], [], []>} : vector<64x128xbf16>, vector<128x128xbf16>, vector<64x128xf32> -> vector<64x128xf32>
    %64 = arith.addf %55, %63 : vector<64x128xf32>
    %c1_i32_49 = arith.constant 1 : i32
    %65 = arith.addi %0, %c1_i32_49 : i32
    %c1_50 = arith.constant 1 : index
    %66 = arith.index_cast %65 : i32 to index
    %c0_51 = arith.constant 0 : index
    %c0_52 = arith.constant 0 : index
    %67 = vector.load %arg2[%c1_50, %66, %c0_51, %c0_52] : memref<4x9x9x128xbf16, #tpu.memory_space<vmem>>, vector<1x8x8x128xbf16>
    %68 = vector.shape_cast %67 : vector<1x8x8x128xbf16> to vector<8x8x128xbf16>
    %69 = vector.shape_cast %68 : vector<8x8x128xbf16> to vector<64x128xbf16>
    %c7 = arith.constant 7 : index
    %c0_53 = arith.constant 0 : index
    %c0_54 = arith.constant 0 : index
    %70 = vector.load %arg3[%c7, %c0_53, %c0_54] : memref<9x128x128xbf16, #tpu.memory_space<vmem>>, vector<1x128x128xbf16>
    %71 = vector.shape_cast %70 : vector<1x128x128xbf16> to vector<128x128xbf16>
    %cst_55 = arith.constant dense<0.000000e+00> : vector<64x128xf32>
    %72 = tpu.matmul %69, %71, %cst_55 {dimension_numbers = #tpu.dot_dimension_numbers<[1], [0], [0], [1], [0, 0, 1, 1], [], []>} : vector<64x128xbf16>, vector<128x128xbf16>, vector<64x128xf32> -> vector<64x128xf32>
    %73 = arith.addf %64, %72 : vector<64x128xf32>
    %c1_i32_56 = arith.constant 1 : i32
    %74 = arith.addi %0, %c1_i32_56 : i32
    %c0_57 = arith.constant 0 : index
    %75 = arith.index_cast %74 : i32 to index
    %c1_58 = arith.constant 1 : index
    %c0_59 = arith.constant 0 : index
    %76 = vector.load %arg2[%c0_57, %75, %c1_58, %c0_59] : memref<4x9x9x128xbf16, #tpu.memory_space<vmem>>, vector<1x8x8x128xbf16>
    %77 = vector.shape_cast %76 : vector<1x8x8x128xbf16> to vector<8x8x128xbf16>
    %78 = vector.shape_cast %77 : vector<8x8x128xbf16> to vector<64x128xbf16>
    %c8 = arith.constant 8 : index
    %c0_60 = arith.constant 0 : index
    %c0_61 = arith.constant 0 : index
    %79 = vector.load %arg3[%c8, %c0_60, %c0_61] : memref<9x128x128xbf16, #tpu.memory_space<vmem>>, vector<1x128x128xbf16>
    %80 = vector.shape_cast %79 : vector<1x128x128xbf16> to vector<128x128xbf16>
    %cst_62 = arith.constant dense<0.000000e+00> : vector<64x128xf32>
    %81 = tpu.matmul %78, %80, %cst_62 {dimension_numbers = #tpu.dot_dimension_numbers<[1], [0], [0], [1], [0, 0, 1, 1], [], []>} : vector<64x128xbf16>, vector<128x128xbf16>, vector<64x128xf32> -> vector<64x128xf32>
    %82 = arith.addf %73, %81 : vector<64x128xf32>
    %83 = vector.shape_cast %82 : vector<64x128xf32> to vector<1x8x8x128xf32>
    %84 = arith.truncf %83 : vector<1x8x8x128xf32> to vector<1x8x8x128xbf16>
    %c0_63 = arith.constant 0 : index
    %c0_64 = arith.constant 0 : index
    %c0_65 = arith.constant 0 : index
    %c0_66 = arith.constant 0 : index
    %85 = vector.load %arg5[%c0_63, %c0_64, %c0_65, %c0_66] : memref<1x8x8x128xbf16, #tpu.memory_space<vmem>>, vector<1x8x8x128xbf16>
    tpu.vector_store %arg5[%c0_63, %c0_64, %c0_65, %c0_66], %84 {strides = array<i32>} : memref<1x8x8x128xbf16, #tpu.memory_space<vmem>>, vector<1x8x8x128xbf16>,
    %cst_67 = arith.constant dense<0.000000e+00> : vector<128xf32>
    %86 = vector.multi_reduction <add>, %82, %cst_67 [0] : vector<64x128xf32> to vector<128xf32>
    %87 = vector.shape_cast %86 : vector<128xf32> to vector<1x128xf32>
    %88 = arith.mulf %82, %82 : vector<64x128xf32>
    %cst_68 = arith.constant dense<0.000000e+00> : vector<128xf32>
    %89 = vector.multi_reduction <add>, %88, %cst_68 [0] : vector<64x128xf32> to vector<128xf32>
    %90 = vector.shape_cast %89 : vector<128xf32> to vector<1x128xf32>
    %91 = tpu.concatenate %87, %90 in 0 : vector<1x128xf32>, vector<1x128xf32> -> vector<2x128xf32>
    %92 = vector.shape_cast %91 : vector<2x128xf32> to vector<1x1x2x128xf32>
    %c0_69 = arith.constant 0 : index
    %c0_70 = arith.constant 0 : index
    %c0_71 = arith.constant 0 : index
    %c0_72 = arith.constant 0 : index
    %93 = vector.load %arg6[%c0_69, %c0_70, %c0_71, %c0_72] : memref<1x1x2x128xf32, #tpu.memory_space<vmem>>, vector<1x1x2x128xf32>
    tpu.vector_store %arg6[%c0_69, %c0_70, %c0_71, %c0_72], %92 {strides = array<i32>} : memref<1x1x2x128xf32, #tpu.memory_space<vmem>>, vector<1x1x2x128xf32>,
    %94 = vector.shape_cast %46 : vector<64x128xf32> to vector<1x8x8x128xf32>
    %95 = arith.truncf %94 : vector<1x8x8x128xf32> to vector<1x8x8x128xbf16>
    %c0_73 = arith.constant 0 : index
    %c0_74 = arith.constant 0 : index
    %c0_75 = arith.constant 0 : index
    %c0_76 = arith.constant 0 : index
    %96 = vector.load %arg7[%c0_73, %c0_74, %c0_75, %c0_76] : memref<1x8x8x128xbf16, #tpu.memory_space<vmem>>, vector<1x8x8x128xbf16>
    tpu.vector_store %arg7[%c0_73, %c0_74, %c0_75, %c0_76], %95 {strides = array<i32>} : memref<1x8x8x128xbf16, #tpu.memory_space<vmem>>, vector<1x8x8x128xbf16>,
    %cst_77 = arith.constant dense<0.000000e+00> : vector<128xf32>
    %97 = vector.multi_reduction <add>, %46, %cst_77 [0] : vector<64x128xf32> to vector<128xf32>
    %98 = vector.shape_cast %97 : vector<128xf32> to vector<1x128xf32>
    %99 = arith.mulf %46, %46 : vector<64x128xf32>
    %cst_78 = arith.constant dense<0.000000e+00> : vector<128xf32>
    %100 = vector.multi_reduction <add>, %99, %cst_78 [0] : vector<64x128xf32> to vector<128xf32>
    %101 = vector.shape_cast %100 : vector<128xf32> to vector<1x128xf32>
    %102 = tpu.concatenate %98, %101 in 0 : vector<1x128xf32>, vector<1x128xf32> -> vector<2x128xf32>
    %103 = vector.shape_cast %102 : vector<2x128xf32> to vector<1x1x2x128xf32>
    %c0_79 = arith.constant 0 : index
    %c0_80 = arith.constant 0 : index
    %c0_81 = arith.constant 0 : index
    %c0_82 = arith.constant 0 : index
    %104 = vector.load %arg8[%c0_79, %c0_80, %c0_81, %c0_82] : memref<1x1x2x128xf32, #tpu.memory_space<vmem>>, vector<1x1x2x128xf32>
    tpu.vector_store %arg8[%c0_79, %c0_80, %c0_81, %c0_82], %103 {strides = array<i32>} : memref<1x1x2x128xf32, #tpu.memory_space<vmem>>, vector<1x1x2x128xf32>,
    return
  }
  func.func @transform_0(%arg0: i32, %arg1: i32) -> (i32, i32, i32, i32) {
    %c0_i32 = arith.constant 0 : i32
    %c0_i32_0 = arith.constant 0 : i32
    %c0_i32_1 = arith.constant 0 : i32
    %c0_i32_2 = arith.constant 0 : i32
    return %arg0, %c0_i32, %c0_i32_0, %c0_i32_1 : i32, i32, i32, i32
  }
  func.func @transform_1(%arg0: i32, %arg1: i32) -> (i32, i32, i32) {
    %c0_i32 = arith.constant 0 : i32
    %c0_i32_0 = arith.constant 0 : i32
    %c0_i32_1 = arith.constant 0 : i32
    %c0_i32_2 = arith.constant 0 : i32
    return %c0_i32, %c0_i32_0, %c0_i32_1 : i32, i32, i32
  }
  func.func @transform_2(%arg0: i32, %arg1: i32) -> (i32, i32) {
    %c0_i32 = arith.constant 0 : i32
    %c0_i32_0 = arith.constant 0 : i32
    %c0_i32_1 = arith.constant 0 : i32
    return %c0_i32, %c0_i32_0 : i32, i32
  }
  func.func @transform_3(%arg0: i32, %arg1: i32) -> (i32, i32, i32, i32) {
    %c0_i32 = arith.constant 0 : i32
    %c0_i32_0 = arith.constant 0 : i32
    %c0_i32_1 = arith.constant 0 : i32
    return %arg0, %arg1, %c0_i32, %c0_i32_0 : i32, i32, i32, i32
  }
  func.func @transform_4(%arg0: i32, %arg1: i32) -> (i32, i32, i32, i32) {
    %c0_i32 = arith.constant 0 : i32
    %c0_i32_0 = arith.constant 0 : i32
    %c0_i32_1 = arith.constant 0 : i32
    return %arg0, %arg1, %c0_i32, %c0_i32_0 : i32, i32, i32, i32
  }
  func.func @transform_5(%arg0: i32, %arg1: i32) -> (i32, i32, i32, i32) {
    %c0_i32 = arith.constant 0 : i32
    %c0_i32_0 = arith.constant 0 : i32
    %c0_i32_1 = arith.constant 0 : i32
    return %arg0, %arg1, %c0_i32, %c0_i32_0 : i32, i32, i32, i32
  }
  func.func @transform_6(%arg0: i32, %arg1: i32) -> (i32, i32, i32, i32) {
    %c0_i32 = arith.constant 0 : i32
    %c0_i32_0 = arith.constant 0 : i32
    %c0_i32_1 = arith.constant 0 : i32
    return %arg0, %arg1, %c0_i32, %c0_i32_0 : i32, i32, i32, i32
  }
}

module attributes {stable_mosaic.version = 11 : i64} {
  func.func @kernel(%arg0: i32, %arg1: i32, %arg2: memref<1x8x8x128xbf16, #tpu.memory_space<vmem>>, %arg3: memref<9x128x128xbf16, #tpu.memory_space<vmem>>, %arg4: memref<2x128xf32, #tpu.memory_space<vmem>>, %arg5: memref<1x8x8x128xbf16, #tpu.memory_space<vmem>>, %arg6: memref<1x1x2x128xf32, #tpu.memory_space<vmem>>, %arg7: memref<10x10x128xbf16, #tpu.memory_space<vmem>>) attributes {dimension_semantics = [#tpu.dimension_semantics<parallel>, #tpu.dimension_semantics<arbitrary>], iteration_bounds = array<i64: 2, 1>, scalar_prefetch = 0 : i64, scratch_operands = 1 : i64, tpu.core_type = #tpu.core_type<tc>, window_params = [{transform_indices = @transform_0, window_bounds = array<i64: 1, 8, 8, 128>}, {pipeline_mode = #tpu.pipeline_mode<synchronous>, transform_indices = @transform_1, window_bounds = array<i64: 9, 128, 128>}, {pipeline_mode = #tpu.pipeline_mode<synchronous>, transform_indices = @transform_2, window_bounds = array<i64: 2, 128>}, {transform_indices = @transform_3, window_bounds = array<i64: 1, 8, 8, 128>}, {transform_indices = @transform_4, window_bounds = array<i64: 1, 1, 2, 128>}]} {
    %c8_i32 = arith.constant 8 : i32
    %0 = arith.muli %arg1, %c8_i32 : i32
    %c0_i32 = arith.constant 0 : i32
    %1 = arith.cmpi eq, %arg1, %c0_i32 : i32
    %2 = arith.extui %1 : i1 to i32
    %c0_i32_0 = arith.constant 0 : i32
    %3 = arith.cmpi ne, %2, %c0_i32_0 : i32
    scf.if %3 {
      %cst_62 = arith.constant 0.000000e+00 : bf16
      %86 = vector.broadcast %cst_62 : bf16 to vector<1x10x128xbf16>
      %cst_63 = arith.constant 0.000000e+00 : bf16
      %87 = vector.broadcast %cst_63 : bf16 to vector<10x1x128xbf16>
      %c0_64 = arith.constant 0 : index
      %c0_65 = arith.constant 0 : index
      %c0_66 = arith.constant 0 : index
      %88 = vector.load %arg7[%c0_64, %c0_65, %c0_66] : memref<10x10x128xbf16, #tpu.memory_space<vmem>>, vector<1x10x128xbf16>
      tpu.vector_store %arg7[%c0_64, %c0_65, %c0_66], %86 {strides = array<i32>} : memref<10x10x128xbf16, #tpu.memory_space<vmem>>, vector<1x10x128xbf16>,
      %c9 = arith.constant 9 : index
      %c0_67 = arith.constant 0 : index
      %c0_68 = arith.constant 0 : index
      %89 = vector.load %arg7[%c9, %c0_67, %c0_68] : memref<10x10x128xbf16, #tpu.memory_space<vmem>>, vector<1x10x128xbf16>
      tpu.vector_store %arg7[%c9, %c0_67, %c0_68], %86 {strides = array<i32>} : memref<10x10x128xbf16, #tpu.memory_space<vmem>>, vector<1x10x128xbf16>,
      %c0_69 = arith.constant 0 : index
      %c0_70 = arith.constant 0 : index
      %c0_71 = arith.constant 0 : index
      %90 = vector.load %arg7[%c0_69, %c0_70, %c0_71] : memref<10x10x128xbf16, #tpu.memory_space<vmem>>, vector<10x1x128xbf16>
      tpu.vector_store %arg7[%c0_69, %c0_70, %c0_71], %87 {strides = array<i32>} : memref<10x10x128xbf16, #tpu.memory_space<vmem>>, vector<10x1x128xbf16>,
      %c0_72 = arith.constant 0 : index
      %c9_73 = arith.constant 9 : index
      %c0_74 = arith.constant 0 : index
      %91 = vector.load %arg7[%c0_72, %c9_73, %c0_74] : memref<10x10x128xbf16, #tpu.memory_space<vmem>>, vector<10x1x128xbf16>
      tpu.vector_store %arg7[%c0_72, %c9_73, %c0_74], %87 {strides = array<i32>} : memref<10x10x128xbf16, #tpu.memory_space<vmem>>, vector<10x1x128xbf16>,
      %c0_75 = arith.constant 0 : index
      %c0_76 = arith.constant 0 : index
      %92 = vector.load %arg4[%c0_75, %c0_76] : memref<2x128xf32, #tpu.memory_space<vmem>>, vector<2x128xf32>
      %93 = vector.extract_strided_slice %92 {offsets = [0, 0], sizes = [1, 128], strides = [1, 1]} : vector<2x128xf32> to vector<1x128xf32>
      %94 = vector.shape_cast %93 : vector<1x128xf32> to vector<1x1x128xf32>
      %95 = vector.extract_strided_slice %92 {offsets = [1, 0], sizes = [1, 128], strides = [1, 1]} : vector<2x128xf32> to vector<1x128xf32>
      %96 = vector.shape_cast %95 : vector<1x128xf32> to vector<1x1x128xf32>
      %c0_77 = arith.constant 0 : index
      %c0_78 = arith.constant 0 : index
      %c0_79 = arith.constant 0 : index
      %c0_80 = arith.constant 0 : index
      %97 = vector.load %arg2[%c0_77, %c0_78, %c0_79, %c0_80] : memref<1x8x8x128xbf16, #tpu.memory_space<vmem>>, vector<1x8x8x128xbf16>
      %98 = vector.shape_cast %97 : vector<1x8x8x128xbf16> to vector<8x8x128xbf16>
      %99 = arith.extf %98 : vector<8x8x128xbf16> to vector<8x8x128xf32>
      %100 = vector.broadcast %94 : vector<1x1x128xf32> to vector<8x8x128xf32>
      %101 = arith.mulf %99, %100 : vector<8x8x128xf32>
      %102 = vector.broadcast %96 : vector<1x1x128xf32> to vector<8x8x128xf32>
      %103 = arith.addf %101, %102 : vector<8x8x128xf32>
      %cst_81 = arith.constant 0.000000e+00 : f32
      %104 = vector.broadcast %cst_81 : f32 to vector<8x8x128xf32>
      %105 = arith.maximumf %103, %104 : vector<8x8x128xf32>
      %106 = arith.truncf %105 : vector<8x8x128xf32> to vector<8x8x128xbf16>
      %c1_82 = arith.constant 1 : index
      %c1_83 = arith.constant 1 : index
      %c0_84 = arith.constant 0 : index
      %107 = vector.load %arg7[%c1_82, %c1_83, %c0_84] : memref<10x10x128xbf16, #tpu.memory_space<vmem>>, vector<8x8x128xbf16>
      tpu.vector_store %arg7[%c1_82, %c1_83, %c0_84], %106 {strides = array<i32>} : memref<10x10x128xbf16, #tpu.memory_space<vmem>>, vector<8x8x128xbf16>,
    } else {
    }
    %c0_i32_1 = arith.constant 0 : i32
    %4 = arith.addi %0, %c0_i32_1 : i32
    %5 = arith.index_cast %4 : i32 to index
    %c0 = arith.constant 0 : index
    %c0_2 = arith.constant 0 : index
    %6 = vector.load %arg7[%5, %c0, %c0_2] : memref<10x10x128xbf16, #tpu.memory_space<vmem>>, vector<8x8x128xbf16>
    %7 = vector.shape_cast %6 : vector<8x8x128xbf16> to vector<64x128xbf16>
    %c0_3 = arith.constant 0 : index
    %c0_4 = arith.constant 0 : index
    %c0_5 = arith.constant 0 : index
    %8 = vector.load %arg3[%c0_3, %c0_4, %c0_5] : memref<9x128x128xbf16, #tpu.memory_space<vmem>>, vector<1x128x128xbf16>
    %9 = vector.shape_cast %8 : vector<1x128x128xbf16> to vector<128x128xbf16>
    %cst = arith.constant dense<0.000000e+00> : vector<64x128xf32>
    %10 = tpu.matmul %7, %9, %cst {dimension_numbers = #tpu.dot_dimension_numbers<[1], [0], [0], [1], [0, 0, 1, 1], [], []>} : vector<64x128xbf16>, vector<128x128xbf16>, vector<64x128xf32> -> vector<64x128xf32>
    %c0_i32_6 = arith.constant 0 : i32
    %11 = arith.addi %0, %c0_i32_6 : i32
    %12 = arith.index_cast %11 : i32 to index
    %c1 = arith.constant 1 : index
    %c0_7 = arith.constant 0 : index
    %13 = vector.load %arg7[%12, %c1, %c0_7] : memref<10x10x128xbf16, #tpu.memory_space<vmem>>, vector<8x8x128xbf16>
    %14 = vector.shape_cast %13 : vector<8x8x128xbf16> to vector<64x128xbf16>
    %c1_8 = arith.constant 1 : index
    %c0_9 = arith.constant 0 : index
    %c0_10 = arith.constant 0 : index
    %15 = vector.load %arg3[%c1_8, %c0_9, %c0_10] : memref<9x128x128xbf16, #tpu.memory_space<vmem>>, vector<1x128x128xbf16>
    %16 = vector.shape_cast %15 : vector<1x128x128xbf16> to vector<128x128xbf16>
    %cst_11 = arith.constant dense<0.000000e+00> : vector<64x128xf32>
    %17 = tpu.matmul %14, %16, %cst_11 {dimension_numbers = #tpu.dot_dimension_numbers<[1], [0], [0], [1], [0, 0, 1, 1], [], []>} : vector<64x128xbf16>, vector<128x128xbf16>, vector<64x128xf32> -> vector<64x128xf32>
    %18 = arith.addf %10, %17 : vector<64x128xf32>
    %c0_i32_12 = arith.constant 0 : i32
    %19 = arith.addi %0, %c0_i32_12 : i32
    %20 = arith.index_cast %19 : i32 to index
    %c2 = arith.constant 2 : index
    %c0_13 = arith.constant 0 : index
    %21 = vector.load %arg7[%20, %c2, %c0_13] : memref<10x10x128xbf16, #tpu.memory_space<vmem>>, vector<8x8x128xbf16>
    %22 = vector.shape_cast %21 : vector<8x8x128xbf16> to vector<64x128xbf16>
    %c2_14 = arith.constant 2 : index
    %c0_15 = arith.constant 0 : index
    %c0_16 = arith.constant 0 : index
    %23 = vector.load %arg3[%c2_14, %c0_15, %c0_16] : memref<9x128x128xbf16, #tpu.memory_space<vmem>>, vector<1x128x128xbf16>
    %24 = vector.shape_cast %23 : vector<1x128x128xbf16> to vector<128x128xbf16>
    %cst_17 = arith.constant dense<0.000000e+00> : vector<64x128xf32>
    %25 = tpu.matmul %22, %24, %cst_17 {dimension_numbers = #tpu.dot_dimension_numbers<[1], [0], [0], [1], [0, 0, 1, 1], [], []>} : vector<64x128xbf16>, vector<128x128xbf16>, vector<64x128xf32> -> vector<64x128xf32>
    %26 = arith.addf %18, %25 : vector<64x128xf32>
    %c1_i32 = arith.constant 1 : i32
    %27 = arith.addi %0, %c1_i32 : i32
    %28 = arith.index_cast %27 : i32 to index
    %c0_18 = arith.constant 0 : index
    %c0_19 = arith.constant 0 : index
    %29 = vector.load %arg7[%28, %c0_18, %c0_19] : memref<10x10x128xbf16, #tpu.memory_space<vmem>>, vector<8x8x128xbf16>
    %30 = vector.shape_cast %29 : vector<8x8x128xbf16> to vector<64x128xbf16>
    %c3 = arith.constant 3 : index
    %c0_20 = arith.constant 0 : index
    %c0_21 = arith.constant 0 : index
    %31 = vector.load %arg3[%c3, %c0_20, %c0_21] : memref<9x128x128xbf16, #tpu.memory_space<vmem>>, vector<1x128x128xbf16>
    %32 = vector.shape_cast %31 : vector<1x128x128xbf16> to vector<128x128xbf16>
    %cst_22 = arith.constant dense<0.000000e+00> : vector<64x128xf32>
    %33 = tpu.matmul %30, %32, %cst_22 {dimension_numbers = #tpu.dot_dimension_numbers<[1], [0], [0], [1], [0, 0, 1, 1], [], []>} : vector<64x128xbf16>, vector<128x128xbf16>, vector<64x128xf32> -> vector<64x128xf32>
    %34 = arith.addf %26, %33 : vector<64x128xf32>
    %c1_i32_23 = arith.constant 1 : i32
    %35 = arith.addi %0, %c1_i32_23 : i32
    %36 = arith.index_cast %35 : i32 to index
    %c1_24 = arith.constant 1 : index
    %c0_25 = arith.constant 0 : index
    %37 = vector.load %arg7[%36, %c1_24, %c0_25] : memref<10x10x128xbf16, #tpu.memory_space<vmem>>, vector<8x8x128xbf16>
    %38 = vector.shape_cast %37 : vector<8x8x128xbf16> to vector<64x128xbf16>
    %c4 = arith.constant 4 : index
    %c0_26 = arith.constant 0 : index
    %c0_27 = arith.constant 0 : index
    %39 = vector.load %arg3[%c4, %c0_26, %c0_27] : memref<9x128x128xbf16, #tpu.memory_space<vmem>>, vector<1x128x128xbf16>
    %40 = vector.shape_cast %39 : vector<1x128x128xbf16> to vector<128x128xbf16>
    %cst_28 = arith.constant dense<0.000000e+00> : vector<64x128xf32>
    %41 = tpu.matmul %38, %40, %cst_28 {dimension_numbers = #tpu.dot_dimension_numbers<[1], [0], [0], [1], [0, 0, 1, 1], [], []>} : vector<64x128xbf16>, vector<128x128xbf16>, vector<64x128xf32> -> vector<64x128xf32>
    %42 = arith.addf %34, %41 : vector<64x128xf32>
    %c1_i32_29 = arith.constant 1 : i32
    %43 = arith.addi %0, %c1_i32_29 : i32
    %44 = arith.index_cast %43 : i32 to index
    %c2_30 = arith.constant 2 : index
    %c0_31 = arith.constant 0 : index
    %45 = vector.load %arg7[%44, %c2_30, %c0_31] : memref<10x10x128xbf16, #tpu.memory_space<vmem>>, vector<8x8x128xbf16>
    %46 = vector.shape_cast %45 : vector<8x8x128xbf16> to vector<64x128xbf16>
    %c5 = arith.constant 5 : index
    %c0_32 = arith.constant 0 : index
    %c0_33 = arith.constant 0 : index
    %47 = vector.load %arg3[%c5, %c0_32, %c0_33] : memref<9x128x128xbf16, #tpu.memory_space<vmem>>, vector<1x128x128xbf16>
    %48 = vector.shape_cast %47 : vector<1x128x128xbf16> to vector<128x128xbf16>
    %cst_34 = arith.constant dense<0.000000e+00> : vector<64x128xf32>
    %49 = tpu.matmul %46, %48, %cst_34 {dimension_numbers = #tpu.dot_dimension_numbers<[1], [0], [0], [1], [0, 0, 1, 1], [], []>} : vector<64x128xbf16>, vector<128x128xbf16>, vector<64x128xf32> -> vector<64x128xf32>
    %50 = arith.addf %42, %49 : vector<64x128xf32>
    %c2_i32 = arith.constant 2 : i32
    %51 = arith.addi %0, %c2_i32 : i32
    %52 = arith.index_cast %51 : i32 to index
    %c0_35 = arith.constant 0 : index
    %c0_36 = arith.constant 0 : index
    %53 = vector.load %arg7[%52, %c0_35, %c0_36] : memref<10x10x128xbf16, #tpu.memory_space<vmem>>, vector<8x8x128xbf16>
    %54 = vector.shape_cast %53 : vector<8x8x128xbf16> to vector<64x128xbf16>
    %c6 = arith.constant 6 : index
    %c0_37 = arith.constant 0 : index
    %c0_38 = arith.constant 0 : index
    %55 = vector.load %arg3[%c6, %c0_37, %c0_38] : memref<9x128x128xbf16, #tpu.memory_space<vmem>>, vector<1x128x128xbf16>
    %56 = vector.shape_cast %55 : vector<1x128x128xbf16> to vector<128x128xbf16>
    %cst_39 = arith.constant dense<0.000000e+00> : vector<64x128xf32>
    %57 = tpu.matmul %54, %56, %cst_39 {dimension_numbers = #tpu.dot_dimension_numbers<[1], [0], [0], [1], [0, 0, 1, 1], [], []>} : vector<64x128xbf16>, vector<128x128xbf16>, vector<64x128xf32> -> vector<64x128xf32>
    %58 = arith.addf %50, %57 : vector<64x128xf32>
    %c2_i32_40 = arith.constant 2 : i32
    %59 = arith.addi %0, %c2_i32_40 : i32
    %60 = arith.index_cast %59 : i32 to index
    %c1_41 = arith.constant 1 : index
    %c0_42 = arith.constant 0 : index
    %61 = vector.load %arg7[%60, %c1_41, %c0_42] : memref<10x10x128xbf16, #tpu.memory_space<vmem>>, vector<8x8x128xbf16>
    %62 = vector.shape_cast %61 : vector<8x8x128xbf16> to vector<64x128xbf16>
    %c7 = arith.constant 7 : index
    %c0_43 = arith.constant 0 : index
    %c0_44 = arith.constant 0 : index
    %63 = vector.load %arg3[%c7, %c0_43, %c0_44] : memref<9x128x128xbf16, #tpu.memory_space<vmem>>, vector<1x128x128xbf16>
    %64 = vector.shape_cast %63 : vector<1x128x128xbf16> to vector<128x128xbf16>
    %cst_45 = arith.constant dense<0.000000e+00> : vector<64x128xf32>
    %65 = tpu.matmul %62, %64, %cst_45 {dimension_numbers = #tpu.dot_dimension_numbers<[1], [0], [0], [1], [0, 0, 1, 1], [], []>} : vector<64x128xbf16>, vector<128x128xbf16>, vector<64x128xf32> -> vector<64x128xf32>
    %66 = arith.addf %58, %65 : vector<64x128xf32>
    %c2_i32_46 = arith.constant 2 : i32
    %67 = arith.addi %0, %c2_i32_46 : i32
    %68 = arith.index_cast %67 : i32 to index
    %c2_47 = arith.constant 2 : index
    %c0_48 = arith.constant 0 : index
    %69 = vector.load %arg7[%68, %c2_47, %c0_48] : memref<10x10x128xbf16, #tpu.memory_space<vmem>>, vector<8x8x128xbf16>
    %70 = vector.shape_cast %69 : vector<8x8x128xbf16> to vector<64x128xbf16>
    %c8 = arith.constant 8 : index
    %c0_49 = arith.constant 0 : index
    %c0_50 = arith.constant 0 : index
    %71 = vector.load %arg3[%c8, %c0_49, %c0_50] : memref<9x128x128xbf16, #tpu.memory_space<vmem>>, vector<1x128x128xbf16>
    %72 = vector.shape_cast %71 : vector<1x128x128xbf16> to vector<128x128xbf16>
    %cst_51 = arith.constant dense<0.000000e+00> : vector<64x128xf32>
    %73 = tpu.matmul %70, %72, %cst_51 {dimension_numbers = #tpu.dot_dimension_numbers<[1], [0], [0], [1], [0, 0, 1, 1], [], []>} : vector<64x128xbf16>, vector<128x128xbf16>, vector<64x128xf32> -> vector<64x128xf32>
    %74 = arith.addf %66, %73 : vector<64x128xf32>
    %75 = vector.shape_cast %74 : vector<64x128xf32> to vector<1x8x8x128xf32>
    %76 = arith.truncf %75 : vector<1x8x8x128xf32> to vector<1x8x8x128xbf16>
    %c0_52 = arith.constant 0 : index
    %c0_53 = arith.constant 0 : index
    %c0_54 = arith.constant 0 : index
    %c0_55 = arith.constant 0 : index
    %77 = vector.load %arg5[%c0_52, %c0_53, %c0_54, %c0_55] : memref<1x8x8x128xbf16, #tpu.memory_space<vmem>>, vector<1x8x8x128xbf16>
    tpu.vector_store %arg5[%c0_52, %c0_53, %c0_54, %c0_55], %76 {strides = array<i32>} : memref<1x8x8x128xbf16, #tpu.memory_space<vmem>>, vector<1x8x8x128xbf16>,
    %cst_56 = arith.constant dense<0.000000e+00> : vector<128xf32>
    %78 = vector.multi_reduction <add>, %74, %cst_56 [0] : vector<64x128xf32> to vector<128xf32>
    %79 = vector.shape_cast %78 : vector<128xf32> to vector<1x128xf32>
    %80 = arith.mulf %74, %74 : vector<64x128xf32>
    %cst_57 = arith.constant dense<0.000000e+00> : vector<128xf32>
    %81 = vector.multi_reduction <add>, %80, %cst_57 [0] : vector<64x128xf32> to vector<128xf32>
    %82 = vector.shape_cast %81 : vector<128xf32> to vector<1x128xf32>
    %83 = tpu.concatenate %79, %82 in 0 : vector<1x128xf32>, vector<1x128xf32> -> vector<2x128xf32>
    %84 = vector.shape_cast %83 : vector<2x128xf32> to vector<1x1x2x128xf32>
    %c0_58 = arith.constant 0 : index
    %c0_59 = arith.constant 0 : index
    %c0_60 = arith.constant 0 : index
    %c0_61 = arith.constant 0 : index
    %85 = vector.load %arg6[%c0_58, %c0_59, %c0_60, %c0_61] : memref<1x1x2x128xf32, #tpu.memory_space<vmem>>, vector<1x1x2x128xf32>
    tpu.vector_store %arg6[%c0_58, %c0_59, %c0_60, %c0_61], %84 {strides = array<i32>} : memref<1x1x2x128xf32, #tpu.memory_space<vmem>>, vector<1x1x2x128xf32>,
    return
  }
  func.func @transform_0(%arg0: i32, %arg1: i32) -> (i32, i32, i32, i32) {
    %c0_i32 = arith.constant 0 : i32
    %c0_i32_0 = arith.constant 0 : i32
    %c0_i32_1 = arith.constant 0 : i32
    %c0_i32_2 = arith.constant 0 : i32
    return %arg0, %c0_i32, %c0_i32_0, %c0_i32_1 : i32, i32, i32, i32
  }
  func.func @transform_1(%arg0: i32, %arg1: i32) -> (i32, i32, i32) {
    %c0_i32 = arith.constant 0 : i32
    %c0_i32_0 = arith.constant 0 : i32
    %c0_i32_1 = arith.constant 0 : i32
    %c0_i32_2 = arith.constant 0 : i32
    return %c0_i32, %c0_i32_0, %c0_i32_1 : i32, i32, i32
  }
  func.func @transform_2(%arg0: i32, %arg1: i32) -> (i32, i32) {
    %c0_i32 = arith.constant 0 : i32
    %c0_i32_0 = arith.constant 0 : i32
    %c0_i32_1 = arith.constant 0 : i32
    return %c0_i32, %c0_i32_0 : i32, i32
  }
  func.func @transform_3(%arg0: i32, %arg1: i32) -> (i32, i32, i32, i32) {
    %c0_i32 = arith.constant 0 : i32
    %c0_i32_0 = arith.constant 0 : i32
    %c0_i32_1 = arith.constant 0 : i32
    return %arg0, %arg1, %c0_i32, %c0_i32_0 : i32, i32, i32, i32
  }
  func.func @transform_4(%arg0: i32, %arg1: i32) -> (i32, i32, i32, i32) {
    %c0_i32 = arith.constant 0 : i32
    %c0_i32_0 = arith.constant 0 : i32
    %c0_i32_1 = arith.constant 0 : i32
    return %arg0, %arg1, %c0_i32, %c0_i32_0 : i32, i32, i32, i32
  }
}

module attributes {stable_mosaic.version = 11 : i64} {
  func.func @_add_bn_relu_kernel(%arg0: i32, %arg1: memref<128x128xbf16, #tpu.memory_space<vmem>>, %arg2: memref<128x128xbf16, #tpu.memory_space<vmem>>, %arg3: memref<2x128xf32, #tpu.memory_space<vmem>>, %arg4: memref<2x128xf32, #tpu.memory_space<vmem>>, %arg5: memref<128x128xbf16, #tpu.memory_space<vmem>>) attributes {dimension_semantics = [#tpu.dimension_semantics<parallel>], iteration_bounds = array<i64: 1>, scalar_prefetch = 0 : i64, scratch_operands = 0 : i64, tpu.core_type = #tpu.core_type<tc>, window_params = [{transform_indices = @transform_0, window_bounds = array<i64: 128, 128>}, {transform_indices = @transform_1, window_bounds = array<i64: 128, 128>}, {pipeline_mode = #tpu.pipeline_mode<synchronous>, transform_indices = @transform_2, window_bounds = array<i64: 2, 128>}, {pipeline_mode = #tpu.pipeline_mode<synchronous>, transform_indices = @transform_3, window_bounds = array<i64: 2, 128>}, {transform_indices = @transform_4, window_bounds = array<i64: 128, 128>}]} {
    %c0 = arith.constant 0 : index
    %c0_0 = arith.constant 0 : index
    %0 = vector.load %arg3[%c0, %c0_0] : memref<2x128xf32, #tpu.memory_space<vmem>>, vector<2x128xf32>
    %c0_1 = arith.constant 0 : index
    %c0_2 = arith.constant 0 : index
    %1 = vector.load %arg4[%c0_1, %c0_2] : memref<2x128xf32, #tpu.memory_space<vmem>>, vector<2x128xf32>
    %c0_3 = arith.constant 0 : index
    %c0_4 = arith.constant 0 : index
    %2 = vector.load %arg1[%c0_3, %c0_4] : memref<128x128xbf16, #tpu.memory_space<vmem>>, vector<128x128xbf16>
    %3 = arith.extf %2 : vector<128x128xbf16> to vector<128x128xf32>
    %c0_5 = arith.constant 0 : index
    %c0_6 = arith.constant 0 : index
    %4 = vector.load %arg2[%c0_5, %c0_6] : memref<128x128xbf16, #tpu.memory_space<vmem>>, vector<128x128xbf16>
    %5 = arith.extf %4 : vector<128x128xbf16> to vector<128x128xf32>
    %6 = vector.extract_strided_slice %0 {offsets = [0, 0], sizes = [1, 128], strides = [1, 1]} : vector<2x128xf32> to vector<1x128xf32>
    %7 = vector.broadcast %6 : vector<1x128xf32> to vector<128x128xf32>
    %8 = arith.mulf %3, %7 : vector<128x128xf32>
    %9 = vector.extract_strided_slice %0 {offsets = [1, 0], sizes = [1, 128], strides = [1, 1]} : vector<2x128xf32> to vector<1x128xf32>
    %10 = vector.broadcast %9 : vector<1x128xf32> to vector<128x128xf32>
    %11 = arith.addf %8, %10 : vector<128x128xf32>
    %12 = vector.extract_strided_slice %1 {offsets = [0, 0], sizes = [1, 128], strides = [1, 1]} : vector<2x128xf32> to vector<1x128xf32>
    %13 = vector.broadcast %12 : vector<1x128xf32> to vector<128x128xf32>
    %14 = arith.mulf %5, %13 : vector<128x128xf32>
    %15 = vector.extract_strided_slice %1 {offsets = [1, 0], sizes = [1, 128], strides = [1, 1]} : vector<2x128xf32> to vector<1x128xf32>
    %16 = vector.broadcast %15 : vector<1x128xf32> to vector<128x128xf32>
    %17 = arith.addf %14, %16 : vector<128x128xf32>
    %18 = arith.addf %11, %17 : vector<128x128xf32>
    %cst = arith.constant 0.000000e+00 : f32
    %19 = vector.broadcast %cst : f32 to vector<128x128xf32>
    %20 = arith.maximumf %18, %19 : vector<128x128xf32>
    %21 = arith.truncf %20 : vector<128x128xf32> to vector<128x128xbf16>
    %c0_7 = arith.constant 0 : index
    %c0_8 = arith.constant 0 : index
    %22 = vector.load %arg5[%c0_7, %c0_8] : memref<128x128xbf16, #tpu.memory_space<vmem>>, vector<128x128xbf16>
    tpu.vector_store %arg5[%c0_7, %c0_8], %21 {strides = array<i32>} : memref<128x128xbf16, #tpu.memory_space<vmem>>, vector<128x128xbf16>,
    return
  }
  func.func @transform_0(%arg0: i32) -> (i32, i32) {
    %c0_i32 = arith.constant 0 : i32
    %c0_i32_0 = arith.constant 0 : i32
    return %arg0, %c0_i32 : i32, i32
  }
  func.func @transform_1(%arg0: i32) -> (i32, i32) {
    %c0_i32 = arith.constant 0 : i32
    %c0_i32_0 = arith.constant 0 : i32
    return %arg0, %c0_i32 : i32, i32
  }
  func.func @transform_2(%arg0: i32) -> (i32, i32) {
    %c0_i32 = arith.constant 0 : i32
    %c0_i32_0 = arith.constant 0 : i32
    %c0_i32_1 = arith.constant 0 : i32
    return %c0_i32, %c0_i32_0 : i32, i32
  }
  func.func @transform_3(%arg0: i32) -> (i32, i32) {
    %c0_i32 = arith.constant 0 : i32
    %c0_i32_0 = arith.constant 0 : i32
    %c0_i32_1 = arith.constant 0 : i32
    return %c0_i32, %c0_i32_0 : i32, i32
  }
  func.func @transform_4(%arg0: i32) -> (i32, i32) {
    %c0_i32 = arith.constant 0 : i32
    %c0_i32_0 = arith.constant 0 : i32
    return %arg0, %c0_i32 : i32, i32
  }
}

</mosaic_0001>

<llo_original>
// kernel: basic_block_forward.5
$region0: #{basic_block_forward.5}
  #allocation0 [shape = 'u32[]', space=smem, size = 0x4, offset = 0x4, fixed_abs, tag = 'smem constant byte address 0x4 - core index']
  #allocation1 [shape = 'u32[72,128]{1,0:T(1,128)}', space=vmem, size = 0x9000, scoped, tag = 'internal scratch']
  %s0 = inlined_call_operand.vmem [shape: bf16[128,128], index: 0, kind: input, shape index: {}]
  %s1 = inlined_call_operand.vmem [shape: bf16[128,128], index: 1, kind: input, shape index: {}]
  %s2 = inlined_call_operand.vmem [shape: f32[2,128], index: 2, kind: input, shape index: {}]
  %s3 = inlined_call_operand.vmem [shape: f32[2,128], index: 3, kind: input, shape index: {}]
  %s4 = inlined_call_operand.vmem [shape: bf16[128,128], index: 4, kind: output, shape index: {}]
  %s5 = sld [smem:[#allocation0]]
  $region26: #{basic_block_forward.5} parent=0
    _
  %s7 = ssub.s32 1, %s5
  %s8 = scalar_select 0, %s7, %s5
  // Predicated region
  $region2: #{basic_block_forward.5} parent=0 // pred_check
    _
  $region3: #{basic_block_forward.5} parent=0 // pred_check_branch
    %10 = sbr.rel (0) target = $region5
  $region4: #{basic_block_forward.5} parent=0 // pred_region
    _
  $region5: #{basic_block_forward.5} parent=0 // pred_fallthru
    _
  // Predicated region
  $region6: #{basic_block_forward.5} parent=0 // pred_check
    _
  $region7: #{basic_block_forward.5} parent=0 // pred_check_branch
    %12 = sbr.rel (0) target = $region9
  $region8: #{basic_block_forward.5} parent=0 // pred_region
    _
  $region9: #{basic_block_forward.5} parent=0 // pred_fallthru
    _
  // Predicated region
  $region10: #{basic_block_forward.5} parent=0 // pred_check
    _
  $region11: #{basic_block_forward.5} parent=0 // pred_check_branch
    %14 = sbr.rel (0) target = $region13
  $region12: #{basic_block_forward.5} parent=0 // pred_region
    _
  $region13: #{basic_block_forward.5} parent=0 // pred_fallthru
    _
  // Predicated region
  $region14: #{basic_block_forward.5} parent=0 // pred_check
    _
  $region15: #{basic_block_forward.5} parent=0 // pred_check_branch
    %16 = sbr.rel (0) target = $region17
  $region16: #{basic_block_forward.5} parent=0 // pred_region
    _
  $region17: #{basic_block_forward.5} parent=0 // pred_fallthru
    _
  %v17 = vld [vmem:[%s2] sm:$0x3]
  %v18 = vld [vmem:[%s3] sm:$0x3]
  %v19 = vld [vmem:[%s0] sm:$0xf]
  %v20 = vld [vmem:[%s0 + $0x4] sm:$0xf]
  %v21 = vld [vmem:[%s0 + $0x8] sm:$0xf]
  %v22 = vld [vmem:[%s0 + $0xc] sm:$0xf]
  %v23 = vld [vmem:[%s0 + $0x10] sm:$0xf]
  %v24 = vld [vmem:[%s0 + $0x14] sm:$0xf]
  %v25 = vld [vmem:[%s0 + $0x18] sm:$0xf]
  %v26 = vld [vmem:[%s0 + $0x1c] sm:$0xf]
  %v27 = vld [vmem:[%s0 + $0x20] sm:$0xf]
  %v28 = vld [vmem:[%s0 + $0x24] sm:$0xf]
  %v29 = vld [vmem:[%s0 + $0x28] sm:$0xf]
  %v30 = vld [vmem:[%s0 + $0x2c] sm:$0xf]
  %v31 = vld [vmem:[%s0 + $0x30] sm:$0xf]
  %v32 = vld [vmem:[%s0 + $0x34] sm:$0xf]
  %v33 = vld [vmem:[%s0 + $0x38] sm:$0xf]
  %v34 = vld [vmem:[%s0 + $0x3c] sm:$0xf]
  %v35 = vunpack.c.l.bf16 %v19
  %v36 = vunpack.c.l.bf16 %v20
  %v37 = vunpack.c.l.bf16 %v21
  %v38 = vunpack.c.l.bf16 %v22
  %v39 = vunpack.c.l.bf16 %v23
  %v40 = vunpack.c.l.bf16 %v24
  %v41 = vunpack.c.l.bf16 %v25
  %v42 = vunpack.c.l.bf16 %v26
  %v43 = vunpack.c.l.bf16 %v27
  %v44 = vunpack.c.l.bf16 %v28
  %v45 = vunpack.c.l.bf16 %v29
  %v46 = vunpack.c.l.bf16 %v30
  %v47 = vunpack.c.l.bf16 %v31
  %v48 = vunpack.c.l.bf16 %v32
  %v49 = vunpack.c.l.bf16 %v33
  %v50 = vunpack.c.l.bf16 %v34
  %v51 = vld [vmem:[%s1] sm:$0xf]
  %v52 = vld [vmem:[%s1 + $0x4] sm:$0xf]
  %v53 = vld [vmem:[%s1 + $0x8] sm:$0xf]
  %v54 = vld [vmem:[%s1 + $0xc] sm:$0xf]
  %v55 = vld [vmem:[%s1 + $0x10] sm:$0xf]
  %v56 = vld [vmem:[%s1 + $0x14] sm:$0xf]
  %v57 = vld [vmem:[%s1 + $0x18] sm:$0xf]
  %v58 = vld [vmem:[%s1 + $0x1c] sm:$0xf]
  %v59 = vld [vmem:[%s1 + $0x20] sm:$0xf]
  %v60 = vld [vmem:[%s1 + $0x24] sm:$0xf]
  %v61 = vld [vmem:[%s1 + $0x28] sm:$0xf]
  %v62 = vld [vmem:[%s1 + $0x2c] sm:$0xf]
  %v63 = vld [vmem:[%s1 + $0x30] sm:$0xf]
  %v64 = vld [vmem:[%s1 + $0x34] sm:$0xf]
  %v65 = vld [vmem:[%s1 + $0x38] sm:$0xf]
  %v66 = vld [vmem:[%s1 + $0x3c] sm:$0xf]
  %v67 = vunpack.c.l.bf16 %v51
  %v68 = vunpack.c.l.bf16 %v52
  %v69 = vunpack.c.l.bf16 %v53
  %v70 = vunpack.c.l.bf16 %v54
  %v71 = vunpack.c.l.bf16 %v55
  %v72 = vunpack.c.l.bf16 %v56
  %v73 = vunpack.c.l.bf16 %v57
  %v74 = vunpack.c.l.bf16 %v58
  %v75 = vunpack.c.l.bf16 %v59
  %v76 = vunpack.c.l.bf16 %v60
  %v77 = vunpack.c.l.bf16 %v61
  %v78 = vunpack.c.l.bf16 %v62
  %v79 = vunpack.c.l.bf16 %v63
  %v80 = vunpack.c.l.bf16 %v64
  %v81 = vunpack.c.l.bf16 %v65
  %v82 = vunpack.c.l.bf16 %v66
  %v83 = vperm.slane %v17, 0
  %v84 = vmul.f32 %v35, %v83
  %v85 = vmul.f32 %v36, %v83
  %v86 = vmul.f32 %v37, %v83
  %v87 = vmul.f32 %v38, %v83
  %v88 = vmul.f32 %v39, %v83
  %v89 = vmul.f32 %v40, %v83
  %v90 = vmul.f32 %v41, %v83
  %v91 = vmul.f32 %v42, %v83
  %v92 = vmul.f32 %v43, %v83
  %v93 = vmul.f32 %v44, %v83
  %v94 = vmul.f32 %v45, %v83
  %v95 = vmul.f32 %v46, %v83
  %v96 = vmul.f32 %v47, %v83
  %v97 = vmul.f32 %v48, %v83
  %v98 = vmul.f32 %v49, %v83
  %v99 = vmul.f32 %v50, %v83
  %v100 = vperm.slane %v17, 1
  %v101 = vadd.f32 %v84, %v100
  %v102 = vadd.f32 %v85, %v100
  %v103 = vadd.f32 %v86, %v100
  %v104 = vadd.f32 %v87, %v100
  %v105 = vadd.f32 %v88, %v100
  %v106 = vadd.f32 %v89, %v100
  %v107 = vadd.f32 %v90, %v100
  %v108 = vadd.f32 %v91, %v100
  %v109 = vadd.f32 %v92, %v100
  %v110 = vadd.f32 %v93, %v100
  %v111 = vadd.f32 %v94, %v100
  %v112 = vadd.f32 %v95, %v100
  %v113 = vadd.f32 %v96, %v100
  %v114 = vadd.f32 %v97, %v100
  %v115 = vadd.f32 %v98, %v100
  %v116 = vadd.f32 %v99, %v100
  %v117 = vperm.slane %v18, 0
  %v118 = vmul.f32 %v67, %v117
  %v119 = vmul.f32 %v68, %v117
  %v120 = vmul.f32 %v69, %v117
  %v121 = vmul.f32 %v70, %v117
  %v122 = vmul.f32 %v71, %v117
  %v123 = vmul.f32 %v72, %v117
  %v124 = vmul.f32 %v73, %v117
  %v125 = vmul.f32 %v74, %v117
  %v126 = vmul.f32 %v75, %v117
  %v127 = vmul.f32 %v76, %v117
  %v128 = vmul.f32 %v77, %v117
  %v129 = vmul.f32 %v78, %v117
  %v130 = vmul.f32 %v79, %v117
  %v131 = vmul.f32 %v80, %v117
  %v132 = vmul.f32 %v81, %v117
  %v133 = vmul.f32 %v82, %v117
  %v134 = vperm.slane %v18, 1
  %v135 = vadd.f32 %v118, %v134
  %v136 = vadd.f32 %v119, %v134
  %v137 = vadd.f32 %v120, %v134
  %v138 = vadd.f32 %v121, %v134
  %v139 = vadd.f32 %v122, %v134
  %v140 = vadd.f32 %v123, %v134
  %v141 = vadd.f32 %v124, %v134
  %v142 = vadd.f32 %v125, %v134
  %v143 = vadd.f32 %v126, %v134
  %v144 = vadd.f32 %v127, %v134
  %v145 = vadd.f32 %v128, %v134
  %v146 = vadd.f32 %v129, %v134
  %v147 = vadd.f32 %v130, %v134
  %v148 = vadd.f32 %v131, %v134
  %v149 = vadd.f32 %v132, %v134
  %v150 = vadd.f32 %v133, %v134
  %v151 = vadd.f32 %v101, %v135
  %v152 = vadd.f32 %v102, %v136
  %v153 = vadd.f32 %v103, %v137
  %v154 = vadd.f32 %v104, %v138
  %v155 = vadd.f32 %v105, %v139
  %v156 = vadd.f32 %v106, %v140
  %v157 = vadd.f32 %v107, %v141
  %v158 = vadd.f32 %v108, %v142
  %v159 = vadd.f32 %v109, %v143
  %v160 = vadd.f32 %v110, %v144
  %v161 = vadd.f32 %v111, %v145
  %v162 = vadd.f32 %v112, %v146
  %v163 = vadd.f32 %v113, %v147
  %v164 = vadd.f32 %v114, %v148
  %v165 = vadd.f32 %v115, %v149
  %v166 = vadd.f32 %v116, %v150
  %v167 = vmax.f32 %v151, 0.0
  %v168 = vmax.f32 %v152, 0.0
  %v169 = vmax.f32 %v153, 0.0
  %v170 = vmax.f32 %v154, 0.0
  %v171 = vmax.f32 %v155, 0.0
  %v172 = vmax.f32 %v156, 0.0
  %v173 = vmax.f32 %v157, 0.0
  %v174 = vmax.f32 %v158, 0.0
  %v175 = vmax.f32 %v159, 0.0
  %v176 = vmax.f32 %v160, 0.0
  %v177 = vmax.f32 %v161, 0.0
  %v178 = vmax.f32 %v162, 0.0
  %v179 = vmax.f32 %v163, 0.0
  %v180 = vmax.f32 %v164, 0.0
  %v181 = vmax.f32 %v165, 0.0
  %v182 = vmax.f32 %v166, 0.0
  %v183 = vpack.c.bf16 %v167, %v167
  %v184 = vpack.c.bf16 %v168, %v168
  %v185 = vpack.c.bf16 %v169, %v169
  %v186 = vpack.c.bf16 %v170, %v170
  %v187 = vpack.c.bf16 %v171, %v171
  %v188 = vpack.c.bf16 %v172, %v172
  %v189 = vpack.c.bf16 %v173, %v173
  %v190 = vpack.c.bf16 %v174, %v174
  %v191 = vpack.c.bf16 %v175, %v175
  %v192 = vpack.c.bf16 %v176, %v176
  %v193 = vpack.c.bf16 %v177, %v177
  %v194 = vpack.c.bf16 %v178, %v178
  %v195 = vpack.c.bf16 %v179, %v179
  %v196 = vpack.c.bf16 %v180, %v180
  %v197 = vpack.c.bf16 %v181, %v181
  %v198 = vpack.c.bf16 %v182, %v182
  %199 = vst [vmem:[%s4] sm:$0xf] %v183
  %200 = vst [vmem:[%s4 + $0x4] sm:$0xf] %v184
  %201 = vst [vmem:[%s4 + $0x8] sm:$0xf] %v185
  %202 = vst [vmem:[%s4 + $0xc] sm:$0xf] %v186
  %203 = vst [vmem:[%s4 + $0x10] sm:$0xf] %v187
  %204 = vst [vmem:[%s4 + $0x14] sm:$0xf] %v188
  %205 = vst [vmem:[%s4 + $0x18] sm:$0xf] %v189
  %206 = vst [vmem:[%s4 + $0x1c] sm:$0xf] %v190
  %207 = vst [vmem:[%s4 + $0x20] sm:$0xf] %v191
  %208 = vst [vmem:[%s4 + $0x24] sm:$0xf] %v192
  %209 = vst [vmem:[%s4 + $0x28] sm:$0xf] %v193
  %210 = vst [vmem:[%s4 + $0x2c] sm:$0xf] %v194
  %211 = vst [vmem:[%s4 + $0x30] sm:$0xf] %v195
  %212 = vst [vmem:[%s4 + $0x34] sm:$0xf] %v196
  %213 = vst [vmem:[%s4 + $0x38] sm:$0xf] %v197
  %214 = vst [vmem:[%s4 + $0x3c] sm:$0xf] %v198
  // Predicated region
  $region18: #{basic_block_forward.5} parent=0 // pred_check
    _
  $region19: #{basic_block_forward.5} parent=0 // pred_check_branch
    %216 = sbr.rel (0) target = $region21
  $region20: #{basic_block_forward.5} parent=0 // pred_region
    _
  $region21: #{basic_block_forward.5} parent=0 // pred_fallthru
    _
  // Predicated region
  $region22: #{basic_block_forward.5} parent=0 // pred_check
    _
  $region23: #{basic_block_forward.5} parent=0 // pred_check_branch
    %218 = sbr.rel (0) target = $region25
  $region24: #{basic_block_forward.5} parent=0 // pred_region
    _
  $region25: #{basic_block_forward.5} parent=0 // pred_fallthru
    _

// kernel: basic_block_forward.3
$region0: #{basic_block_forward.3}
  #allocation0 [shape = 'u32[]', space=smem, size = 0x4, offset = 0x4, fixed_abs, tag = 'smem constant byte address 0x4 - core index']
  #allocation1 [shape = 'u32[72,128]{1,0:T(1,128)}', space=vmem, size = 0x9000, scoped, tag = 'internal scratch']
  %s0 = inlined_call_operand.vmem [shape: bf16[8,9,9,128], index: 0, kind: input, shape index: {}]
  %s1 = inlined_call_operand.vmem [shape: bf16[9,128,128], index: 1, kind: input, shape index: {}]
  %s2 = inlined_call_operand.vmem [shape: bf16[128,128], index: 2, kind: input, shape index: {}]
  %s3 = inlined_call_operand.vmem [shape: bf16[2,8,8,128], index: 3, kind: output, shape index: {0}]
  %s4 = inlined_call_operand.vmem [shape: f32[2,1,2,128], index: 4, kind: output, shape index: {1}]
  %s5 = inlined_call_operand.vmem [shape: bf16[2,8,8,128], index: 5, kind: output, shape index: {2}]
  %s6 = inlined_call_operand.vmem [shape: f32[2,1,2,128], index: 6, kind: output, shape index: {3}]
  %7 = xla_tuple %s3, %s4, %s5, %s6
  %s8 = sld [smem:[#allocation0]]
  $region69: #{basic_block_forward.3} parent=0
    _
  %s10 = ssub.s32 1, %s8
  %s11 = scalar_select 0, %s10, %s8
  loop: start=0, step=1, limit=4
  $region2: #{basic_block_forward.3} parent=0 // loop_pre_header
    _
  $region3: #{basic_block_forward.3} parent=0 // loop_header
    %s13 = sphi 0, %s17
    %p14 = scmp.ge.s32.totalorder %s13, 4
    %s20 = sphi 0, %s32
    %s21 = sphi 0, %s28
    %s22 = sphi 0, %s20
    %s23 = sphi 0, %s21
    %s24 = sphi 0, %s22
    %s25 = sphi 0, %s23
    %s35 = sphi 0, %s37
    %s38 = sphi 0, %s35
    %s39 = sphi 0, %s38
    %s55 = sphi 0, %s39
    %s59 = sphi 0, %s59
    %s61 = sphi 0, %s59
    %s62 = sphi 0, %s61
    %s76 = sphi 0, %s62
    %s80 = sphi 0, %s80
    %s82 = sphi 0, %s80
    %s83 = sphi 0, %s82
    %s97 = sphi 0, %s83
    %s105 = sphi 0, %s107
    %s108 = sphi 0, %s105
    %s109 = sphi 0, %s108
    %s125 = sphi 0, %s109
    %s133 = sphi 0, %s135
    %s136 = sphi 0, %s133
    %s137 = sphi 0, %s136
    %s153 = sphi 0, %s137
    %s161 = sphi 0, %s163
    %s164 = sphi 0, %s161
    %s165 = sphi 0, %s164
    %s181 = sphi 0, %s165
    %s189 = sphi 0, %s191
    %s192 = sphi 0, %s189
    %s193 = sphi 0, %s192
    %s209 = sphi 0, %s193
  $region4: #{basic_block_forward.3} parent=0 // loop_header_branch
    %16 = sbr.rel (%p14) target = $region8
  $region5: #{basic_block_forward.3} parent=0 // loop_body
    %s18 = ssub.s32 %s13, 1
    %s19 = ssub.s32 %s13, 2
    %s26 = sadd.s32 1, %s21
    %p27 = scmp.ge.s32.totalorder %s26, 1
    %s28 = scalar_select %p27, 0, %s26
    %s29 = sadd.s32 1, %s20
    %s30 = scalar_select %p27, %s29, %s20
    %p31 = scmp.ge.s32.totalorder %s30, 2
    %s32 = scalar_select %p31, 0, %s30
    %s33 = ssub.s32 %s20, %s32
    %p34 = scmp.eq.s32.totalorder %s33, 0
    %s36 = sadd.s32 %s35, 1
    %s37 = scalar_select %p34, %s35, %s36
    %p40 = pneg %p34
    %p41 = scmp.eq.s32.totalorder %s13, 1
    %p42 = por %p40, %p41
    %p43 = scmp.ne.s32.totalorder %s35, %s38
    %p44 = scmp.eq.s32.totalorder %s13, 0
    %p45 = por %p43, %p44
    %p46 = scmp.ne.s32.totalorder %s35, %s38
    %p47 = scmp.eq.s32.totalorder %s18, 1
    %p48 = por %p46, %p47
    %p49 = scmp.ne.s32.totalorder %s38, %s39
    %p50 = scmp.eq.s32.totalorder %s18, 0
    %p51 = por %p49, %p50
    %p52 = scmp.ne.s32.totalorder %s38, %s39
    %p53 = scmp.eq.s32.totalorder %s19, 1
    %p54 = por %p52, %p53
    %p56 = scmp.ne.s32.totalorder %s39, %s55
    %p57 = scmp.eq.s32.totalorder %s19, 0
    %p58 = por %p56, %p57
    %s60 = sadd.s32 %s59, 1
    %p63 = scmp.eq.s32.totalorder %s13, 1
    %p64 = scmp.ne.s32.totalorder %s59, %s61
    %p65 = scmp.eq.s32.totalorder %s13, 0
    %p66 = por %p64, %p65
    %p67 = scmp.ne.s32.totalorder %s59, %s61
    %p68 = scmp.eq.s32.totalorder %s18, 1
    %p69 = por %p67, %p68
    %p70 = scmp.ne.s32.totalorder %s61, %s62
    %p71 = scmp.eq.s32.totalorder %s18, 0
    %p72 = por %p70, %p71
    %p73 = scmp.ne.s32.totalorder %s61, %s62
    %p74 = scmp.eq.s32.totalorder %s19, 1
    %p75 = por %p73, %p74
    %p77 = scmp.ne.s32.totalorder %s62, %s76
    %p78 = scmp.eq.s32.totalorder %s19, 0
    %p79 = por %p77, %p78
    %s81 = sadd.s32 %s80, 1
    %p84 = scmp.eq.s32.totalorder %s13, 1
    %p85 = scmp.ne.s32.totalorder %s80, %s82
    %p86 = scmp.eq.s32.totalorder %s13, 0
    %p87 = por %p85, %p86
    %p88 = scmp.ne.s32.totalorder %s80, %s82
    %p89 = scmp.eq.s32.totalorder %s18, 1
    %p90 = por %p88, %p89
    %p91 = scmp.ne.s32.totalorder %s82, %s83
    %p92 = scmp.eq.s32.totalorder %s18, 0
    %p93 = por %p91, %p92
    %p94 = scmp.ne.s32.totalorder %s82, %s83
    %p95 = scmp.eq.s32.totalorder %s19, 1
    %p96 = por %p94, %p95
    %p98 = scmp.ne.s32.totalorder %s83, %s97
    %p99 = scmp.eq.s32.totalorder %s19, 0
    %p100 = por %p98, %p99
    %s101 = ssub.s32 %s20, %s32
    %s102 = ssub.s32 %s21, %s28
    %s103 = sor.u32 %s101, %s102
    %p104 = scmp.eq.s32.totalorder %s103, 0
    %s106 = sadd.s32 %s105, 1
    %s107 = scalar_select %p104, %s105, %s106
    %p110 = pneg %p104
    %p111 = scmp.eq.s32.totalorder %s13, 1
    %p112 = por %p110, %p111
    %p113 = scmp.ne.s32.totalorder %s105, %s108
    %p114 = scmp.eq.s32.totalorder %s13, 0
    %p115 = por %p113, %p114
    %p116 = scmp.ne.s32.totalorder %s105, %s108
    %p117 = scmp.eq.s32.totalorder %s18, 1
    %p118 = por %p116, %p117
    %p119 = scmp.ne.s32.totalorder %s108, %s109
    %p120 = scmp.eq.s32.totalorder %s18, 0
    %p121 = por %p119, %p120
    %p122 = scmp.ne.s32.totalorder %s108, %s109
    %p123 = scmp.eq.s32.totalorder %s19, 1
    %p124 = por %p122, %p123
    %p126 = scmp.ne.s32.totalorder %s109, %s125
    %p127 = scmp.eq.s32.totalorder %s19, 0
    %p128 = por %p126, %p127
    %s129 = ssub.s32 %s20, %s32
    %s130 = ssub.s32 %s21, %s28
    %s131 = sor.u32 %s129, %s130
    %p132 = scmp.eq.s32.totalorder %s131, 0
    %s134 = sadd.s32 %s133, 1
    %s135 = scalar_select %p132, %s133, %s134
    %p138 = pneg %p132
    %p139 = scmp.eq.s32.totalorder %s13, 1
    %p140 = por %p138, %p139
    %p141 = scmp.ne.s32.totalorder %s133, %s136
    %p142 = scmp.eq.s32.totalorder %s13, 0
    %p143 = por %p141, %p142
    %p144 = scmp.ne.s32.totalorder %s133, %s136
    %p145 = scmp.eq.s32.totalorder %s18, 1
    %p146 = por %p144, %p145
    %p147 = scmp.ne.s32.totalorder %s136, %s137
    %p148 = scmp.eq.s32.totalorder %s18, 0
    %p149 = por %p147, %p148
    %p150 = scmp.ne.s32.totalorder %s136, %s137
    %p151 = scmp.eq.s32.totalorder %s19, 1
    %p152 = por %p150, %p151
    %p154 = scmp.ne.s32.totalorder %s137, %s153
    %p155 = scmp.eq.s32.totalorder %s19, 0
    %p156 = por %p154, %p155
    %s157 = ssub.s32 %s20, %s32
    %s158 = ssub.s32 %s21, %s28
    %s159 = sor.u32 %s157, %s158
    %p160 = scmp.eq.s32.totalorder %s159, 0
    %s162 = sadd.s32 %s161, 1
    %s163 = scalar_select %p160, %s161, %s162
    %p166 = pneg %p160
    %p167 = scmp.eq.s32.totalorder %s13, 1
    %p168 = por %p166, %p167
    %p169 = scmp.ne.s32.totalorder %s161, %s164
    %p170 = scmp.eq.s32.totalorder %s13, 0
    %p171 = por %p169, %p170
    %p172 = scmp.ne.s32.totalorder %s161, %s164
    %p173 = scmp.eq.s32.totalorder %s18, 1
    %p174 = por %p172, %p173
    %p175 = scmp.ne.s32.totalorder %s164, %s165
    %p176 = scmp.eq.s32.totalorder %s18, 0
    %p177 = por %p175, %p176
    %p178 = scmp.ne.s32.totalorder %s164, %s165
    %p179 = scmp.eq.s32.totalorder %s19, 1
    %p180 = por %p178, %p179
    %p182 = scmp.ne.s32.totalorder %s165, %s181
    %p183 = scmp.eq.s32.totalorder %s19, 0
    %p184 = por %p182, %p183
    %s185 = ssub.s32 %s20, %s32
    %s186 = ssub.s32 %s21, %s28
    %s187 = sor.u32 %s185, %s186
    %p188 = scmp.eq.s32.totalorder %s187, 0
    %s190 = sadd.s32 %s189, 1
    %s191 = scalar_select %p188, %s189, %s190
    %p194 = pneg %p188
    %p195 = scmp.eq.s32.totalorder %s13, 1
    %p196 = por %p194, %p195
    %p197 = scmp.ne.s32.totalorder %s189, %s192
    %p198 = scmp.eq.s32.totalorder %s13, 0
    %p199 = por %p197, %p198
    %p200 = scmp.ne.s32.totalorder %s189, %s192
    %p201 = scmp.eq.s32.totalorder %s18, 1
    %p202 = por %p200, %p201
    %p203 = scmp.ne.s32.totalorder %s192, %s193
    %p204 = scmp.eq.s32.totalorder %s18, 0
    %p205 = por %p203, %p204
    %p206 = scmp.ne.s32.totalorder %s192, %s193
    %p207 = scmp.eq.s32.totalorder %s19, 1
    %p208 = por %p206, %p207
    %p210 = scmp.ne.s32.totalorder %s193, %s209
    %p211 = scmp.eq.s32.totalorder %s19, 0
    %p212 = por %p210, %p211
    %p213 = scmp.le.s32.totalorder 1, %s13
    %p214 = scmp.lt.s32.totalorder %s13, 3
    %p215 = pnand %p213, %p214
    %p216 = pneg %p215
    // Predicated region
    $region9: #{basic_block_forward.3} parent=5 // pred_check
      _
    $region10: #{basic_block_forward.3} parent=5 // pred_check_branch
      %218 = sbr.rel (%p215) target = $region12
    $region11: #{basic_block_forward.3} parent=5 // pred_region
      %s219 = ssub.s32 %s13, 1
      // Predicated region
      $region13: #{basic_block_forward.3} parent=11 // pred_check
        %p220 = pneg %p72
      $region14: #{basic_block_forward.3} parent=11 // pred_check_branch
        %222 = sbr.rel (%p220) target = $region16
      $region15: #{basic_block_forward.3} parent=11 // pred_region
        _
      $region16: #{basic_block_forward.3} parent=11 // pred_fallthru
        _
      // Predicated region
      $region17: #{basic_block_forward.3} parent=11 // pred_check
        %p223 = pneg %p93
      $region18: #{basic_block_forward.3} parent=11 // pred_check_branch
        %225 = sbr.rel (%p223) target = $region20
      $region19: #{basic_block_forward.3} parent=11 // pred_region
        _
      $region20: #{basic_block_forward.3} parent=11 // pred_fallthru
        _
    $region12: #{basic_block_forward.3} parent=5 // pred_fallthru
      _
    %p226 = scmp.lt.s32.totalorder %s13, 2
    // Predicated region
    $region21: #{basic_block_forward.3} parent=5 // pred_check
      %p227 = pneg %p226
    $region22: #{basic_block_forward.3} parent=5 // pred_check_branch
      %229 = sbr.rel (%p227) target = $region24
    $region23: #{basic_block_forward.3} parent=5 // pred_region
      // Predicated region
      $region25: #{basic_block_forward.3} parent=23 // pred_check
        %p230 = pneg %p45
      $region26: #{basic_block_forward.3} parent=23 // pred_check_branch
        %232 = sbr.rel (%p230) target = $region28
      $region27: #{basic_block_forward.3} parent=23 // pred_region
        %s233 = smul.u32 4, %s20
        %p234 = scmp.lt.s32.totalorder %s233, 7
        %s235 = scalar_select %p234, %s233, 7
        %s236 = smul.addr %s235, 18
        %s237 = smul.addr %s236, 4
        %s238 = scalar_lea.vmem %s0, %s237
        %s239 = smul.u32 4, %s20
      $region28: #{basic_block_forward.3} parent=23 // pred_fallthru
        _
    $region24: #{basic_block_forward.3} parent=5 // pred_fallthru
      _
    %p240 = scmp.le.s32.totalorder 1, %s13
    %p241 = scmp.lt.s32.totalorder %s13, 3
    %p242 = pnand %p240, %p241
    %p243 = pneg %p242
    // Predicated region
    $region29: #{basic_block_forward.3} parent=5 // pred_check
      _
    $region30: #{basic_block_forward.3} parent=5 // pred_check_branch
      %245 = sbr.rel (%p242) target = $region32
    $region31: #{basic_block_forward.3} parent=5 // pred_region
      %s246 = ssub.s32 %s13, 1
      %s247 = smul.u32 4, %s22
      %p248 = scmp.lt.s32.totalorder %s247, 7
      %s249 = scalar_select %p248, %s247, 7
      %s250 = smul.addr %s249, 18
      %s251 = smul.addr %s250, 4
      %s252 = scalar_lea.vmem %s0, %s251
      %p253 = pneg %p51
      %p254 = pneg %p48
      %p255 = pneg %p72
      %p256 = pneg %p69
      %p257 = pneg %p93
      %p258 = pneg %p90
      %p259 = pneg %p121
      %p260 = pneg %p118
      %s261 = smul.u32 8, %s23
      %p262 = scmp.lt.s32.totalorder %s22, 1
      %s263 = scalar_select %p262, %s22, 1
      %p264 = scmp.lt.s32.totalorder %s261, 7
      %s265 = scalar_select %p264, %s261, 7
      %s266 = smul.addr %s263, 8
      %s267 = sadd.s32 %s265, %s266
      %s268 = smul.addr %s267, 4
      %s269 = scalar_lea.vmem %s3, %s268
      %p270 = pneg %p149
      %p271 = pneg %p146
      %p272 = scmp.lt.s32.totalorder %s22, 1
      %s273 = scalar_select %p272, %s22, 1
      %p274 = scmp.lt.s32.totalorder %s23, 0
      %s275 = scalar_select %p274, %s23, 0
      %s276 = sadd.s32 %s275, %s273
      %s277 = smul.addr %s276, 2
      %s278 = scalar_lea.vmem %s4, %s277
      %p279 = pneg %p177
      %p280 = pneg %p174
      %s281 = smul.u32 8, %s23
      %p282 = scmp.lt.s32.totalorder %s22, 1
      %s283 = scalar_select %p282, %s22, 1
      %p284 = scmp.lt.s32.totalorder %s281, 7
      %s285 = scalar_select %p284, %s281, 7
      %s286 = smul.addr %s283, 8
      %s287 = sadd.s32 %s285, %s286
      %s288 = smul.addr %s287, 4
      %s289 = scalar_lea.vmem %s5, %s288
      %p290 = pneg %p205
      %p291 = pneg %p202
      %p292 = scmp.lt.s32.totalorder %s22, 1
      %s293 = scalar_select %p292, %s22, 1
      %p294 = scmp.lt.s32.totalorder %s23, 0
      %s295 = scalar_select %p294, %s23, 0
      %s296 = sadd.s32 %s295, %s293
      %s297 = smul.addr %s296, 2
      %s298 = scalar_lea.vmem %s6, %s297
      %s299 = smul.u32 4, %s22
      %p300 = scmp.lt.s32.totalorder %s299, 7
      %s301 = scalar_select %p300, %s299, 7
      %s302 = smul.addr %s301, 18
      %s303 = smul.addr %s302, 4
      %s304 = scalar_lea.vmem %s0, %s303
      %s305 = smul.u32 4, %s22
      %s306 = smul.u32 8, %s23
      %p307 = scmp.lt.s32.totalorder %s22, 1
      %s308 = scalar_select %p307, %s22, 1
      %p309 = scmp.lt.s32.totalorder %s306, 7
      %s310 = scalar_select %p309, %s306, 7
      %s311 = smul.addr %s308, 8
      %s312 = sadd.s32 %s310, %s311
      %s313 = smul.addr %s312, 4
      %s314 = scalar_lea.vmem %s3, %s313
      %s315 = smul.u32 8, %s23
      %p316 = scmp.lt.s32.totalorder %s22, 1
      %s317 = scalar_select %p316, %s22, 1
      %p318 = scmp.lt.s32.totalorder %s23, 0
      %s319 = scalar_select %p318, %s23, 0
      %s320 = sadd.s32 %s319, %s317
      %s321 = smul.addr %s320, 2
      %s322 = scalar_lea.vmem %s4, %s321
      %s323 = smul.u32 8, %s23
      %p324 = scmp.lt.s32.totalorder %s22, 1
      %s325 = scalar_select %p324, %s22, 1
      %p326 = scmp.lt.s32.totalorder %s323, 7
      %s327 = scalar_select %p326, %s323, 7
      %s328 = smul.addr %s325, 8
      %s329 = sadd.s32 %s327, %s328
      %s330 = smul.addr %s329, 4
      %s331 = scalar_lea.vmem %s5, %s330
      %s332 = smul.u32 8, %s23
      %p333 = scmp.lt.s32.totalorder %s22, 1
      %s334 = scalar_select %p333, %s22, 1
      %p335 = scmp.lt.s32.totalorder %s23, 0
      %s336 = scalar_select %p335, %s23, 0
      %s337 = sadd.s32 %s336, %s334
      %s338 = smul.addr %s337, 2
      %s339 = scalar_lea.vmem %s6, %s338
      %s340 = smul.u32 %s23, 8
      %s341 = smul.u32 %s340, 2
      %s342 = smul.addr %s341, 4
      %s343 = scalar_lea.vmem %s304, %s342
      %v344 = vld [vmem:[%s343] sm:$0xf]
      %v345 = vld [vmem:[%s343 + $0x8] sm:$0xf]
      %v346 = vld [vmem:[%s343 + $0x10] sm:$0xf]
      %v347 = vld [vmem:[%s343 + $0x18] sm:$0xf]
      %v348 = vld [vmem:[%s343 + $0x20] sm:$0xf]
      %v349 = vld [vmem:[%s343 + $0x28] sm:$0xf]
      %v350 = vld [vmem:[%s343 + $0x30] sm:$0xf]
      %v351 = vld [vmem:[%s343 + $0x38] sm:$0xf]
      %v352 = vld [vmem:[%s1] sm:$0xf]
      %v353 = vld [vmem:[%s1 + $0x4] sm:$0xf]
      %v354 = vld [vmem:[%s1 + $0x8] sm:$0xf]
      %v355 = vld [vmem:[%s1 + $0xc] sm:$0xf]
      %v356 = vld [vmem:[%s1 + $0x10] sm:$0xf]
      %v357 = vld [vmem:[%s1 + $0x14] sm:$0xf]
      %v358 = vld [vmem:[%s1 + $0x18] sm:$0xf]
      %v359 = vld [vmem:[%s1 + $0x1c] sm:$0xf]
      %v360 = vld [vmem:[%s1 + $0x20] sm:$0xf]
      %v361 = vld [vmem:[%s1 + $0x24] sm:$0xf]
      %v362 = vld [vmem:[%s1 + $0x28] sm:$0xf]
      %v363 = vld [vmem:[%s1 + $0x2c] sm:$0xf]
      %v364 = vld [vmem:[%s1 + $0x30] sm:$0xf]
      %v365 = vld [vmem:[%s1 + $0x34] sm:$0xf]
      %v366 = vld [vmem:[%s1 + $0x38] sm:$0xf]
      %v367 = vld [vmem:[%s1 + $0x3c] sm:$0xf]
      %s368 = sadd.s32 %s341, 18
      %s369 = smul.addr %s368, 4
      %s370 = scalar_lea.vmem %s304, %s369
      %v371 = vld [vmem:[%s370] sm:$0xf]
      %v372 = vld [vmem:[%s370 + $0x8] sm:$0xf]
      %v373 = vld [vmem:[%s370 + $0x10] sm:$0xf]
      %v374 = vld [vmem:[%s370 + $0x18] sm:$0xf]
      %v375 = vld [vmem:[%s370 + $0x20] sm:$0xf]
      %v376 = vld [vmem:[%s370 + $0x28] sm:$0xf]
      %v377 = vld [vmem:[%s370 + $0x30] sm:$0xf]
      %v378 = vld [vmem:[%s370 + $0x38] sm:$0xf]
      %s379 = scalar_lea.vmem %s1, 64
      %v380 = vld [vmem:[%s379] sm:$0xf]
      %v381 = vld [vmem:[%s379 + $0x4] sm:$0xf]
      %v382 = vld [vmem:[%s379 + $0x8] sm:$0xf]
      %v383 = vld [vmem:[%s379 + $0xc] sm:$0xf]
      %v384 = vld [vmem:[%s379 + $0x10] sm:$0xf]
      %v385 = vld [vmem:[%s379 + $0x14] sm:$0xf]
      %v386 = vld [vmem:[%s379 + $0x18] sm:$0xf]
      %v387 = vld [vmem:[%s379 + $0x1c] sm:$0xf]
      %v388 = vld [vmem:[%s379 + $0x20] sm:$0xf]
      %v389 = vld [vmem:[%s379 + $0x24] sm:$0xf]
      %v390 = vld [vmem:[%s379 + $0x28] sm:$0xf]
      %v391 = vld [vmem:[%s379 + $0x2c] sm:$0xf]
      %v392 = vld [vmem:[%s379 + $0x30] sm:$0xf]
      %v393 = vld [vmem:[%s379 + $0x34] sm:$0xf]
      %v394 = vld [vmem:[%s379 + $0x38] sm:$0xf]
      %v395 = vld [vmem:[%s379 + $0x3c] sm:$0xf]
      %v404 = vunpack.c.l.b16 %v371
      %v405 = vunpack.c.l.b16 %v372
      %v406 = vunpack.c.l.b16 %v373
      %v407 = vunpack.c.l.b16 %v374
      %v408 = vunpack.c.l.b16 %v375
      %v409 = vunpack.c.l.b16 %v376
      %v410 = vunpack.c.l.b16 %v377
      %v411 = vunpack.c.l.b16 %v378
      %v412 = vpack.c.b16 %v405, %v404
      %v413 = vpack.c.b16 %v407, %v406
      %v414 = vpack.c.b16 %v409, %v408
      %v415 = vpack.c.b16 %v411, %v410
      %v436 = vunpack.c.l.b16 %v380
      %v437 = vunpack.c.l.b16 %v381
      %v438 = vunpack.c.l.b16 %v382
      %v439 = vunpack.c.l.b16 %v383
      %v440 = vunpack.c.l.b16 %v384
      %v441 = vunpack.c.l.b16 %v385
      %v442 = vunpack.c.l.b16 %v386
      %v443 = vunpack.c.l.b16 %v387
      %v444 = vunpack.c.l.b16 %v388
      %v445 = vunpack.c.l.b16 %v389
      %v446 = vunpack.c.l.b16 %v390
      %v447 = vunpack.c.l.b16 %v391
      %v448 = vunpack.c.l.b16 %v392
      %v449 = vunpack.c.l.b16 %v393
      %v450 = vunpack.c.l.b16 %v394
      %v451 = vunpack.c.l.b16 %v395
      %v452 = vpack.c.b16 %v437, %v436
      %v453 = vpack.c.b16 %v439, %v438
      %v454 = vpack.c.b16 %v441, %v440
      %v455 = vpack.c.b16 %v443, %v442
      %v456 = vpack.c.b16 %v445, %v444
      %v457 = vpack.c.b16 %v447, %v446
      %v458 = vpack.c.b16 %v449, %v448
      %v459 = vpack.c.b16 %v451, %v450
      %468 = vmatpush.bf16.msra.mxu0 %v459
      %469 = vmatpush.bf16.msra.mxu0 %v458
      %470 = vmatpush.bf16.msra.mxu0 %v457
      %471 = vmatpush.bf16.msra.mxu0 %v456
      %472 = vmatpush.bf16.msra.mxu0 %v455
      %473 = vmatpush.bf16.msra.mxu0 %v454
      %474 = vmatpush.bf16.msra.mxu0 %v453
      %475 = vmatpush.bf16.msra.mxu0 %v452
      %476 = vmatmul.bf16.gmra.mxu0 %v412
      %v477 = vpop.f32.mrf.mxu0
      %v478 = vadd.f32 0.0, %v477
      %v479 = vpop.f32.mrf.mxu0
      %v480 = vadd.f32 0.0, %v479
      %481 = vmatmul.bf16.gmra.mxu0 %v413
      %v482 = vpop.f32.mrf.mxu0
      %v483 = vadd.f32 0.0, %v482
      %v484 = vpop.f32.mrf.mxu0
      %v485 = vadd.f32 0.0, %v484
      %486 = vmatmul.bf16.gmra.mxu0 %v414
      %v487 = vpop.f32.mrf.mxu0
      %v488 = vadd.f32 0.0, %v487
      %v489 = vpop.f32.mrf.mxu0
      %v490 = vadd.f32 0.0, %v489
      %491 = vmatmul.bf16.gmra.mxu0 %v415
      %v492 = vpop.f32.mrf.mxu0
      %v493 = vadd.f32 0.0, %v492
      %v494 = vpop.f32.mrf.mxu0
      %v495 = vadd.f32 0.0, %v494
      %496 = vdwg.mxu0
      %v505 = vunpack.c.l.b16 %v344
      %v506 = vunpack.c.l.b16 %v345
      %v507 = vunpack.c.l.b16 %v346
      %v508 = vunpack.c.l.b16 %v347
      %v509 = vunpack.c.l.b16 %v348
      %v510 = vunpack.c.l.b16 %v349
      %v511 = vunpack.c.l.b16 %v350
      %v512 = vunpack.c.l.b16 %v351
      %v513 = vpack.c.b16 %v506, %v505
      %v514 = vpack.c.b16 %v508, %v507
      %v515 = vpack.c.b16 %v510, %v509
      %v516 = vpack.c.b16 %v512, %v511
      %v537 = vunpack.c.l.b16 %v352
      %v538 = vunpack.c.l.b16 %v353
      %v539 = vunpack.c.l.b16 %v354
      %v540 = vunpack.c.l.b16 %v355
      %v541 = vunpack.c.l.b16 %v356
      %v542 = vunpack.c.l.b16 %v357
      %v543 = vunpack.c.l.b16 %v358
      %v544 = vunpack.c.l.b16 %v359
      %v545 = vunpack.c.l.b16 %v360
      %v546 = vunpack.c.l.b16 %v361
      %v547 = vunpack.c.l.b16 %v362
      %v548 = vunpack.c.l.b16 %v363
      %v549 = vunpack.c.l.b16 %v364
      %v550 = vunpack.c.l.b16 %v365
      %v551 = vunpack.c.l.b16 %v366
      %v552 = vunpack.c.l.b16 %v367
      %v553 = vpack.c.b16 %v538, %v537
      %v554 = vpack.c.b16 %v540, %v539
      %v555 = vpack.c.b16 %v542, %v541
      %v556 = vpack.c.b16 %v544, %v543
      %v557 = vpack.c.b16 %v546, %v545
      %v558 = vpack.c.b16 %v548, %v547
      %v559 = vpack.c.b16 %v550, %v549
      %v560 = vpack.c.b16 %v552, %v551
      %569 = vmatpush.bf16.msra.mxu0 %v560
      %570 = vmatpush.bf16.msra.mxu0 %v559
      %571 = vmatpush.bf16.msra.mxu0 %v558
      %572 = vmatpush.bf16.msra.mxu0 %v557
      %573 = vmatpush.bf16.msra.mxu0 %v556
      %574 = vmatpush.bf16.msra.mxu0 %v555
      %575 = vmatpush.bf16.msra.mxu0 %v554
      %576 = vmatpush.bf16.msra.mxu0 %v553
      %577 = vmatmul.bf16.gmra.mxu0 %v513
      %v578 = vpop.f32.mrf.mxu0
      %v579 = vadd.f32 %v478, %v578
      %v580 = vpop.f32.mrf.mxu0
      %v581 = vadd.f32 %v480, %v580
      %582 = vmatmul.bf16.gmra.mxu0 %v514
      %v583 = vpop.f32.mrf.mxu0
      %v584 = vadd.f32 %v483, %v583
      %v585 = vpop.f32.mrf.mxu0
      %v586 = vadd.f32 %v485, %v585
      %587 = vmatmul.bf16.gmra.mxu0 %v515
      %v588 = vpop.f32.mrf.mxu0
      %v589 = vadd.f32 %v488, %v588
      %v590 = vpop.f32.mrf.mxu0
      %v591 = vadd.f32 %v490, %v590
      %592 = vmatmul.bf16.gmra.mxu0 %v516
      %v593 = vpop.f32.mrf.mxu0
      %v594 = vadd.f32 %v493, %v593
      %v595 = vpop.f32.mrf.mxu0
      %v596 = vadd.f32 %v495, %v595
      %597 = vdwg.mxu0
      %v598 = vld [vmem:[%s343] sm:$0xf]
      %v599 = vld [vmem:[%s343 + $0x4] sm:$0x1]
      %v600 = vld [vmem:[%s343 + $0x8] sm:$0xf]
      %v601 = vld [vmem:[%s343 + $0xc] sm:$0x1]
      %v602 = vld [vmem:[%s343 + $0x10] sm:$0xf]
      %v603 = vld [vmem:[%s343 + $0x14] sm:$0x1]
      %v604 = vld [vmem:[%s343 + $0x18] sm:$0xf]
      %v605 = vld [vmem:[%s343 + $0x1c] sm:$0x1]
      %v606 = vld [vmem:[%s343 + $0x20] sm:$0xf]
      %v607 = vld [vmem:[%s343 + $0x24] sm:$0x1]
      %v608 = vld [vmem:[%s343 + $0x28] sm:$0xf]
      %v609 = vld [vmem:[%s343 + $0x2c] sm:$0x1]
      %v610 = vld [vmem:[%s343 + $0x30] sm:$0xf]
      %v611 = vld [vmem:[%s343 + $0x34] sm:$0x1]
      %v612 = vld [vmem:[%s343 + $0x38] sm:$0xf]
      %v613 = vld [vmem:[%s343 + $0x3c] sm:$0x1]
      %vm614 = vsmask.f32 3328
      %vm615 = vsmask.f32 7440
      %vm616 = vmor %vm614, %vm615
      %v618 = vshrl.u32 %v598, 16
      %v620 = vrot.slane %v618, 4
      %v621 = vshll.u32 %v598, 16
      %v623 = vrot.slane %v621, 5
      %v624 = vor.u32 %v620, %v623
      %v625 = vrot.slane %v624, 4
      %v627 = vshll.u32 %v599, 16
      %v629 = vrot.slane %v627, 5
      %v630 = vsel %vm616, %v625, %v629
      %v632 = vshrl.u32 %v600, 16
      %v634 = vrot.slane %v632, 4
      %v635 = vshll.u32 %v600, 16
      %v637 = vrot.slane %v635, 5
      %v638 = vor.u32 %v634, %v637
      %v639 = vrot.slane %v638, 4
      %v641 = vshll.u32 %v601, 16
      %v643 = vrot.slane %v641, 5
      %v644 = vsel %vm616, %v639, %v643
      %v646 = vshrl.u32 %v602, 16
      %v648 = vrot.slane %v646, 4
      %v649 = vshll.u32 %v602, 16
      %v651 = vrot.slane %v649, 5
      %v652 = vor.u32 %v648, %v651
      %v653 = vrot.slane %v652, 4
      %v655 = vshll.u32 %v603, 16
      %v657 = vrot.slane %v655, 5
      %v658 = vsel %vm616, %v653, %v657
      %v660 = vshrl.u32 %v604, 16
      %v662 = vrot.slane %v660, 4
      %v663 = vshll.u32 %v604, 16
      %v665 = vrot.slane %v663, 5
      %v666 = vor.u32 %v662, %v665
      %v667 = vrot.slane %v666, 4
      %v669 = vshll.u32 %v605, 16
      %v671 = vrot.slane %v669, 5
      %v672 = vsel %vm616, %v667, %v671
      %v674 = vshrl.u32 %v606, 16
      %v676 = vrot.slane %v674, 4
      %v677 = vshll.u32 %v606, 16
      %v679 = vrot.slane %v677, 5
      %v680 = vor.u32 %v676, %v679
      %v681 = vrot.slane %v680, 4
      %v683 = vshll.u32 %v607, 16
      %v685 = vrot.slane %v683, 5
      %v686 = vsel %vm616, %v681, %v685
      %v688 = vshrl.u32 %v608, 16
      %v690 = vrot.slane %v688, 4
      %v691 = vshll.u32 %v608, 16
      %v693 = vrot.slane %v691, 5
      %v694 = vor.u32 %v690, %v693
      %v695 = vrot.slane %v694, 4
      %v697 = vshll.u32 %v609, 16
      %v699 = vrot.slane %v697, 5
      %v700 = vsel %vm616, %v695, %v699
      %v702 = vshrl.u32 %v610, 16
      %v704 = vrot.slane %v702, 4
      %v705 = vshll.u32 %v610, 16
      %v707 = vrot.slane %v705, 5
      %v708 = vor.u32 %v704, %v707
      %v709 = vrot.slane %v708, 4
      %v711 = vshll.u32 %v611, 16
      %v713 = vrot.slane %v711, 5
      %v714 = vsel %vm616, %v709, %v713
      %v716 = vshrl.u32 %v612, 16
      %v718 = vrot.slane %v716, 4
      %v719 = vshll.u32 %v612, 16
      %v721 = vrot.slane %v719, 5
      %v722 = vor.u32 %v718, %v721
      %v723 = vrot.slane %v722, 4
      %v725 = vshll.u32 %v613, 16
      %v727 = vrot.slane %v725, 5
      %v728 = vsel %vm616, %v723, %v727
      %s729 = scalar_lea.vmem %s1, 128
      %v730 = vld [vmem:[%s729] sm:$0xf]
      %v731 = vld [vmem:[%s729 + $0x4] sm:$0xf]
      %v732 = vld [vmem:[%s729 + $0x8] sm:$0xf]
      %v733 = vld [vmem:[%s729 + $0xc] sm:$0xf]
      %v734 = vld [vmem:[%s729 + $0x10] sm:$0xf]
      %v735 = vld [vmem:[%s729 + $0x14] sm:$0xf]
      %v736 = vld [vmem:[%s729 + $0x18] sm:$0xf]
      %v737 = vld [vmem:[%s729 + $0x1c] sm:$0xf]
      %v738 = vld [vmem:[%s729 + $0x20] sm:$0xf]
      %v739 = vld [vmem:[%s729 + $0x24] sm:$0xf]
      %v740 = vld [vmem:[%s729 + $0x28] sm:$0xf]
      %v741 = vld [vmem:[%s729 + $0x2c] sm:$0xf]
      %v742 = vld [vmem:[%s729 + $0x30] sm:$0xf]
      %v743 = vld [vmem:[%s729 + $0x34] sm:$0xf]
      %v744 = vld [vmem:[%s729 + $0x38] sm:$0xf]
      %v745 = vld [vmem:[%s729 + $0x3c] sm:$0xf]
      %v746 = vunpack.c.l.b16 %v630
      %v747 = vunpack.c.l.b16 %v644
      %v748 = vunpack.c.l.b16 %v658
      %v749 = vunpack.c.l.b16 %v672
      %v750 = vunpack.c.l.b16 %v686
      %v751 = vunpack.c.l.b16 %v700
      %v752 = vunpack.c.l.b16 %v714
      %v753 = vunpack.c.l.b16 %v728
      %v754 = vpack.c.b16 %v747, %v746
      %v755 = vpack.c.b16 %v749, %v748
      %v756 = vpack.c.b16 %v751, %v750
      %v757 = vpack.c.b16 %v753, %v752
      %v778 = vunpack.c.l.b16 %v730
      %v779 = vunpack.c.l.b16 %v731
      %v780 = vunpack.c.l.b16 %v732
      %v781 = vunpack.c.l.b16 %v733
      %v782 = vunpack.c.l.b16 %v734
      %v783 = vunpack.c.l.b16 %v735
      %v784 = vunpack.c.l.b16 %v736
      %v785 = vunpack.c.l.b16 %v737
      %v786 = vunpack.c.l.b16 %v738
      %v787 = vunpack.c.l.b16 %v739
      %v788 = vunpack.c.l.b16 %v740
      %v789 = vunpack.c.l.b16 %v741
      %v790 = vunpack.c.l.b16 %v742
      %v791 = vunpack.c.l.b16 %v743
      %v792 = vunpack.c.l.b16 %v744
      %v793 = vunpack.c.l.b16 %v745
      %v794 = vpack.c.b16 %v779, %v778
      %v795 = vpack.c.b16 %v781, %v780
      %v796 = vpack.c.b16 %v783, %v782
      %v797 = vpack.c.b16 %v785, %v784
      %v798 = vpack.c.b16 %v787, %v786
      %v799 = vpack.c.b16 %v789, %v788
      %v800 = vpack.c.b16 %v791, %v790
      %v801 = vpack.c.b16 %v793, %v792
      %810 = vmatpush.bf16.msra.mxu0 %v801
      %811 = vmatpush.bf16.msra.mxu0 %v800
      %812 = vmatpush.bf16.msra.mxu0 %v799
      %813 = vmatpush.bf16.msra.mxu0 %v798
      %814 = vmatpush.bf16.msra.mxu0 %v797
      %815 = vmatpush.bf16.msra.mxu0 %v796
      %816 = vmatpush.bf16.msra.mxu0 %v795
      %817 = vmatpush.bf16.msra.mxu0 %v794
      %818 = vmatmul.bf16.gmra.mxu0 %v754
      %v819 = vpop.f32.mrf.mxu0
      %v820 = vadd.f32 0.0, %v819
      %v821 = vpop.f32.mrf.mxu0
      %v822 = vadd.f32 0.0, %v821
      %823 = vmatmul.bf16.gmra.mxu0 %v755
      %v824 = vpop.f32.mrf.mxu0
      %v825 = vadd.f32 0.0, %v824
      %v826 = vpop.f32.mrf.mxu0
      %v827 = vadd.f32 0.0, %v826
      %828 = vmatmul.bf16.gmra.mxu0 %v756
      %v829 = vpop.f32.mrf.mxu0
      %v830 = vadd.f32 0.0, %v829
      %v831 = vpop.f32.mrf.mxu0
      %v832 = vadd.f32 0.0, %v831
      %833 = vmatmul.bf16.gmra.mxu0 %v757
      %v834 = vpop.f32.mrf.mxu0
      %v835 = vadd.f32 0.0, %v834
      %v836 = vpop.f32.mrf.mxu0
      %v837 = vadd.f32 0.0, %v836
      %838 = vdwg.mxu0
      %v839 = vadd.f32 %v579, %v820
      %v840 = vadd.f32 %v581, %v822
      %v841 = vadd.f32 %v584, %v825
      %v842 = vadd.f32 %v586, %v827
      %v843 = vadd.f32 %v589, %v830
      %v844 = vadd.f32 %v591, %v832
      %v845 = vadd.f32 %v594, %v835
      %v846 = vadd.f32 %v596, %v837
      %s847 = sadd.s32 %s341, 36
      %s848 = smul.addr %s847, 4
      %s849 = scalar_lea.vmem %s304, %s848
      %v850 = vld [vmem:[%s849] sm:$0xf]
      %v851 = vld [vmem:[%s849 + $0x8] sm:$0xf]
      %v852 = vld [vmem:[%s849 + $0x10] sm:$0xf]
      %v853 = vld [vmem:[%s849 + $0x18] sm:$0xf]
      %v854 = vld [vmem:[%s849 + $0x20] sm:$0xf]
      %v855 = vld [vmem:[%s849 + $0x28] sm:$0xf]
      %v856 = vld [vmem:[%s849 + $0x30] sm:$0xf]
      %v857 = vld [vmem:[%s849 + $0x38] sm:$0xf]
      %s858 = scalar_lea.vmem %s1, 192
      %v859 = vld [vmem:[%s858] sm:$0xf]
      %v860 = vld [vmem:[%s858 + $0x4] sm:$0xf]
      %v861 = vld [vmem:[%s858 + $0x8] sm:$0xf]
      %v862 = vld [vmem:[%s858 + $0xc] sm:$0xf]
      %v863 = vld [vmem:[%s858 + $0x10] sm:$0xf]
      %v864 = vld [vmem:[%s858 + $0x14] sm:$0xf]
      %v865 = vld [vmem:[%s858 + $0x18] sm:$0xf]
      %v866 = vld [vmem:[%s858 + $0x1c] sm:$0xf]
      %v867 = vld [vmem:[%s858 + $0x20] sm:$0xf]
      %v868 = vld [vmem:[%s858 + $0x24] sm:$0xf]
      %v869 = vld [vmem:[%s858 + $0x28] sm:$0xf]
      %v870 = vld [vmem:[%s858 + $0x2c] sm:$0xf]
      %v871 = vld [vmem:[%s858 + $0x30] sm:$0xf]
      %v872 = vld [vmem:[%s858 + $0x34] sm:$0xf]
      %v873 = vld [vmem:[%s858 + $0x38] sm:$0xf]
      %v874 = vld [vmem:[%s858 + $0x3c] sm:$0xf]
      %v883 = vunpack.c.l.b16 %v850
      %v884 = vunpack.c.l.b16 %v851
      %v885 = vunpack.c.l.b16 %v852
      %v886 = vunpack.c.l.b16 %v853
      %v887 = vunpack.c.l.b16 %v854
      %v888 = vunpack.c.l.b16 %v855
      %v889 = vunpack.c.l.b16 %v856
      %v890 = vunpack.c.l.b16 %v857
      %v891 = vpack.c.b16 %v884, %v883
      %v892 = vpack.c.b16 %v886, %v885
      %v893 = vpack.c.b16 %v888, %v887
      %v894 = vpack.c.b16 %v890, %v889
      %v915 = vunpack.c.l.b16 %v859
      %v916 = vunpack.c.l.b16 %v860
      %v917 = vunpack.c.l.b16 %v861
      %v918 = vunpack.c.l.b16 %v862
      %v919 = vunpack.c.l.b16 %v863
      %v920 = vunpack.c.l.b16 %v864
      %v921 = vunpack.c.l.b16 %v865
      %v922 = vunpack.c.l.b16 %v866
      %v923 = vunpack.c.l.b16 %v867
      %v924 = vunpack.c.l.b16 %v868
      %v925 = vunpack.c.l.b16 %v869
      %v926 = vunpack.c.l.b16 %v870
      %v927 = vunpack.c.l.b16 %v871
      %v928 = vunpack.c.l.b16 %v872
      %v929 = vunpack.c.l.b16 %v873
      %v930 = vunpack.c.l.b16 %v874
      %v931 = vpack.c.b16 %v916, %v915
      %v932 = vpack.c.b16 %v918, %v917
      %v933 = vpack.c.b16 %v920, %v919
      %v934 = vpack.c.b16 %v922, %v921
      %v935 = vpack.c.b16 %v924, %v923
      %v936 = vpack.c.b16 %v926, %v925
      %v937 = vpack.c.b16 %v928, %v927
      %v938 = vpack.c.b16 %v930, %v929
      %947 = vmatpush.bf16.msra.mxu0 %v938
      %948 = vmatpush.bf16.msra.mxu0 %v937
      %949 = vmatpush.bf16.msra.mxu0 %v936
      %950 = vmatpush.bf16.msra.mxu0 %v935
      %951 = vmatpush.bf16.msra.mxu0 %v934
      %952 = vmatpush.bf16.msra.mxu0 %v933
      %953 = vmatpush.bf16.msra.mxu0 %v932
      %954 = vmatpush.bf16.msra.mxu0 %v931
      %955 = vmatmul.bf16.gmra.mxu0 %v891
      %v956 = vpop.f32.mrf.mxu0
      %v957 = vadd.f32 0.0, %v956
      %v958 = vpop.f32.mrf.mxu0
      %v959 = vadd.f32 0.0, %v958
      %960 = vmatmul.bf16.gmra.mxu0 %v892
      %v961 = vpop.f32.mrf.mxu0
      %v962 = vadd.f32 0.0, %v961
      %v963 = vpop.f32.mrf.mxu0
      %v964 = vadd.f32 0.0, %v963
      %965 = vmatmul.bf16.gmra.mxu0 %v893
      %v966 = vpop.f32.mrf.mxu0
      %v967 = vadd.f32 0.0, %v966
      %v968 = vpop.f32.mrf.mxu0
      %v969 = vadd.f32 0.0, %v968
      %970 = vmatmul.bf16.gmra.mxu0 %v894
      %v971 = vpop.f32.mrf.mxu0
      %v972 = vadd.f32 0.0, %v971
      %v973 = vpop.f32.mrf.mxu0
      %v974 = vadd.f32 0.0, %v973
      %975 = vdwg.mxu0
      %v976 = vadd.f32 %v839, %v957
      %v977 = vadd.f32 %v840, %v959
      %v978 = vadd.f32 %v841, %v962
      %v979 = vadd.f32 %v842, %v964
      %v980 = vadd.f32 %v843, %v967
      %v981 = vadd.f32 %v844, %v969
      %v982 = vadd.f32 %v845, %v972
      %v983 = vadd.f32 %v846, %v974
      %s984 = sadd.s32 %s341, 54
      %s985 = smul.addr %s984, 4
      %s986 = scalar_lea.vmem %s304, %s985
      %v987 = vld [vmem:[%s986] sm:$0xf]
      %v988 = vld [vmem:[%s986 + $0x8] sm:$0xf]
      %v989 = vld [vmem:[%s986 + $0x10] sm:$0xf]
      %v990 = vld [vmem:[%s986 + $0x18] sm:$0xf]
      %v991 = vld [vmem:[%s986 + $0x20] sm:$0xf]
      %v992 = vld [vmem:[%s986 + $0x28] sm:$0xf]
      %v993 = vld [vmem:[%s986 + $0x30] sm:$0xf]
      %v994 = vld [vmem:[%s986 + $0x38] sm:$0xf]
      %s995 = scalar_lea.vmem %s1, 256
      %v996 = vld [vmem:[%s995] sm:$0xf]
      %v997 = vld [vmem:[%s995 + $0x4] sm:$0xf]
      %v998 = vld [vmem:[%s995 + $0x8] sm:$0xf]
      %v999 = vld [vmem:[%s995 + $0xc] sm:$0xf]
      %v1000 = vld [vmem:[%s995 + $0x10] sm:$0xf]
      %v1001 = vld [vmem:[%s995 + $0x14] sm:$0xf]
      %v1002 = vld [vmem:[%s995 + $0x18] sm:$0xf]
      %v1003 = vld [vmem:[%s995 + $0x1c] sm:$0xf]
      %v1004 = vld [vmem:[%s995 + $0x20] sm:$0xf]
      %v1005 = vld [vmem:[%s995 + $0x24] sm:$0xf]
      %v1006 = vld [vmem:[%s995 + $0x28] sm:$0xf]
      %v1007 = vld [vmem:[%s995 + $0x2c] sm:$0xf]
      %v1008 = vld [vmem:[%s995 + $0x30] sm:$0xf]
      %v1009 = vld [vmem:[%s995 + $0x34] sm:$0xf]
      %v1010 = vld [vmem:[%s995 + $0x38] sm:$0xf]
      %v1011 = vld [vmem:[%s995 + $0x3c] sm:$0xf]
      %v1020 = vunpack.c.l.b16 %v987
      %v1021 = vunpack.c.l.b16 %v988
      %v1022 = vunpack.c.l.b16 %v989
      %v1023 = vunpack.c.l.b16 %v990
      %v1024 = vunpack.c.l.b16 %v991
      %v1025 = vunpack.c.l.b16 %v992
      %v1026 = vunpack.c.l.b16 %v993
      %v1027 = vunpack.c.l.b16 %v994
      %v1028 = vpack.c.b16 %v1021, %v1020
      %v1029 = vpack.c.b16 %v1023, %v1022
      %v1030 = vpack.c.b16 %v1025, %v1024
      %v1031 = vpack.c.b16 %v1027, %v1026
      %v1052 = vunpack.c.l.b16 %v996
      %v1053 = vunpack.c.l.b16 %v997
      %v1054 = vunpack.c.l.b16 %v998
      %v1055 = vunpack.c.l.b16 %v999
      %v1056 = vunpack.c.l.b16 %v1000
      %v1057 = vunpack.c.l.b16 %v1001
      %v1058 = vunpack.c.l.b16 %v1002
      %v1059 = vunpack.c.l.b16 %v1003
      %v1060 = vunpack.c.l.b16 %v1004
      %v1061 = vunpack.c.l.b16 %v1005
      %v1062 = vunpack.c.l.b16 %v1006
      %v1063 = vunpack.c.l.b16 %v1007
      %v1064 = vunpack.c.l.b16 %v1008
      %v1065 = vunpack.c.l.b16 %v1009
      %v1066 = vunpack.c.l.b16 %v1010
      %v1067 = vunpack.c.l.b16 %v1011
      %v1068 = vpack.c.b16 %v1053, %v1052
      %v1069 = vpack.c.b16 %v1055, %v1054
      %v1070 = vpack.c.b16 %v1057, %v1056
      %v1071 = vpack.c.b16 %v1059, %v1058
      %v1072 = vpack.c.b16 %v1061, %v1060
      %v1073 = vpack.c.b16 %v1063, %v1062
      %v1074 = vpack.c.b16 %v1065, %v1064
      %v1075 = vpack.c.b16 %v1067, %v1066
      %1084 = vmatpush.bf16.msra.mxu0 %v1075
      %1085 = vmatpush.bf16.msra.mxu0 %v1074
      %1086 = vmatpush.bf16.msra.mxu0 %v1073
      %1087 = vmatpush.bf16.msra.mxu0 %v1072
      %1088 = vmatpush.bf16.msra.mxu0 %v1071
      %1089 = vmatpush.bf16.msra.mxu0 %v1070
      %1090 = vmatpush.bf16.msra.mxu0 %v1069
      %1091 = vmatpush.bf16.msra.mxu0 %v1068
      %1092 = vmatmul.bf16.gmra.mxu0 %v1028
      %v1093 = vpop.f32.mrf.mxu0
      %v1094 = vadd.f32 0.0, %v1093
      %v1095 = vpop.f32.mrf.mxu0
      %v1096 = vadd.f32 0.0, %v1095
      %1097 = vmatmul.bf16.gmra.mxu0 %v1029
      %v1098 = vpop.f32.mrf.mxu0
      %v1099 = vadd.f32 0.0, %v1098
      %v1100 = vpop.f32.mrf.mxu0
      %v1101 = vadd.f32 0.0, %v1100
      %1102 = vmatmul.bf16.gmra.mxu0 %v1030
      %v1103 = vpop.f32.mrf.mxu0
      %v1104 = vadd.f32 0.0, %v1103
      %v1105 = vpop.f32.mrf.mxu0
      %v1106 = vadd.f32 0.0, %v1105
      %1107 = vmatmul.bf16.gmra.mxu0 %v1031
      %v1108 = vpop.f32.mrf.mxu0
      %v1109 = vadd.f32 0.0, %v1108
      %v1110 = vpop.f32.mrf.mxu0
      %v1111 = vadd.f32 0.0, %v1110
      %1112 = vdwg.mxu0
      %v1113 = vadd.f32 %v976, %v1094
      %v1114 = vadd.f32 %v977, %v1096
      %v1115 = vadd.f32 %v978, %v1099
      %v1116 = vadd.f32 %v979, %v1101
      %v1117 = vadd.f32 %v980, %v1104
      %v1118 = vadd.f32 %v981, %v1106
      %v1119 = vadd.f32 %v982, %v1109
      %v1120 = vadd.f32 %v983, %v1111
      %v1121 = vld [vmem:[%s2] sm:$0xf]
      %v1122 = vld [vmem:[%s2 + $0x4] sm:$0xf]
      %v1123 = vld [vmem:[%s2 + $0x8] sm:$0xf]
      %v1124 = vld [vmem:[%s2 + $0xc] sm:$0xf]
      %v1125 = vld [vmem:[%s2 + $0x10] sm:$0xf]
      %v1126 = vld [vmem:[%s2 + $0x14] sm:$0xf]
      %v1127 = vld [vmem:[%s2 + $0x18] sm:$0xf]
      %v1128 = vld [vmem:[%s2 + $0x1c] sm:$0xf]
      %v1129 = vld [vmem:[%s2 + $0x20] sm:$0xf]
      %v1130 = vld [vmem:[%s2 + $0x24] sm:$0xf]
      %v1131 = vld [vmem:[%s2 + $0x28] sm:$0xf]
      %v1132 = vld [vmem:[%s2 + $0x2c] sm:$0xf]
      %v1133 = vld [vmem:[%s2 + $0x30] sm:$0xf]
      %v1134 = vld [vmem:[%s2 + $0x34] sm:$0xf]
      %v1135 = vld [vmem:[%s2 + $0x38] sm:$0xf]
      %v1136 = vld [vmem:[%s2 + $0x3c] sm:$0xf]
      %v1153 = vunpack.c.l.b16 %v1121
      %v1154 = vunpack.c.l.b16 %v1122
      %v1155 = vunpack.c.l.b16 %v1123
      %v1156 = vunpack.c.l.b16 %v1124
      %v1157 = vunpack.c.l.b16 %v1125
      %v1158 = vunpack.c.l.b16 %v1126
      %v1159 = vunpack.c.l.b16 %v1127
      %v1160 = vunpack.c.l.b16 %v1128
      %v1161 = vunpack.c.l.b16 %v1129
      %v1162 = vunpack.c.l.b16 %v1130
      %v1163 = vunpack.c.l.b16 %v1131
      %v1164 = vunpack.c.l.b16 %v1132
      %v1165 = vunpack.c.l.b16 %v1133
      %v1166 = vunpack.c.l.b16 %v1134
      %v1167 = vunpack.c.l.b16 %v1135
      %v1168 = vunpack.c.l.b16 %v1136
      %v1169 = vpack.c.b16 %v1154, %v1153
      %v1170 = vpack.c.b16 %v1156, %v1155
      %v1171 = vpack.c.b16 %v1158, %v1157
      %v1172 = vpack.c.b16 %v1160, %v1159
      %v1173 = vpack.c.b16 %v1162, %v1161
      %v1174 = vpack.c.b16 %v1164, %v1163
      %v1175 = vpack.c.b16 %v1166, %v1165
      %v1176 = vpack.c.b16 %v1168, %v1167
      %1185 = vmatpush.bf16.msra.mxu0 %v1176
      %1186 = vmatpush.bf16.msra.mxu0 %v1175
      %1187 = vmatpush.bf16.msra.mxu0 %v1174
      %1188 = vmatpush.bf16.msra.mxu0 %v1173
      %1189 = vmatpush.bf16.msra.mxu0 %v1172
      %1190 = vmatpush.bf16.msra.mxu0 %v1171
      %1191 = vmatpush.bf16.msra.mxu0 %v1170
      %1192 = vmatpush.bf16.msra.mxu0 %v1169
      %1193 = vmatmul.bf16.gmra.mxu0 %v1028
      %v1194 = vpop.f32.mrf.mxu0
      %v1195 = vadd.f32 0.0, %v1194
      %v1196 = vpop.f32.mrf.mxu0
      %v1197 = vadd.f32 0.0, %v1196
      %1198 = vmatmul.bf16.gmra.mxu0 %v1029
      %v1199 = vpop.f32.mrf.mxu0
      %v1200 = vadd.f32 0.0, %v1199
      %v1201 = vpop.f32.mrf.mxu0
      %v1202 = vadd.f32 0.0, %v1201
      %1203 = vmatmul.bf16.gmra.mxu0 %v1030
      %v1204 = vpop.f32.mrf.mxu0
      %v1205 = vadd.f32 0.0, %v1204
      %v1206 = vpop.f32.mrf.mxu0
      %v1207 = vadd.f32 0.0, %v1206
      %1208 = vmatmul.bf16.gmra.mxu0 %v1031
      %v1209 = vpop.f32.mrf.mxu0
      %v1210 = vadd.f32 0.0, %v1209
      %v1211 = vpop.f32.mrf.mxu0
      %v1212 = vadd.f32 0.0, %v1211
      %1213 = vdwg.mxu0
      %v1214 = vld [vmem:[%s849] sm:$0xf]
      %v1215 = vld [vmem:[%s849 + $0x4] sm:$0x1]
      %v1216 = vld [vmem:[%s849 + $0x8] sm:$0xf]
      %v1217 = vld [vmem:[%s849 + $0xc] sm:$0x1]
      %v1218 = vld [vmem:[%s849 + $0x10] sm:$0xf]
      %v1219 = vld [vmem:[%s849 + $0x14] sm:$0x1]
      %v1220 = vld [vmem:[%s849 + $0x18] sm:$0xf]
      %v1221 = vld [vmem:[%s849 + $0x1c] sm:$0x1]
      %v1222 = vld [vmem:[%s849 + $0x20] sm:$0xf]
      %v1223 = vld [vmem:[%s849 + $0x24] sm:$0x1]
      %v1224 = vld [vmem:[%s849 + $0x28] sm:$0xf]
      %v1225 = vld [vmem:[%s849 + $0x2c] sm:$0x1]
      %v1226 = vld [vmem:[%s849 + $0x30] sm:$0xf]
      %v1227 = vld [vmem:[%s849 + $0x34] sm:$0x1]
      %v1228 = vld [vmem:[%s849 + $0x38] sm:$0xf]
      %v1229 = vld [vmem:[%s849 + $0x3c] sm:$0x1]
      %v1231 = vshrl.u32 %v1214, 16
      %v1233 = vrot.slane %v1231, 4
      %v1234 = vshll.u32 %v1214, 16
      %v1236 = vrot.slane %v1234, 5
      %v1237 = vor.u32 %v1233, %v1236
      %v1238 = vrot.slane %v1237, 4
      %v1240 = vshll.u32 %v1215, 16
      %v1242 = vrot.slane %v1240, 5
      %v1243 = vsel %vm616, %v1238, %v1242
      %v1245 = vshrl.u32 %v1216, 16
      %v1247 = vrot.slane %v1245, 4
      %v1248 = vshll.u32 %v1216, 16
      %v1250 = vrot.slane %v1248, 5
      %v1251 = vor.u32 %v1247, %v1250
      %v1252 = vrot.slane %v1251, 4
      %v1254 = vshll.u32 %v1217, 16
      %v1256 = vrot.slane %v1254, 5
      %v1257 = vsel %vm616, %v1252, %v1256
      %v1259 = vshrl.u32 %v1218, 16
      %v1261 = vrot.slane %v1259, 4
      %v1262 = vshll.u32 %v1218, 16
      %v1264 = vrot.slane %v1262, 5
      %v1265 = vor.u32 %v1261, %v1264
      %v1266 = vrot.slane %v1265, 4
      %v1268 = vshll.u32 %v1219, 16
      %v1270 = vrot.slane %v1268, 5
      %v1271 = vsel %vm616, %v1266, %v1270
      %v1273 = vshrl.u32 %v1220, 16
      %v1275 = vrot.slane %v1273, 4
      %v1276 = vshll.u32 %v1220, 16
      %v1278 = vrot.slane %v1276, 5
      %v1279 = vor.u32 %v1275, %v1278
      %v1280 = vrot.slane %v1279, 4
      %v1282 = vshll.u32 %v1221, 16
      %v1284 = vrot.slane %v1282, 5
      %v1285 = vsel %vm616, %v1280, %v1284
      %v1287 = vshrl.u32 %v1222, 16
      %v1289 = vrot.slane %v1287, 4
      %v1290 = vshll.u32 %v1222, 16
      %v1292 = vrot.slane %v1290, 5
      %v1293 = vor.u32 %v1289, %v1292
      %v1294 = vrot.slane %v1293, 4
      %v1296 = vshll.u32 %v1223, 16
      %v1298 = vrot.slane %v1296, 5
      %v1299 = vsel %vm616, %v1294, %v1298
      %v1301 = vshrl.u32 %v1224, 16
      %v1303 = vrot.slane %v1301, 4
      %v1304 = vshll.u32 %v1224, 16
      %v1306 = vrot.slane %v1304, 5
      %v1307 = vor.u32 %v1303, %v1306
      %v1308 = vrot.slane %v1307, 4
      %v1310 = vshll.u32 %v1225, 16
      %v1312 = vrot.slane %v1310, 5
      %v1313 = vsel %vm616, %v1308, %v1312
      %v1315 = vshrl.u32 %v1226, 16
      %v1317 = vrot.slane %v1315, 4
      %v1318 = vshll.u32 %v1226, 16
      %v1320 = vrot.slane %v1318, 5
      %v1321 = vor.u32 %v1317, %v1320
      %v1322 = vrot.slane %v1321, 4
      %v1324 = vshll.u32 %v1227, 16
      %v1326 = vrot.slane %v1324, 5
      %v1327 = vsel %vm616, %v1322, %v1326
      %v1329 = vshrl.u32 %v1228, 16
      %v1331 = vrot.slane %v1329, 4
      %v1332 = vshll.u32 %v1228, 16
      %v1334 = vrot.slane %v1332, 5
      %v1335 = vor.u32 %v1331, %v1334
      %v1336 = vrot.slane %v1335, 4
      %v1338 = vshll.u32 %v1229, 16
      %v1340 = vrot.slane %v1338, 5
      %v1341 = vsel %vm616, %v1336, %v1340
      %s1342 = scalar_lea.vmem %s1, 320
      %v1343 = vld [vmem:[%s1342] sm:$0xf]
      %v1344 = vld [vmem:[%s1342 + $0x4] sm:$0xf]
      %v1345 = vld [vmem:[%s1342 + $0x8] sm:$0xf]
      %v1346 = vld [vmem:[%s1342 + $0xc] sm:$0xf]
      %v1347 = vld [vmem:[%s1342 + $0x10] sm:$0xf]
      %v1348 = vld [vmem:[%s1342 + $0x14] sm:$0xf]
      %v1349 = vld [vmem:[%s1342 + $0x18] sm:$0xf]
      %v1350 = vld [vmem:[%s1342 + $0x1c] sm:$0xf]
      %v1351 = vld [vmem:[%s1342 + $0x20] sm:$0xf]
      %v1352 = vld [vmem:[%s1342 + $0x24] sm:$0xf]
      %v1353 = vld [vmem:[%s1342 + $0x28] sm:$0xf]
      %v1354 = vld [vmem:[%s1342 + $0x2c] sm:$0xf]
      %v1355 = vld [vmem:[%s1342 + $0x30] sm:$0xf]
      %v1356 = vld [vmem:[%s1342 + $0x34] sm:$0xf]
      %v1357 = vld [vmem:[%s1342 + $0x38] sm:$0xf]
      %v1358 = vld [vmem:[%s1342 + $0x3c] sm:$0xf]
      %v1359 = vunpack.c.l.b16 %v1243
      %v1360 = vunpack.c.l.b16 %v1257
      %v1361 = vunpack.c.l.b16 %v1271
      %v1362 = vunpack.c.l.b16 %v1285
      %v1363 = vunpack.c.l.b16 %v1299
      %v1364 = vunpack.c.l.b16 %v1313
      %v1365 = vunpack.c.l.b16 %v1327
      %v1366 = vunpack.c.l.b16 %v1341
      %v1367 = vpack.c.b16 %v1360, %v1359
      %v1368 = vpack.c.b16 %v1362, %v1361
      %v1369 = vpack.c.b16 %v1364, %v1363
      %v1370 = vpack.c.b16 %v1366, %v1365
      %v1391 = vunpack.c.l.b16 %v1343
      %v1392 = vunpack.c.l.b16 %v1344
      %v1393 = vunpack.c.l.b16 %v1345
      %v1394 = vunpack.c.l.b16 %v1346
      %v1395 = vunpack.c.l.b16 %v1347
      %v1396 = vunpack.c.l.b16 %v1348
      %v1397 = vunpack.c.l.b16 %v1349
      %v1398 = vunpack.c.l.b16 %v1350
      %v1399 = vunpack.c.l.b16 %v1351
      %v1400 = vunpack.c.l.b16 %v1352
      %v1401 = vunpack.c.l.b16 %v1353
      %v1402 = vunpack.c.l.b16 %v1354
      %v1403 = vunpack.c.l.b16 %v1355
      %v1404 = vunpack.c.l.b16 %v1356
      %v1405 = vunpack.c.l.b16 %v1357
      %v1406 = vunpack.c.l.b16 %v1358
      %v1407 = vpack.c.b16 %v1392, %v1391
      %v1408 = vpack.c.b16 %v1394, %v1393
      %v1409 = vpack.c.b16 %v1396, %v1395
      %v1410 = vpack.c.b16 %v1398, %v1397
      %v1411 = vpack.c.b16 %v1400, %v1399
      %v1412 = vpack.c.b16 %v1402, %v1401
      %v1413 = vpack.c.b16 %v1404, %v1403
      %v1414 = vpack.c.b16 %v1406, %v1405
      %1423 = vmatpush.bf16.msra.mxu0 %v1414
      %1424 = vmatpush.bf16.msra.mxu0 %v1413
      %1425 = vmatpush.bf16.msra.mxu0 %v1412
      %1426 = vmatpush.bf16.msra.mxu0 %v1411
      %1427 = vmatpush.bf16.msra.mxu0 %v1410
      %1428 = vmatpush.bf16.msra.mxu0 %v1409
      %1429 = vmatpush.bf16.msra.mxu0 %v1408
      %1430 = vmatpush.bf16.msra.mxu0 %v1407
      %1431 = vmatmul.bf16.gmra.mxu0 %v1367
      %v1432 = vpop.f32.mrf.mxu0
      %v1433 = vadd.f32 0.0, %v1432
      %v1434 = vpop.f32.mrf.mxu0
      %v1435 = vadd.f32 0.0, %v1434
      %1436 = vmatmul.bf16.gmra.mxu0 %v1368
      %v1437 = vpop.f32.mrf.mxu0
      %v1438 = vadd.f32 0.0, %v1437
      %v1439 = vpop.f32.mrf.mxu0
      %v1440 = vadd.f32 0.0, %v1439
      %1441 = vmatmul.bf16.gmra.mxu0 %v1369
      %v1442 = vpop.f32.mrf.mxu0
      %v1443 = vadd.f32 0.0, %v1442
      %v1444 = vpop.f32.mrf.mxu0
      %v1445 = vadd.f32 0.0, %v1444
      %1446 = vmatmul.bf16.gmra.mxu0 %v1370
      %v1447 = vpop.f32.mrf.mxu0
      %v1448 = vadd.f32 0.0, %v1447
      %v1449 = vpop.f32.mrf.mxu0
      %v1450 = vadd.f32 0.0, %v1449
      %1451 = vdwg.mxu0
      %v1452 = vadd.f32 %v1113, %v1433
      %v1453 = vadd.f32 %v1114, %v1435
      %v1454 = vadd.f32 %v1115, %v1438
      %v1455 = vadd.f32 %v1116, %v1440
      %v1456 = vadd.f32 %v1117, %v1443
      %v1457 = vadd.f32 %v1118, %v1445
      %v1458 = vadd.f32 %v1119, %v1448
      %v1459 = vadd.f32 %v1120, %v1450
      %s1460 = sadd.s32 %s340, 1
      %s1461 = smul.u32 %s1460, 2
      %s1462 = smul.addr %s1461, 4
      %s1463 = scalar_lea.vmem %s304, %s1462
      %v1464 = vld [vmem:[%s1463] sm:$0xf]
      %v1465 = vld [vmem:[%s1463 + $0x8] sm:$0xf]
      %v1466 = vld [vmem:[%s1463 + $0x10] sm:$0xf]
      %v1467 = vld [vmem:[%s1463 + $0x18] sm:$0xf]
      %v1468 = vld [vmem:[%s1463 + $0x20] sm:$0xf]
      %v1469 = vld [vmem:[%s1463 + $0x28] sm:$0xf]
      %v1470 = vld [vmem:[%s1463 + $0x30] sm:$0xf]
      %v1471 = vld [vmem:[%s1463 + $0x38] sm:$0xf]
      %s1472 = scalar_lea.vmem %s1, 384
      %v1473 = vld [vmem:[%s1472] sm:$0xf]
      %v1474 = vld [vmem:[%s1472 + $0x4] sm:$0xf]
      %v1475 = vld [vmem:[%s1472 + $0x8] sm:$0xf]
      %v1476 = vld [vmem:[%s1472 + $0xc] sm:$0xf]
      %v1477 = vld [vmem:[%s1472 + $0x10] sm:$0xf]
      %v1478 = vld [vmem:[%s1472 + $0x14] sm:$0xf]
      %v1479 = vld [vmem:[%s1472 + $0x18] sm:$0xf]
      %v1480 = vld [vmem:[%s1472 + $0x1c] sm:$0xf]
      %v1481 = vld [vmem:[%s1472 + $0x20] sm:$0xf]
      %v1482 = vld [vmem:[%s1472 + $0x24] sm:$0xf]
      %v1483 = vld [vmem:[%s1472 + $0x28] sm:$0xf]
      %v1484 = vld [vmem:[%s1472 + $0x2c] sm:$0xf]
      %v1485 = vld [vmem:[%s1472 + $0x30] sm:$0xf]
      %v1486 = vld [vmem:[%s1472 + $0x34] sm:$0xf]
      %v1487 = vld [vmem:[%s1472 + $0x38] sm:$0xf]
      %v1488 = vld [vmem:[%s1472 + $0x3c] sm:$0xf]
      %v1497 = vunpack.c.l.b16 %v1464
      %v1498 = vunpack.c.l.b16 %v1465
      %v1499 = vunpack.c.l.b16 %v1466
      %v1500 = vunpack.c.l.b16 %v1467
      %v1501 = vunpack.c.l.b16 %v1468
      %v1502 = vunpack.c.l.b16 %v1469
      %v1503 = vunpack.c.l.b16 %v1470
      %v1504 = vunpack.c.l.b16 %v1471
      %v1505 = vpack.c.b16 %v1498, %v1497
      %v1506 = vpack.c.b16 %v1500, %v1499
      %v1507 = vpack.c.b16 %v1502, %v1501
      %v1508 = vpack.c.b16 %v1504, %v1503
      %v1529 = vunpack.c.l.b16 %v1473
      %v1530 = vunpack.c.l.b16 %v1474
      %v1531 = vunpack.c.l.b16 %v1475
      %v1532 = vunpack.c.l.b16 %v1476
      %v1533 = vunpack.c.l.b16 %v1477
      %v1534 = vunpack.c.l.b16 %v1478
      %v1535 = vunpack.c.l.b16 %v1479
      %v1536 = vunpack.c.l.b16 %v1480
      %v1537 = vunpack.c.l.b16 %v1481
      %v1538 = vunpack.c.l.b16 %v1482
      %v1539 = vunpack.c.l.b16 %v1483
      %v1540 = vunpack.c.l.b16 %v1484
      %v1541 = vunpack.c.l.b16 %v1485
      %v1542 = vunpack.c.l.b16 %v1486
      %v1543 = vunpack.c.l.b16 %v1487
      %v1544 = vunpack.c.l.b16 %v1488
      %v1545 = vpack.c.b16 %v1530, %v1529
      %v1546 = vpack.c.b16 %v1532, %v1531
      %v1547 = vpack.c.b16 %v1534, %v1533
      %v1548 = vpack.c.b16 %v1536, %v1535
      %v1549 = vpack.c.b16 %v1538, %v1537
      %v1550 = vpack.c.b16 %v1540, %v1539
      %v1551 = vpack.c.b16 %v1542, %v1541
      %v1552 = vpack.c.b16 %v1544, %v1543
      %1561 = vmatpush.bf16.msra.mxu0 %v1552
      %1562 = vmatpush.bf16.msra.mxu0 %v1551
      %1563 = vmatpush.bf16.msra.mxu0 %v1550
      %1564 = vmatpush.bf16.msra.mxu0 %v1549
      %1565 = vmatpush.bf16.msra.mxu0 %v1548
      %1566 = vmatpush.bf16.msra.mxu0 %v1547
      %1567 = vmatpush.bf16.msra.mxu0 %v1546
      %1568 = vmatpush.bf16.msra.mxu0 %v1545
      %1569 = vmatmul.bf16.gmra.mxu0 %v1505
      %v1570 = vpop.f32.mrf.mxu0
      %v1571 = vadd.f32 0.0, %v1570
      %v1572 = vpop.f32.mrf.mxu0
      %v1573 = vadd.f32 0.0, %v1572
      %1574 = vmatmul.bf16.gmra.mxu0 %v1506
      %v1575 = vpop.f32.mrf.mxu0
      %v1576 = vadd.f32 0.0, %v1575
      %v1577 = vpop.f32.mrf.mxu0
      %v1578 = vadd.f32 0.0, %v1577
      %1579 = vmatmul.bf16.gmra.mxu0 %v1507
      %v1580 = vpop.f32.mrf.mxu0
      %v1581 = vadd.f32 0.0, %v1580
      %v1582 = vpop.f32.mrf.mxu0
      %v1583 = vadd.f32 0.0, %v1582
      %1584 = vmatmul.bf16.gmra.mxu0 %v1508
      %v1585 = vpop.f32.mrf.mxu0
      %v1586 = vadd.f32 0.0, %v1585
      %v1587 = vpop.f32.mrf.mxu0
      %v1588 = vadd.f32 0.0, %v1587
      %1589 = vdwg.mxu0
      %v1590 = vadd.f32 %v1452, %v1571
      %v1591 = vadd.f32 %v1453, %v1573
      %v1592 = vadd.f32 %v1454, %v1576
      %v1593 = vadd.f32 %v1455, %v1578
      %v1594 = vadd.f32 %v1456, %v1581
      %v1595 = vadd.f32 %v1457, %v1583
      %v1596 = vadd.f32 %v1458, %v1586
      %v1597 = vadd.f32 %v1459, %v1588
      %s1598 = sadd.s32 %s1461, 18
      %s1599 = smul.addr %s1598, 4
      %s1600 = scalar_lea.vmem %s304, %s1599
      %v1601 = vld [vmem:[%s1600] sm:$0xf]
      %v1602 = vld [vmem:[%s1600 + $0x8] sm:$0xf]
      %v1603 = vld [vmem:[%s1600 + $0x10] sm:$0xf]
      %v1604 = vld [vmem:[%s1600 + $0x18] sm:$0xf]
      %v1605 = vld [vmem:[%s1600 + $0x20] sm:$0xf]
      %v1606 = vld [vmem:[%s1600 + $0x28] sm:$0xf]
      %v1607 = vld [vmem:[%s1600 + $0x30] sm:$0xf]
      %v1608 = vld [vmem:[%s1600 + $0x38] sm:$0xf]
      %s1609 = scalar_lea.vmem %s1, 448
      %v1610 = vld [vmem:[%s1609] sm:$0xf]
      %v1611 = vld [vmem:[%s1609 + $0x4] sm:$0xf]
      %v1612 = vld [vmem:[%s1609 + $0x8] sm:$0xf]
      %v1613 = vld [vmem:[%s1609 + $0xc] sm:$0xf]
      %v1614 = vld [vmem:[%s1609 + $0x10] sm:$0xf]
      %v1615 = vld [vmem:[%s1609 + $0x14] sm:$0xf]
      %v1616 = vld [vmem:[%s1609 + $0x18] sm:$0xf]
      %v1617 = vld [vmem:[%s1609 + $0x1c] sm:$0xf]
      %v1618 = vld [vmem:[%s1609 + $0x20] sm:$0xf]
      %v1619 = vld [vmem:[%s1609 + $0x24] sm:$0xf]
      %v1620 = vld [vmem:[%s1609 + $0x28] sm:$0xf]
      %v1621 = vld [vmem:[%s1609 + $0x2c] sm:$0xf]
      %v1622 = vld [vmem:[%s1609 + $0x30] sm:$0xf]
      %v1623 = vld [vmem:[%s1609 + $0x34] sm:$0xf]
      %v1624 = vld [vmem:[%s1609 + $0x38] sm:$0xf]
      %v1625 = vld [vmem:[%s1609 + $0x3c] sm:$0xf]
      %v1634 = vunpack.c.l.b16 %v1601
      %v1635 = vunpack.c.l.b16 %v1602
      %v1636 = vunpack.c.l.b16 %v1603
      %v1637 = vunpack.c.l.b16 %v1604
      %v1638 = vunpack.c.l.b16 %v1605
      %v1639 = vunpack.c.l.b16 %v1606
      %v1640 = vunpack.c.l.b16 %v1607
      %v1641 = vunpack.c.l.b16 %v1608
      %v1642 = vpack.c.b16 %v1635, %v1634
      %v1643 = vpack.c.b16 %v1637, %v1636
      %v1644 = vpack.c.b16 %v1639, %v1638
      %v1645 = vpack.c.b16 %v1641, %v1640
      %v1666 = vunpack.c.l.b16 %v1610
      %v1667 = vunpack.c.l.b16 %v1611
      %v1668 = vunpack.c.l.b16 %v1612
      %v1669 = vunpack.c.l.b16 %v1613
      %v1670 = vunpack.c.l.b16 %v1614
      %v1671 = vunpack.c.l.b16 %v1615
      %v1672 = vunpack.c.l.b16 %v1616
      %v1673 = vunpack.c.l.b16 %v1617
      %v1674 = vunpack.c.l.b16 %v1618
      %v1675 = vunpack.c.l.b16 %v1619
      %v1676 = vunpack.c.l.b16 %v1620
      %v1677 = vunpack.c.l.b16 %v1621
      %v1678 = vunpack.c.l.b16 %v1622
      %v1679 = vunpack.c.l.b16 %v1623
      %v1680 = vunpack.c.l.b16 %v1624
      %v1681 = vunpack.c.l.b16 %v1625
      %v1682 = vpack.c.b16 %v1667, %v1666
      %v1683 = vpack.c.b16 %v1669, %v1668
      %v1684 = vpack.c.b16 %v1671, %v1670
      %v1685 = vpack.c.b16 %v1673, %v1672
      %v1686 = vpack.c.b16 %v1675, %v1674
      %v1687 = vpack.c.b16 %v1677, %v1676
      %v1688 = vpack.c.b16 %v1679, %v1678
      %v1689 = vpack.c.b16 %v1681, %v1680
      %1698 = vmatpush.bf16.msra.mxu0 %v1689
      %1699 = vmatpush.bf16.msra.mxu0 %v1688
      %1700 = vmatpush.bf16.msra.mxu0 %v1687
      %1701 = vmatpush.bf16.msra.mxu0 %v1686
      %1702 = vmatpush.bf16.msra.mxu0 %v1685
      %1703 = vmatpush.bf16.msra.mxu0 %v1684
      %1704 = vmatpush.bf16.msra.mxu0 %v1683
      %1705 = vmatpush.bf16.msra.mxu0 %v1682
      %1706 = vmatmul.bf16.gmra.mxu0 %v1642
      %v1707 = vpop.f32.mrf.mxu0
      %v1708 = vadd.f32 0.0, %v1707
      %v1709 = vpop.f32.mrf.mxu0
      %v1710 = vadd.f32 0.0, %v1709
      %1711 = vmatmul.bf16.gmra.mxu0 %v1643
      %v1712 = vpop.f32.mrf.mxu0
      %v1713 = vadd.f32 0.0, %v1712
      %v1714 = vpop.f32.mrf.mxu0
      %v1715 = vadd.f32 0.0, %v1714
      %1716 = vmatmul.bf16.gmra.mxu0 %v1644
      %v1717 = vpop.f32.mrf.mxu0
      %v1718 = vadd.f32 0.0, %v1717
      %v1719 = vpop.f32.mrf.mxu0
      %v1720 = vadd.f32 0.0, %v1719
      %1721 = vmatmul.bf16.gmra.mxu0 %v1645
      %v1722 = vpop.f32.mrf.mxu0
      %v1723 = vadd.f32 0.0, %v1722
      %v1724 = vpop.f32.mrf.mxu0
      %v1725 = vadd.f32 0.0, %v1724
      %1726 = vdwg.mxu0
      %v1727 = vadd.f32 %v1590, %v1708
      %v1728 = vadd.f32 %v1591, %v1710
      %v1729 = vadd.f32 %v1592, %v1713
      %v1730 = vadd.f32 %v1593, %v1715
      %v1731 = vadd.f32 %v1594, %v1718
      %v1732 = vadd.f32 %v1595, %v1720
      %v1733 = vadd.f32 %v1596, %v1723
      %v1734 = vadd.f32 %v1597, %v1725
      %v1735 = vld [vmem:[%s1463] sm:$0xf]
      %v1736 = vld [vmem:[%s1463 + $0x4] sm:$0x1]
      %v1737 = vld [vmem:[%s1463 + $0x8] sm:$0xf]
      %v1738 = vld [vmem:[%s1463 + $0xc] sm:$0x1]
      %v1739 = vld [vmem:[%s1463 + $0x10] sm:$0xf]
      %v1740 = vld [vmem:[%s1463 + $0x14] sm:$0x1]
      %v1741 = vld [vmem:[%s1463 + $0x18] sm:$0xf]
      %v1742 = vld [vmem:[%s1463 + $0x1c] sm:$0x1]
      %v1743 = vld [vmem:[%s1463 + $0x20] sm:$0xf]
      %v1744 = vld [vmem:[%s1463 + $0x24] sm:$0x1]
      %v1745 = vld [vmem:[%s1463 + $0x28] sm:$0xf]
      %v1746 = vld [vmem:[%s1463 + $0x2c] sm:$0x1]
      %v1747 = vld [vmem:[%s1463 + $0x30] sm:$0xf]
      %v1748 = vld [vmem:[%s1463 + $0x34] sm:$0x1]
      %v1749 = vld [vmem:[%s1463 + $0x38] sm:$0xf]
      %v1750 = vld [vmem:[%s1463 + $0x3c] sm:$0x1]
      %v1752 = vshrl.u32 %v1735, 16
      %v1754 = vrot.slane %v1752, 4
      %v1755 = vshll.u32 %v1735, 16
      %v1757 = vrot.slane %v1755, 5
      %v1758 = vor.u32 %v1754, %v1757
      %v1759 = vrot.slane %v1758, 4
      %v1761 = vshll.u32 %v1736, 16
      %v1763 = vrot.slane %v1761, 5
      %v1764 = vsel %vm616, %v1759, %v1763
      %v1766 = vshrl.u32 %v1737, 16
      %v1768 = vrot.slane %v1766, 4
      %v1769 = vshll.u32 %v1737, 16
      %v1771 = vrot.slane %v1769, 5
      %v1772 = vor.u32 %v1768, %v1771
      %v1773 = vrot.slane %v1772, 4
      %v1775 = vshll.u32 %v1738, 16
      %v1777 = vrot.slane %v1775, 5
      %v1778 = vsel %vm616, %v1773, %v1777
      %v1780 = vshrl.u32 %v1739, 16
      %v1782 = vrot.slane %v1780, 4
      %v1783 = vshll.u32 %v1739, 16
      %v1785 = vrot.slane %v1783, 5
      %v1786 = vor.u32 %v1782, %v1785
      %v1787 = vrot.slane %v1786, 4
      %v1789 = vshll.u32 %v1740, 16
      %v1791 = vrot.slane %v1789, 5
      %v1792 = vsel %vm616, %v1787, %v1791
      %v1794 = vshrl.u32 %v1741, 16
      %v1796 = vrot.slane %v1794, 4
      %v1797 = vshll.u32 %v1741, 16
      %v1799 = vrot.slane %v1797, 5
      %v1800 = vor.u32 %v1796, %v1799
      %v1801 = vrot.slane %v1800, 4
      %v1803 = vshll.u32 %v1742, 16
      %v1805 = vrot.slane %v1803, 5
      %v1806 = vsel %vm616, %v1801, %v1805
      %v1808 = vshrl.u32 %v1743, 16
      %v1810 = vrot.slane %v1808, 4
      %v1811 = vshll.u32 %v1743, 16
      %v1813 = vrot.slane %v1811, 5
      %v1814 = vor.u32 %v1810, %v1813
      %v1815 = vrot.slane %v1814, 4
      %v1817 = vshll.u32 %v1744, 16
      %v1819 = vrot.slane %v1817, 5
      %v1820 = vsel %vm616, %v1815, %v1819
      %v1822 = vshrl.u32 %v1745, 16
      %v1824 = vrot.slane %v1822, 4
      %v1825 = vshll.u32 %v1745, 16
      %v1827 = vrot.slane %v1825, 5
      %v1828 = vor.u32 %v1824, %v1827
      %v1829 = vrot.slane %v1828, 4
      %v1831 = vshll.u32 %v1746, 16
      %v1833 = vrot.slane %v1831, 5
      %v1834 = vsel %vm616, %v1829, %v1833
      %v1836 = vshrl.u32 %v1747, 16
      %v1838 = vrot.slane %v1836, 4
      %v1839 = vshll.u32 %v1747, 16
      %v1841 = vrot.slane %v1839, 5
      %v1842 = vor.u32 %v1838, %v1841
      %v1843 = vrot.slane %v1842, 4
      %v1845 = vshll.u32 %v1748, 16
      %v1847 = vrot.slane %v1845, 5
      %v1848 = vsel %vm616, %v1843, %v1847
      %v1850 = vshrl.u32 %v1749, 16
      %v1852 = vrot.slane %v1850, 4
      %v1853 = vshll.u32 %v1749, 16
      %v1855 = vrot.slane %v1853, 5
      %v1856 = vor.u32 %v1852, %v1855
      %v1857 = vrot.slane %v1856, 4
      %v1859 = vshll.u32 %v1750, 16
      %v1861 = vrot.slane %v1859, 5
      %v1862 = vsel %vm616, %v1857, %v1861
      %s1863 = scalar_lea.vmem %s1, 512
      %v1864 = vld [vmem:[%s1863] sm:$0xf]
      %v1865 = vld [vmem:[%s1863 + $0x4] sm:$0xf]
      %v1866 = vld [vmem:[%s1863 + $0x8] sm:$0xf]
      %v1867 = vld [vmem:[%s1863 + $0xc] sm:$0xf]
      %v1868 = vld [vmem:[%s1863 + $0x10] sm:$0xf]
      %v1869 = vld [vmem:[%s1863 + $0x14] sm:$0xf]
      %v1870 = vld [vmem:[%s1863 + $0x18] sm:$0xf]
      %v1871 = vld [vmem:[%s1863 + $0x1c] sm:$0xf]
      %v1872 = vld [vmem:[%s1863 + $0x20] sm:$0xf]
      %v1873 = vld [vmem:[%s1863 + $0x24] sm:$0xf]
      %v1874 = vld [vmem:[%s1863 + $0x28] sm:$0xf]
      %v1875 = vld [vmem:[%s1863 + $0x2c] sm:$0xf]
      %v1876 = vld [vmem:[%s1863 + $0x30] sm:$0xf]
      %v1877 = vld [vmem:[%s1863 + $0x34] sm:$0xf]
      %v1878 = vld [vmem:[%s1863 + $0x38] sm:$0xf]
      %v1879 = vld [vmem:[%s1863 + $0x3c] sm:$0xf]
      %v1880 = vunpack.c.l.b16 %v1764
      %v1881 = vunpack.c.l.b16 %v1778
      %v1882 = vunpack.c.l.b16 %v1792
      %v1883 = vunpack.c.l.b16 %v1806
      %v1884 = vunpack.c.l.b16 %v1820
      %v1885 = vunpack.c.l.b16 %v1834
      %v1886 = vunpack.c.l.b16 %v1848
      %v1887 = vunpack.c.l.b16 %v1862
      %v1888 = vpack.c.b16 %v1881, %v1880
      %v1889 = vpack.c.b16 %v1883, %v1882
      %v1890 = vpack.c.b16 %v1885, %v1884
      %v1891 = vpack.c.b16 %v1887, %v1886
      %v1912 = vunpack.c.l.b16 %v1864
      %v1913 = vunpack.c.l.b16 %v1865
      %v1914 = vunpack.c.l.b16 %v1866
      %v1915 = vunpack.c.l.b16 %v1867
      %v1916 = vunpack.c.l.b16 %v1868
      %v1917 = vunpack.c.l.b16 %v1869
      %v1918 = vunpack.c.l.b16 %v1870
      %v1919 = vunpack.c.l.b16 %v1871
      %v1920 = vunpack.c.l.b16 %v1872
      %v1921 = vunpack.c.l.b16 %v1873
      %v1922 = vunpack.c.l.b16 %v1874
      %v1923 = vunpack.c.l.b16 %v1875
      %v1924 = vunpack.c.l.b16 %v1876
      %v1925 = vunpack.c.l.b16 %v1877
      %v1926 = vunpack.c.l.b16 %v1878
      %v1927 = vunpack.c.l.b16 %v1879
      %v1928 = vpack.c.b16 %v1913, %v1912
      %v1929 = vpack.c.b16 %v1915, %v1914
      %v1930 = vpack.c.b16 %v1917, %v1916
      %v1931 = vpack.c.b16 %v1919, %v1918
      %v1932 = vpack.c.b16 %v1921, %v1920
      %v1933 = vpack.c.b16 %v1923, %v1922
      %v1934 = vpack.c.b16 %v1925, %v1924
      %v1935 = vpack.c.b16 %v1927, %v1926
      %1944 = vmatpush.bf16.msra.mxu0 %v1935
      %1945 = vmatpush.bf16.msra.mxu0 %v1934
      %1946 = vmatpush.bf16.msra.mxu0 %v1933
      %1947 = vmatpush.bf16.msra.mxu0 %v1932
      %1948 = vmatpush.bf16.msra.mxu0 %v1931
      %1949 = vmatpush.bf16.msra.mxu0 %v1930
      %1950 = vmatpush.bf16.msra.mxu0 %v1929
      %1951 = vmatpush.bf16.msra.mxu0 %v1928
      %1952 = vmatmul.bf16.gmra.mxu0 %v1888
      %v1953 = vpop.f32.mrf.mxu0
      %v1954 = vadd.f32 0.0, %v1953
      %v1955 = vpop.f32.mrf.mxu0
      %v1956 = vadd.f32 0.0, %v1955
      %1957 = vmatmul.bf16.gmra.mxu0 %v1889
      %v1958 = vpop.f32.mrf.mxu0
      %v1959 = vadd.f32 0.0, %v1958
      %v1960 = vpop.f32.mrf.mxu0
      %v1961 = vadd.f32 0.0, %v1960
      %1962 = vmatmul.bf16.gmra.mxu0 %v1890
      %v1963 = vpop.f32.mrf.mxu0
      %v1964 = vadd.f32 0.0, %v1963
      %v1965 = vpop.f32.mrf.mxu0
      %v1966 = vadd.f32 0.0, %v1965
      %1967 = vmatmul.bf16.gmra.mxu0 %v1891
      %v1968 = vpop.f32.mrf.mxu0
      %v1969 = vadd.f32 0.0, %v1968
      %v1970 = vpop.f32.mrf.mxu0
      %v1971 = vadd.f32 0.0, %v1970
      %1972 = vdwg.mxu0
      %v1973 = vadd.f32 %v1727, %v1954
      %v1974 = vadd.f32 %v1728, %v1956
      %v1975 = vadd.f32 %v1729, %v1959
      %v1976 = vadd.f32 %v1730, %v1961
      %v1977 = vadd.f32 %v1731, %v1964
      %v1978 = vadd.f32 %v1732, %v1966
      %v1979 = vadd.f32 %v1733, %v1969
      %v1980 = vadd.f32 %v1734, %v1971
      %v1981 = vpack.c.bf16 %v1973, %v1973
      %v1982 = vpack.c.bf16 %v1974, %v1974
      %v1983 = vpack.c.bf16 %v1975, %v1975
      %v1984 = vpack.c.bf16 %v1976, %v1976
      %v1985 = vpack.c.bf16 %v1977, %v1977
      %v1986 = vpack.c.bf16 %v1978, %v1978
      %v1987 = vpack.c.bf16 %v1979, %v1979
      %v1988 = vpack.c.bf16 %v1980, %v1980
      %1989 = vst [vmem:[%s314] sm:$0xf] %v1981
      %1990 = vst [vmem:[%s314 + $0x4] sm:$0xf] %v1982
      %1991 = vst [vmem:[%s314 + $0x8] sm:$0xf] %v1983
      %1992 = vst [vmem:[%s314 + $0xc] sm:$0xf] %v1984
      %1993 = vst [vmem:[%s314 + $0x10] sm:$0xf] %v1985
      %1994 = vst [vmem:[%s314 + $0x14] sm:$0xf] %v1986
      %1995 = vst [vmem:[%s314 + $0x18] sm:$0xf] %v1987
      %1996 = vst [vmem:[%s314 + $0x1c] sm:$0xf] %v1988
      %v1997 = vadd.f32 %v1973, %v1974
      %v1998 = vadd.f32 %v1997, %v1975
      %v1999 = vadd.f32 %v1998, %v1976
      %v2000 = vadd.f32 %v1999, %v1977
      %v2001 = vadd.f32 %v2000, %v1978
      %v2002 = vadd.f32 %v2001, %v1979
      %v2003 = vadd.f32 %v2002, %v1980
      %v2004 = vrot.slane %v2003, 4
      %v2005 = vadd.f32 %v2003, %v2004
      %v2006 = vrot.slane %v2005, 2
      %v2007 = vadd.f32 %v2005, %v2006
      %v2008 = vrot.slane %v2007, 1
      %v2009 = vadd.f32 %v2007, %v2008
      %v2010 = vmul.f32 %v1973, %v1973
      %v2011 = vmul.f32 %v1974, %v1974
      %v2012 = vmul.f32 %v1975, %v1975
      %v2013 = vmul.f32 %v1976, %v1976
      %v2014 = vmul.f32 %v1977, %v1977
      %v2015 = vmul.f32 %v1978, %v1978
      %v2016 = vmul.f32 %v1979, %v1979
      %v2017 = vmul.f32 %v1980, %v1980
      %v2018 = vadd.f32 %v2010, %v2011
      %v2019 = vadd.f32 %v2018, %v2012
      %v2020 = vadd.f32 %v2019, %v2013
      %v2021 = vadd.f32 %v2020, %v2014
      %v2022 = vadd.f32 %v2021, %v2015
      %v2023 = vadd.f32 %v2022, %v2016
      %v2024 = vadd.f32 %v2023, %v2017
      %v2025 = vrot.slane %v2024, 4
      %v2026 = vadd.f32 %v2024, %v2025
      %v2027 = vrot.slane %v2026, 2
      %v2028 = vadd.f32 %v2026, %v2027
      %v2029 = vrot.slane %v2028, 1
      %v2030 = vadd.f32 %v2028, %v2029
      %vm2031 = vcmask 1040384
      %v2032 = vsel %vm2031, %v2009, %v2030
      %2033 = vst [vmem:[%s322] sm:$0x3] %v2032
      %v2034 = vpack.c.bf16 %v1195, %v1195
      %v2035 = vpack.c.bf16 %v1197, %v1197
      %v2036 = vpack.c.bf16 %v1200, %v1200
      %v2037 = vpack.c.bf16 %v1202, %v1202
      %v2038 = vpack.c.bf16 %v1205, %v1205
      %v2039 = vpack.c.bf16 %v1207, %v1207
      %v2040 = vpack.c.bf16 %v1210, %v1210
      %v2041 = vpack.c.bf16 %v1212, %v1212
      %2042 = vst [vmem:[%s331] sm:$0xf] %v2034
      %2043 = vst [vmem:[%s331 + $0x4] sm:$0xf] %v2035
      %2044 = vst [vmem:[%s331 + $0x8] sm:$0xf] %v2036
      %2045 = vst [vmem:[%s331 + $0xc] sm:$0xf] %v2037
      %2046 = vst [vmem:[%s331 + $0x10] sm:$0xf] %v2038
      %2047 = vst [vmem:[%s331 + $0x14] sm:$0xf] %v2039
      %2048 = vst [vmem:[%s331 + $0x18] sm:$0xf] %v2040
      %2049 = vst [vmem:[%s331 + $0x1c] sm:$0xf] %v2041
      %v2050 = vadd.f32 %v1195, %v1197
      %v2051 = vadd.f32 %v2050, %v1200
      %v2052 = vadd.f32 %v2051, %v1202
      %v2053 = vadd.f32 %v2052, %v1205
      %v2054 = vadd.f32 %v2053, %v1207
      %v2055 = vadd.f32 %v2054, %v1210
      %v2056 = vadd.f32 %v2055, %v1212
      %v2057 = vrot.slane %v2056, 4
      %v2058 = vadd.f32 %v2056, %v2057
      %v2059 = vrot.slane %v2058, 2
      %v2060 = vadd.f32 %v2058, %v2059
      %v2061 = vrot.slane %v2060, 1
      %v2062 = vadd.f32 %v2060, %v2061
      %v2063 = vmul.f32 %v1195, %v1195
      %v2064 = vmul.f32 %v1197, %v1197
      %v2065 = vmul.f32 %v1200, %v1200
      %v2066 = vmul.f32 %v1202, %v1202
      %v2067 = vmul.f32 %v1205, %v1205
      %v2068 = vmul.f32 %v1207, %v1207
      %v2069 = vmul.f32 %v1210, %v1210
      %v2070 = vmul.f32 %v1212, %v1212
      %v2071 = vadd.f32 %v2063, %v2064
      %v2072 = vadd.f32 %v2071, %v2065
      %v2073 = vadd.f32 %v2072, %v2066
      %v2074 = vadd.f32 %v2073, %v2067
      %v2075 = vadd.f32 %v2074, %v2068
      %v2076 = vadd.f32 %v2075, %v2069
      %v2077 = vadd.f32 %v2076, %v2070
      %v2078 = vrot.slane %v2077, 4
      %v2079 = vadd.f32 %v2077, %v2078
      %v2080 = vrot.slane %v2079, 2
      %v2081 = vadd.f32 %v2079, %v2080
      %v2082 = vrot.slane %v2081, 1
      %v2083 = vadd.f32 %v2081, %v2082
      %v2084 = vsel %vm2031, %v2062, %v2083
      %2085 = vst [vmem:[%s339] sm:$0x3] %v2084
      %s2086 = smul.u32 8, %s23
      %p2087 = scmp.lt.s32.totalorder %s22, 1
      %s2088 = scalar_select %p2087, %s22, 1
      %p2089 = scmp.lt.s32.totalorder %s2086, 7
      %s2090 = scalar_select %p2089, %s2086, 7
      %s2091 = smul.addr %s2088, 8
      %s2092 = sadd.s32 %s2090, %s2091
      %s2093 = smul.addr %s2092, 4
      %s2094 = scalar_lea.vmem %s3, %s2093
      %p2095 = scmp.lt.s32.totalorder %s22, 1
      %s2096 = scalar_select %p2095, %s22, 1
      %p2097 = scmp.lt.s32.totalorder %s23, 0
      %s2098 = scalar_select %p2097, %s23, 0
      %s2099 = sadd.s32 %s2098, %s2096
      %s2100 = smul.addr %s2099, 2
      %s2101 = scalar_lea.vmem %s4, %s2100
      %s2102 = smul.u32 8, %s23
      %p2103 = scmp.lt.s32.totalorder %s22, 1
      %s2104 = scalar_select %p2103, %s22, 1
      %p2105 = scmp.lt.s32.totalorder %s2102, 7
      %s2106 = scalar_select %p2105, %s2102, 7
      %s2107 = smul.addr %s2104, 8
      %s2108 = sadd.s32 %s2106, %s2107
      %s2109 = smul.addr %s2108, 4
      %s2110 = scalar_lea.vmem %s5, %s2109
      %p2111 = scmp.lt.s32.totalorder %s22, 1
      %s2112 = scalar_select %p2111, %s22, 1
      %p2113 = scmp.lt.s32.totalorder %s23, 0
      %s2114 = scalar_select %p2113, %s23, 0
      %s2115 = sadd.s32 %s2114, %s2112
      %s2116 = smul.addr %s2115, 2
      %s2117 = scalar_lea.vmem %s6, %s2116
      // Predicated region
      $region33: #{basic_block_forward.3} parent=31 // pred_check
        %p2118 = pneg %p118
      $region34: #{basic_block_forward.3} parent=31 // pred_check_branch
        %2120 = sbr.rel (%p2118) target = $region36
      $region35: #{basic_block_forward.3} parent=31 // pred_region
        %s2121 = smul.u32 8, %s23
      $region36: #{basic_block_forward.3} parent=31 // pred_fallthru
        _
      // Predicated region
      $region37: #{basic_block_forward.3} parent=31 // pred_check
        %p2122 = pneg %p146
      $region38: #{basic_block_forward.3} parent=31 // pred_check_branch
        %2124 = sbr.rel (%p2122) target = $region40
      $region39: #{basic_block_forward.3} parent=31 // pred_region
        _
      $region40: #{basic_block_forward.3} parent=31 // pred_fallthru
        _
      // Predicated region
      $region41: #{basic_block_forward.3} parent=31 // pred_check
        %p2125 = pneg %p174
      $region42: #{basic_block_forward.3} parent=31 // pred_check_branch
        %2127 = sbr.rel (%p2125) target = $region44
      $region43: #{basic_block_forward.3} parent=31 // pred_region
        %s2128 = smul.u32 8, %s23
      $region44: #{basic_block_forward.3} parent=31 // pred_fallthru
        _
      // Predicated region
      $region45: #{basic_block_forward.3} parent=31 // pred_check
        %p2129 = pneg %p202
      $region46: #{basic_block_forward.3} parent=31 // pred_check_branch
        %2131 = sbr.rel (%p2129) target = $region48
      $region47: #{basic_block_forward.3} parent=31 // pred_region
        _
      $region48: #{basic_block_forward.3} parent=31 // pred_fallthru
        _
    $region32: #{basic_block_forward.3} parent=5 // pred_fallthru
      _
    %p2132 = scmp.le.s32.totalorder 2, %s13
    // Predicated region
    $region49: #{basic_block_forward.3} parent=5 // pred_check
      %p2133 = pneg %p2132
    $region50: #{basic_block_forward.3} parent=5 // pred_check_branch
      %2135 = sbr.rel (%p2133) target = $region52
    $region51: #{basic_block_forward.3} parent=5 // pred_region
      %s2136 = ssub.s32 %s13, 2
      // Predicated region
      $region53: #{basic_block_forward.3} parent=51 // pred_check
        %p2137 = pneg %p124
      $region54: #{basic_block_forward.3} parent=51 // pred_check_branch
        %2139 = sbr.rel (%p2137) target = $region56
      $region55: #{basic_block_forward.3} parent=51 // pred_region
        %s2140 = smul.u32 8, %s25
        %p2141 = scmp.lt.s32.totalorder %s24, 1
        %s2142 = scalar_select %p2141, %s24, 1
        %p2143 = scmp.lt.s32.totalorder %s2140, 7
        %s2144 = scalar_select %p2143, %s2140, 7
        %s2145 = smul.addr %s2142, 8
        %s2146 = sadd.s32 %s2144, %s2145
        %s2147 = smul.addr %s2146, 4
        %s2148 = scalar_lea.vmem %s3, %s2147
      $region56: #{basic_block_forward.3} parent=51 // pred_fallthru
        _
      // Predicated region
      $region57: #{basic_block_forward.3} parent=51 // pred_check
        %p2149 = pneg %p152
      $region58: #{basic_block_forward.3} parent=51 // pred_check_branch
        %2151 = sbr.rel (%p2149) target = $region60
      $region59: #{basic_block_forward.3} parent=51 // pred_region
        %p2152 = scmp.lt.s32.totalorder %s24, 1
        %s2153 = scalar_select %p2152, %s24, 1
        %p2154 = scmp.lt.s32.totalorder %s25, 0
        %s2155 = scalar_select %p2154, %s25, 0
        %s2156 = sadd.s32 %s2155, %s2153
        %s2157 = smul.addr %s2156, 2
        %s2158 = scalar_lea.vmem %s4, %s2157
      $region60: #{basic_block_forward.3} parent=51 // pred_fallthru
        _
      // Predicated region
      $region61: #{basic_block_forward.3} parent=51 // pred_check
        %p2159 = pneg %p180
      $region62: #{basic_block_forward.3} parent=51 // pred_check_branch
        %2161 = sbr.rel (%p2159) target = $region64
      $region63: #{basic_block_forward.3} parent=51 // pred_region
        %s2162 = smul.u32 8, %s25
        %p2163 = scmp.lt.s32.totalorder %s24, 1
        %s2164 = scalar_select %p2163, %s24, 1
        %p2165 = scmp.lt.s32.totalorder %s2162, 7
        %s2166 = scalar_select %p2165, %s2162, 7
        %s2167 = smul.addr %s2164, 8
        %s2168 = sadd.s32 %s2166, %s2167
        %s2169 = smul.addr %s2168, 4
        %s2170 = scalar_lea.vmem %s5, %s2169
      $region64: #{basic_block_forward.3} parent=51 // pred_fallthru
        _
      // Predicated region
      $region65: #{basic_block_forward.3} parent=51 // pred_check
        %p2171 = pneg %p208
      $region66: #{basic_block_forward.3} parent=51 // pred_check_branch
        %2173 = sbr.rel (%p2171) target = $region68
      $region67: #{basic_block_forward.3} parent=51 // pred_region
        %p2174 = scmp.lt.s32.totalorder %s24, 1
        %s2175 = scalar_select %p2174, %s24, 1
        %p2176 = scmp.lt.s32.totalorder %s25, 0
        %s2177 = scalar_select %p2176, %s25, 0
        %s2178 = sadd.s32 %s2177, %s2175
        %s2179 = smul.addr %s2178, 2
        %s2180 = scalar_lea.vmem %s6, %s2179
      $region68: #{basic_block_forward.3} parent=51 // pred_fallthru
        _
    $region52: #{basic_block_forward.3} parent=5 // pred_fallthru
      _
  $region6: #{basic_block_forward.3} parent=0 // loop_footer
    %s17 = sadd.s32 1, %s13
  $region7: #{basic_block_forward.3} parent=0 // loop_footer_branch
    %12 = sbr.rel target = $region3
  $region8: #{basic_block_forward.3} parent=0 // loop_exit
    _

// kernel: basic_block_forward.4
$region0: #{basic_block_forward.4}
  #allocation0 [shape = 'u32[]', space=smem, size = 0x4, offset = 0x4, fixed_abs, tag = 'smem constant byte address 0x4 - core index']
  #allocation1 [shape = 'u32[72,128]{1,0:T(1,128)}', space=vmem, size = 0x9000, scoped, tag = 'internal scratch']
  #allocation2 [shape = 'bf16[10,10,128]{2,1,0:T(8,128)(2,1)}', space=vmem, size = 0xa000, scoped, tag = 'scratch operand']
  %s0 = inlined_call_operand.vmem [shape: bf16[2,8,8,128], index: 0, kind: input, shape index: {}]
  %s1 = inlined_call_operand.vmem [shape: bf16[9,128,128], index: 1, kind: input, shape index: {}]
  %s2 = inlined_call_operand.vmem [shape: f32[2,128], index: 2, kind: input, shape index: {}]
  %s3 = inlined_call_operand.vmem [shape: bf16[2,8,8,128], index: 3, kind: output, shape index: {0}]
  %s4 = inlined_call_operand.vmem [shape: f32[2,1,2,128], index: 4, kind: output, shape index: {1}]
  %5 = xla_tuple %s3, %s4
  %s6 = sld [smem:[#allocation0]]
  $region57: #{basic_block_forward.4} parent=0
    _
  %s8 = ssub.s32 1, %s6
  %s9 = scalar_select 0, %s8, %s6
  loop: start=0, step=1, limit=4
  $region2: #{basic_block_forward.4} parent=0 // loop_pre_header
    _
  $region3: #{basic_block_forward.4} parent=0 // loop_header
    %s11 = sphi 0, %s15
    %p12 = scmp.ge.s32.totalorder %s11, 4
    %s18 = sphi 0, %s30
    %s19 = sphi 0, %s26
    %s20 = sphi 0, %s18
    %s21 = sphi 0, %s19
    %s22 = sphi 0, %s20
    %s23 = sphi 0, %s21
    %s33 = sphi 0, %s35
    %s36 = sphi 0, %s33
    %s37 = sphi 0, %s36
    %s53 = sphi 0, %s37
    %s57 = sphi 0, %s57
    %s59 = sphi 0, %s57
    %s60 = sphi 0, %s59
    %s74 = sphi 0, %s60
    %s78 = sphi 0, %s78
    %s80 = sphi 0, %s78
    %s81 = sphi 0, %s80
    %s95 = sphi 0, %s81
    %s103 = sphi 0, %s105
    %s106 = sphi 0, %s103
    %s107 = sphi 0, %s106
    %s123 = sphi 0, %s107
    %s131 = sphi 0, %s133
    %s134 = sphi 0, %s131
    %s135 = sphi 0, %s134
    %s151 = sphi 0, %s135
  $region4: #{basic_block_forward.4} parent=0 // loop_header_branch
    %14 = sbr.rel (%p12) target = $region8
  $region5: #{basic_block_forward.4} parent=0 // loop_body
    %s16 = ssub.s32 %s11, 1
    %s17 = ssub.s32 %s11, 2
    %s24 = sadd.s32 1, %s19
    %p25 = scmp.ge.s32.totalorder %s24, 1
    %s26 = scalar_select %p25, 0, %s24
    %s27 = sadd.s32 1, %s18
    %s28 = scalar_select %p25, %s27, %s18
    %p29 = scmp.ge.s32.totalorder %s28, 2
    %s30 = scalar_select %p29, 0, %s28
    %s31 = ssub.s32 %s18, %s30
    %p32 = scmp.eq.s32.totalorder %s31, 0
    %s34 = sadd.s32 %s33, 1
    %s35 = scalar_select %p32, %s33, %s34
    %p38 = pneg %p32
    %p39 = scmp.eq.s32.totalorder %s11, 1
    %p40 = por %p38, %p39
    %p41 = scmp.ne.s32.totalorder %s33, %s36
    %p42 = scmp.eq.s32.totalorder %s11, 0
    %p43 = por %p41, %p42
    %p44 = scmp.ne.s32.totalorder %s33, %s36
    %p45 = scmp.eq.s32.totalorder %s16, 1
    %p46 = por %p44, %p45
    %p47 = scmp.ne.s32.totalorder %s36, %s37
    %p48 = scmp.eq.s32.totalorder %s16, 0
    %p49 = por %p47, %p48
    %p50 = scmp.ne.s32.totalorder %s36, %s37
    %p51 = scmp.eq.s32.totalorder %s17, 1
    %p52 = por %p50, %p51
    %p54 = scmp.ne.s32.totalorder %s37, %s53
    %p55 = scmp.eq.s32.totalorder %s17, 0
    %p56 = por %p54, %p55
    %s58 = sadd.s32 %s57, 1
    %p61 = scmp.eq.s32.totalorder %s11, 1
    %p62 = scmp.ne.s32.totalorder %s57, %s59
    %p63 = scmp.eq.s32.totalorder %s11, 0
    %p64 = por %p62, %p63
    %p65 = scmp.ne.s32.totalorder %s57, %s59
    %p66 = scmp.eq.s32.totalorder %s16, 1
    %p67 = por %p65, %p66
    %p68 = scmp.ne.s32.totalorder %s59, %s60
    %p69 = scmp.eq.s32.totalorder %s16, 0
    %p70 = por %p68, %p69
    %p71 = scmp.ne.s32.totalorder %s59, %s60
    %p72 = scmp.eq.s32.totalorder %s17, 1
    %p73 = por %p71, %p72
    %p75 = scmp.ne.s32.totalorder %s60, %s74
    %p76 = scmp.eq.s32.totalorder %s17, 0
    %p77 = por %p75, %p76
    %s79 = sadd.s32 %s78, 1
    %p82 = scmp.eq.s32.totalorder %s11, 1
    %p83 = scmp.ne.s32.totalorder %s78, %s80
    %p84 = scmp.eq.s32.totalorder %s11, 0
    %p85 = por %p83, %p84
    %p86 = scmp.ne.s32.totalorder %s78, %s80
    %p87 = scmp.eq.s32.totalorder %s16, 1
    %p88 = por %p86, %p87
    %p89 = scmp.ne.s32.totalorder %s80, %s81
    %p90 = scmp.eq.s32.totalorder %s16, 0
    %p91 = por %p89, %p90
    %p92 = scmp.ne.s32.totalorder %s80, %s81
    %p93 = scmp.eq.s32.totalorder %s17, 1
    %p94 = por %p92, %p93
    %p96 = scmp.ne.s32.totalorder %s81, %s95
    %p97 = scmp.eq.s32.totalorder %s17, 0
    %p98 = por %p96, %p97
    %s99 = ssub.s32 %s18, %s30
    %s100 = ssub.s32 %s19, %s26
    %s101 = sor.u32 %s99, %s100
    %p102 = scmp.eq.s32.totalorder %s101, 0
    %s104 = sadd.s32 %s103, 1
    %s105 = scalar_select %p102, %s103, %s104
    %p108 = pneg %p102
    %p109 = scmp.eq.s32.totalorder %s11, 1
    %p110 = por %p108, %p109
    %p111 = scmp.ne.s32.totalorder %s103, %s106
    %p112 = scmp.eq.s32.totalorder %s11, 0
    %p113 = por %p111, %p112
    %p114 = scmp.ne.s32.totalorder %s103, %s106
    %p115 = scmp.eq.s32.totalorder %s16, 1
    %p116 = por %p114, %p115
    %p117 = scmp.ne.s32.totalorder %s106, %s107
    %p118 = scmp.eq.s32.totalorder %s16, 0
    %p119 = por %p117, %p118
    %p120 = scmp.ne.s32.totalorder %s106, %s107
    %p121 = scmp.eq.s32.totalorder %s17, 1
    %p122 = por %p120, %p121
    %p124 = scmp.ne.s32.totalorder %s107, %s123
    %p125 = scmp.eq.s32.totalorder %s17, 0
    %p126 = por %p124, %p125
    %s127 = ssub.s32 %s18, %s30
    %s128 = ssub.s32 %s19, %s26
    %s129 = sor.u32 %s127, %s128
    %p130 = scmp.eq.s32.totalorder %s129, 0
    %s132 = sadd.s32 %s131, 1
    %s133 = scalar_select %p130, %s131, %s132
    %p136 = pneg %p130
    %p137 = scmp.eq.s32.totalorder %s11, 1
    %p138 = por %p136, %p137
    %p139 = scmp.ne.s32.totalorder %s131, %s134
    %p140 = scmp.eq.s32.totalorder %s11, 0
    %p141 = por %p139, %p140
    %p142 = scmp.ne.s32.totalorder %s131, %s134
    %p143 = scmp.eq.s32.totalorder %s16, 1
    %p144 = por %p142, %p143
    %p145 = scmp.ne.s32.totalorder %s134, %s135
    %p146 = scmp.eq.s32.totalorder %s16, 0
    %p147 = por %p145, %p146
    %p148 = scmp.ne.s32.totalorder %s134, %s135
    %p149 = scmp.eq.s32.totalorder %s17, 1
    %p150 = por %p148, %p149
    %p152 = scmp.ne.s32.totalorder %s135, %s151
    %p153 = scmp.eq.s32.totalorder %s17, 0
    %p154 = por %p152, %p153
    %p155 = scmp.le.s32.totalorder 1, %s11
    %p156 = scmp.lt.s32.totalorder %s11, 3
    %p157 = pnand %p155, %p156
    %p158 = pneg %p157
    // Predicated region
    $region9: #{basic_block_forward.4} parent=5 // pred_check
      _
    $region10: #{basic_block_forward.4} parent=5 // pred_check_branch
      %160 = sbr.rel (%p157) target = $region12
    $region11: #{basic_block_forward.4} parent=5 // pred_region
      %s161 = ssub.s32 %s11, 1
      // Predicated region
      $region13: #{basic_block_forward.4} parent=11 // pred_check
        %p162 = pneg %p70
      $region14: #{basic_block_forward.4} parent=11 // pred_check_branch
        %164 = sbr.rel (%p162) target = $region16
      $region15: #{basic_block_forward.4} parent=11 // pred_region
        _
      $region16: #{basic_block_forward.4} parent=11 // pred_fallthru
        _
      // Predicated region
      $region17: #{basic_block_forward.4} parent=11 // pred_check
        %p165 = pneg %p91
      $region18: #{basic_block_forward.4} parent=11 // pred_check_branch
        %167 = sbr.rel (%p165) target = $region20
      $region19: #{basic_block_forward.4} parent=11 // pred_region
        _
      $region20: #{basic_block_forward.4} parent=11 // pred_fallthru
        _
    $region12: #{basic_block_forward.4} parent=5 // pred_fallthru
      _
    %p168 = scmp.lt.s32.totalorder %s11, 2
    // Predicated region
    $region21: #{basic_block_forward.4} parent=5 // pred_check
      %p169 = pneg %p168
    $region22: #{basic_block_forward.4} parent=5 // pred_check_branch
      %171 = sbr.rel (%p169) target = $region24
    $region23: #{basic_block_forward.4} parent=5 // pred_region
      // Predicated region
      $region25: #{basic_block_forward.4} parent=23 // pred_check
        %p172 = pneg %p43
      $region26: #{basic_block_forward.4} parent=23 // pred_check_branch
        %174 = sbr.rel (%p172) target = $region28
      $region27: #{basic_block_forward.4} parent=23 // pred_region
        %p175 = scmp.lt.s32.totalorder %s18, 1
        %s176 = scalar_select %p175, %s18, 1
        %s177 = smul.addr %s176, 8
        %s178 = smul.addr %s177, 4
        %s179 = scalar_lea.vmem %s0, %s178
      $region28: #{basic_block_forward.4} parent=23 // pred_fallthru
        _
    $region24: #{basic_block_forward.4} parent=5 // pred_fallthru
      _
    %p180 = scmp.le.s32.totalorder 1, %s11
    %p181 = scmp.lt.s32.totalorder %s11, 3
    %p182 = pnand %p180, %p181
    %p183 = pneg %p182
    // Predicated region
    $region29: #{basic_block_forward.4} parent=5 // pred_check
      _
    $region30: #{basic_block_forward.4} parent=5 // pred_check_branch
      %185 = sbr.rel (%p182) target = $region32
    $region31: #{basic_block_forward.4} parent=5 // pred_region
      %s186 = ssub.s32 %s11, 1
      %p187 = scmp.lt.s32.totalorder %s20, 1
      %s188 = scalar_select %p187, %s20, 1
      %s189 = smul.addr %s188, 8
      %s190 = smul.addr %s189, 4
      %s191 = scalar_lea.vmem %s0, %s190
      %p192 = pneg %p49
      %p193 = pneg %p46
      %p194 = pneg %p70
      %p195 = pneg %p67
      %p196 = pneg %p91
      %p197 = pneg %p88
      %p198 = pneg %p119
      %p199 = pneg %p116
      %s200 = smul.u32 8, %s21
      %p201 = scmp.lt.s32.totalorder %s20, 1
      %s202 = scalar_select %p201, %s20, 1
      %p203 = scmp.lt.s32.totalorder %s200, 7
      %s204 = scalar_select %p203, %s200, 7
      %s205 = smul.addr %s202, 8
      %s206 = sadd.s32 %s204, %s205
      %s207 = smul.addr %s206, 4
      %s208 = scalar_lea.vmem %s3, %s207
      %p209 = pneg %p147
      %p210 = pneg %p144
      %p211 = scmp.lt.s32.totalorder %s20, 1
      %s212 = scalar_select %p211, %s20, 1
      %p213 = scmp.lt.s32.totalorder %s21, 0
      %s214 = scalar_select %p213, %s21, 0
      %s215 = sadd.s32 %s214, %s212
      %s216 = smul.addr %s215, 2
      %s217 = scalar_lea.vmem %s4, %s216
      %p218 = scmp.lt.s32.totalorder %s20, 1
      %s219 = scalar_select %p218, %s20, 1
      %s220 = smul.addr %s219, 8
      %s221 = smul.addr %s220, 4
      %s222 = scalar_lea.vmem %s0, %s221
      %s223 = smul.u32 8, %s21
      %p224 = scmp.lt.s32.totalorder %s20, 1
      %s225 = scalar_select %p224, %s20, 1
      %p226 = scmp.lt.s32.totalorder %s223, 7
      %s227 = scalar_select %p226, %s223, 7
      %s228 = smul.addr %s225, 8
      %s229 = sadd.s32 %s227, %s228
      %s230 = smul.addr %s229, 4
      %s231 = scalar_lea.vmem %s3, %s230
      %s232 = smul.u32 8, %s21
      %p233 = scmp.lt.s32.totalorder %s20, 1
      %s234 = scalar_select %p233, %s20, 1
      %p235 = scmp.lt.s32.totalorder %s21, 0
      %s236 = scalar_select %p235, %s21, 0
      %s237 = sadd.s32 %s236, %s234
      %s238 = smul.addr %s237, 2
      %s239 = scalar_lea.vmem %s4, %s238
      %s241 = smul.u32 %s21, 8
      %p242 = scmp.eq.s32.totalorder %s21, 0
      // Predicated region
      $region33: #{basic_block_forward.4} parent=31 // pred_check
        %p243 = pneg %p242
      $region34: #{basic_block_forward.4} parent=31 // pred_check_branch
        %245 = sbr.rel (%p243) target = $region36
      $region35: #{basic_block_forward.4} parent=31 // pred_region
        %246 = vst [vmem:[#allocation2] sm:$0xf] 0
        %247 = vst [vmem:[#allocation2 + $0x4] sm:$0x1] 0
        %s248 = scalar_lea.vmem [#allocation2], 72
        %249 = vst [vmem:[%s248] sm:$0xf] 0
        %250 = vst [vmem:[%s248 + $0x4] sm:$0x1] 0
        %vm251 = vcmask 1040384
        %vm252 = vsmask.f32 256
        %vm253 = vmand %vm251, %vm252
        %v254 = vld [vmem:[#allocation2] sm:$0x1]
        %v255 = vsel %vm253, 0, %v254
        %256 = vst [vmem:[#allocation2] sm:$0x1] %v255
        %v257 = vld [vmem:[#allocation2 + $0x8] sm:$0x1]
        %v258 = vsel %vm253, 0, %v257
        %259 = vst [vmem:[#allocation2 + $0x8] sm:$0x1] %v258
        %v260 = vld [vmem:[#allocation2 + $0x10] sm:$0x1]
        %v261 = vsel %vm253, 0, %v260
        %262 = vst [vmem:[#allocation2 + $0x10] sm:$0x1] %v261
        %v263 = vld [vmem:[#allocation2 + $0x18] sm:$0x1]
        %v264 = vsel %vm253, 0, %v263
        %265 = vst [vmem:[#allocation2 + $0x18] sm:$0x1] %v264
        %v266 = vld [vmem:[#allocation2 + $0x20] sm:$0x1]
        %v267 = vsel %vm253, 0, %v266
        %268 = vst [vmem:[#allocation2 + $0x20] sm:$0x1] %v267
        %v269 = vld [vmem:[#allocation2 + $0x28] sm:$0x1]
        %v270 = vsel %vm253, 0, %v269
        %271 = vst [vmem:[#allocation2 + $0x28] sm:$0x1] %v270
        %v272 = vld [vmem:[#allocation2 + $0x30] sm:$0x1]
        %v273 = vsel %vm253, 0, %v272
        %274 = vst [vmem:[#allocation2 + $0x30] sm:$0x1] %v273
        %v275 = vld [vmem:[#allocation2 + $0x38] sm:$0x1]
        %v276 = vsel %vm253, 0, %v275
        %277 = vst [vmem:[#allocation2 + $0x38] sm:$0x1] %v276
        %v278 = vld [vmem:[#allocation2 + $0x40] sm:$0x1]
        %v279 = vsel %vm253, 0, %v278
        %280 = vst [vmem:[#allocation2 + $0x40] sm:$0x1] %v279
        %v281 = vld [vmem:[#allocation2 + $0x48] sm:$0x1]
        %v282 = vsel %vm253, 0, %v281
        %283 = vst [vmem:[#allocation2 + $0x48] sm:$0x1] %v282
        %vm284 = vsmask.f32 7938
        %vm285 = vmand %vm251, %vm284
        %v286 = vld [vmem:[#allocation2 + $0x4] sm:$0x1]
        %v287 = vsel %vm285, 0, %v286
        %288 = vst [vmem:[#allocation2 + $0x4] sm:$0x1] %v287
        %v289 = vld [vmem:[#allocation2 + $0xc] sm:$0x1]
        %v290 = vsel %vm285, 0, %v289
        %291 = vst [vmem:[#allocation2 + $0xc] sm:$0x1] %v290
        %v292 = vld [vmem:[#allocation2 + $0x14] sm:$0x1]
        %v293 = vsel %vm285, 0, %v292
        %294 = vst [vmem:[#allocation2 + $0x14] sm:$0x1] %v293
        %v295 = vld [vmem:[#allocation2 + $0x1c] sm:$0x1]
        %v296 = vsel %vm285, 0, %v295
        %297 = vst [vmem:[#allocation2 + $0x1c] sm:$0x1] %v296
        %v298 = vld [vmem:[#allocation2 + $0x24] sm:$0x1]
        %v299 = vsel %vm285, 0, %v298
        %300 = vst [vmem:[#allocation2 + $0x24] sm:$0x1] %v299
        %v301 = vld [vmem:[#allocation2 + $0x2c] sm:$0x1]
        %v302 = vsel %vm285, 0, %v301
        %303 = vst [vmem:[#allocation2 + $0x2c] sm:$0x1] %v302
        %v304 = vld [vmem:[#allocation2 + $0x34] sm:$0x1]
        %v305 = vsel %vm285, 0, %v304
        %306 = vst [vmem:[#allocation2 + $0x34] sm:$0x1] %v305
        %v307 = vld [vmem:[#allocation2 + $0x3c] sm:$0x1]
        %v308 = vsel %vm285, 0, %v307
        %309 = vst [vmem:[#allocation2 + $0x3c] sm:$0x1] %v308
        %v310 = vld [vmem:[#allocation2 + $0x44] sm:$0x1]
        %v311 = vsel %vm285, 0, %v310
        %312 = vst [vmem:[#allocation2 + $0x44] sm:$0x1] %v311
        %v313 = vld [vmem:[#allocation2 + $0x4c] sm:$0x1]
        %v314 = vsel %vm285, 0, %v313
        %315 = vst [vmem:[#allocation2 + $0x4c] sm:$0x1] %v314
        %v316 = vld [vmem:[%s2] sm:$0x3]
        %v317 = vld [vmem:[%s222] sm:$0xf]
        %v318 = vld [vmem:[%s222 + $0x4] sm:$0xf]
        %v319 = vld [vmem:[%s222 + $0x8] sm:$0xf]
        %v320 = vld [vmem:[%s222 + $0xc] sm:$0xf]
        %v321 = vld [vmem:[%s222 + $0x10] sm:$0xf]
        %v322 = vld [vmem:[%s222 + $0x14] sm:$0xf]
        %v323 = vld [vmem:[%s222 + $0x18] sm:$0xf]
        %v324 = vld [vmem:[%s222 + $0x1c] sm:$0xf]
        %v325 = vunpack.c.l.bf16 %v317
        %v326 = vunpack.c.l.bf16 %v318
        %v327 = vunpack.c.l.bf16 %v319
        %v328 = vunpack.c.l.bf16 %v320
        %v329 = vunpack.c.l.bf16 %v321
        %v330 = vunpack.c.l.bf16 %v322
        %v331 = vunpack.c.l.bf16 %v323
        %v332 = vunpack.c.l.bf16 %v324
        %v333 = vperm.slane %v316, 0
        %v334 = vmul.f32 %v325, %v333
        %v335 = vmul.f32 %v326, %v333
        %v336 = vmul.f32 %v327, %v333
        %v337 = vmul.f32 %v328, %v333
        %v338 = vmul.f32 %v329, %v333
        %v339 = vmul.f32 %v330, %v333
        %v340 = vmul.f32 %v331, %v333
        %v341 = vmul.f32 %v332, %v333
        %v342 = vperm.slane %v316, 1
        %v343 = vadd.f32 %v334, %v342
        %v344 = vadd.f32 %v335, %v342
        %v345 = vadd.f32 %v336, %v342
        %v346 = vadd.f32 %v337, %v342
        %v347 = vadd.f32 %v338, %v342
        %v348 = vadd.f32 %v339, %v342
        %v349 = vadd.f32 %v340, %v342
        %v350 = vadd.f32 %v341, %v342
        %v351 = vmax.f32 %v343, 0.0
        %v352 = vmax.f32 %v344, 0.0
        %v353 = vmax.f32 %v345, 0.0
        %v354 = vmax.f32 %v346, 0.0
        %v355 = vmax.f32 %v347, 0.0
        %v356 = vmax.f32 %v348, 0.0
        %v357 = vmax.f32 %v349, 0.0
        %v358 = vmax.f32 %v350, 0.0
        %v359 = vpack.c.bf16 %v351, %v351
        %v360 = vpack.c.bf16 %v352, %v352
        %v361 = vpack.c.bf16 %v353, %v353
        %v362 = vpack.c.bf16 %v354, %v354
        %v363 = vpack.c.bf16 %v355, %v355
        %v364 = vpack.c.bf16 %v356, %v356
        %v365 = vpack.c.bf16 %v357, %v357
        %v366 = vpack.c.bf16 %v358, %v358
        %v368 = vshrl.u32 %v359, 16
        %v370 = vrot.slane %v368, 7
        %v371 = vshll.u32 %v359, 16
        %v373 = vor.u32 %v370, %v371
        %v374 = vrot.slane %v370, 4
        %v376 = vshrl.u32 %v360, 16
        %v378 = vrot.slane %v376, 7
        %v379 = vshll.u32 %v360, 16
        %v381 = vor.u32 %v378, %v379
        %v382 = vrot.slane %v378, 4
        %v384 = vshrl.u32 %v361, 16
        %v386 = vrot.slane %v384, 7
        %v387 = vshll.u32 %v361, 16
        %v389 = vor.u32 %v386, %v387
        %v390 = vrot.slane %v386, 4
        %v392 = vshrl.u32 %v362, 16
        %v394 = vrot.slane %v392, 7
        %v395 = vshll.u32 %v362, 16
        %v397 = vor.u32 %v394, %v395
        %v398 = vrot.slane %v394, 4
        %v400 = vshrl.u32 %v363, 16
        %v402 = vrot.slane %v400, 7
        %v403 = vshll.u32 %v363, 16
        %v405 = vor.u32 %v402, %v403
        %v406 = vrot.slane %v402, 4
        %v408 = vshrl.u32 %v364, 16
        %v410 = vrot.slane %v408, 7
        %v411 = vshll.u32 %v364, 16
        %v413 = vor.u32 %v410, %v411
        %v414 = vrot.slane %v410, 4
        %v416 = vshrl.u32 %v365, 16
        %v418 = vrot.slane %v416, 7
        %v419 = vshll.u32 %v365, 16
        %v421 = vor.u32 %v418, %v419
        %v422 = vrot.slane %v418, 4
        %v424 = vshrl.u32 %v366, 16
        %v426 = vrot.slane %v424, 7
        %v427 = vshll.u32 %v366, 16
        %v429 = vor.u32 %v426, %v427
        %v430 = vrot.slane %v426, 4
        %s447 = scalar_lea.vmem [#allocation2], 8
        %vm448 = vcmask 1043456
        %vm449 = vmand %vm448, %vm284
        %v450 = vld [vmem:[%s447] sm:$0xf]
        %v451 = vsel %vm449, %v373, %v450
        %452 = vst [vmem:[%s447] sm:$0xf] %v451
        %v453 = vld [vmem:[%s447 + $0x4] sm:$0x1]
        %v454 = vsel %vm253, %v374, %v453
        %455 = vst [vmem:[%s447 + $0x4] sm:$0x1] %v454
        %v456 = vld [vmem:[%s447 + $0x8] sm:$0xf]
        %v457 = vsel %vm449, %v381, %v456
        %458 = vst [vmem:[%s447 + $0x8] sm:$0xf] %v457
        %v459 = vld [vmem:[%s447 + $0xc] sm:$0x1]
        %v460 = vsel %vm253, %v382, %v459
        %461 = vst [vmem:[%s447 + $0xc] sm:$0x1] %v460
        %v462 = vld [vmem:[%s447 + $0x10] sm:$0xf]
        %v463 = vsel %vm449, %v389, %v462
        %464 = vst [vmem:[%s447 + $0x10] sm:$0xf] %v463
        %v465 = vld [vmem:[%s447 + $0x14] sm:$0x1]
        %v466 = vsel %vm253, %v390, %v465
        %467 = vst [vmem:[%s447 + $0x14] sm:$0x1] %v466
        %v468 = vld [vmem:[%s447 + $0x18] sm:$0xf]
        %v469 = vsel %vm449, %v397, %v468
        %470 = vst [vmem:[%s447 + $0x18] sm:$0xf] %v469
        %v471 = vld [vmem:[%s447 + $0x1c] sm:$0x1]
        %v472 = vsel %vm253, %v398, %v471
        %473 = vst [vmem:[%s447 + $0x1c] sm:$0x1] %v472
        %v474 = vld [vmem:[%s447 + $0x20] sm:$0xf]
        %v475 = vsel %vm449, %v405, %v474
        %476 = vst [vmem:[%s447 + $0x20] sm:$0xf] %v475
        %v477 = vld [vmem:[%s447 + $0x24] sm:$0x1]
        %v478 = vsel %vm253, %v406, %v477
        %479 = vst [vmem:[%s447 + $0x24] sm:$0x1] %v478
        %v480 = vld [vmem:[%s447 + $0x28] sm:$0xf]
        %v481 = vsel %vm449, %v413, %v480
        %482 = vst [vmem:[%s447 + $0x28] sm:$0xf] %v481
        %v483 = vld [vmem:[%s447 + $0x2c] sm:$0x1]
        %v484 = vsel %vm253, %v414, %v483
        %485 = vst [vmem:[%s447 + $0x2c] sm:$0x1] %v484
        %v486 = vld [vmem:[%s447 + $0x30] sm:$0xf]
        %v487 = vsel %vm449, %v421, %v486
        %488 = vst [vmem:[%s447 + $0x30] sm:$0xf] %v487
        %v489 = vld [vmem:[%s447 + $0x34] sm:$0x1]
        %v490 = vsel %vm253, %v422, %v489
        %491 = vst [vmem:[%s447 + $0x34] sm:$0x1] %v490
        %v492 = vld [vmem:[%s447 + $0x38] sm:$0xf]
        %v493 = vsel %vm449, %v429, %v492
        %494 = vst [vmem:[%s447 + $0x38] sm:$0xf] %v493
        %v495 = vld [vmem:[%s447 + $0x3c] sm:$0x1]
        %v496 = vsel %vm253, %v430, %v495
        %497 = vst [vmem:[%s447 + $0x3c] sm:$0x1] %v496
      $region36: #{basic_block_forward.4} parent=31 // pred_fallthru
        _
      %s498 = smul.u32 %s241, 2
      %s499 = smul.addr %s498, 4
      %s500 = scalar_lea.vmem [#allocation2], %s499
      %v501 = vld [vmem:[%s500] sm:$0xf]
      %v502 = vld [vmem:[%s500 + $0x8] sm:$0xf]
      %v503 = vld [vmem:[%s500 + $0x10] sm:$0xf]
      %v504 = vld [vmem:[%s500 + $0x18] sm:$0xf]
      %v505 = vld [vmem:[%s500 + $0x20] sm:$0xf]
      %v506 = vld [vmem:[%s500 + $0x28] sm:$0xf]
      %v507 = vld [vmem:[%s500 + $0x30] sm:$0xf]
      %v508 = vld [vmem:[%s500 + $0x38] sm:$0xf]
      %v509 = vld [vmem:[%s1] sm:$0xf]
      %v510 = vld [vmem:[%s1 + $0x4] sm:$0xf]
      %v511 = vld [vmem:[%s1 + $0x8] sm:$0xf]
      %v512 = vld [vmem:[%s1 + $0xc] sm:$0xf]
      %v513 = vld [vmem:[%s1 + $0x10] sm:$0xf]
      %v514 = vld [vmem:[%s1 + $0x14] sm:$0xf]
      %v515 = vld [vmem:[%s1 + $0x18] sm:$0xf]
      %v516 = vld [vmem:[%s1 + $0x1c] sm:$0xf]
      %v517 = vld [vmem:[%s1 + $0x20] sm:$0xf]
      %v518 = vld [vmem:[%s1 + $0x24] sm:$0xf]
      %v519 = vld [vmem:[%s1 + $0x28] sm:$0xf]
      %v520 = vld [vmem:[%s1 + $0x2c] sm:$0xf]
      %v521 = vld [vmem:[%s1 + $0x30] sm:$0xf]
      %v522 = vld [vmem:[%s1 + $0x34] sm:$0xf]
      %v523 = vld [vmem:[%s1 + $0x38] sm:$0xf]
      %v524 = vld [vmem:[%s1 + $0x3c] sm:$0xf]
      %v525 = vld [vmem:[%s500 + $0x4] sm:$0x1]
      %v526 = vld [vmem:[%s500 + $0xc] sm:$0x1]
      %v527 = vld [vmem:[%s500 + $0x14] sm:$0x1]
      %v528 = vld [vmem:[%s500 + $0x1c] sm:$0x1]
      %v529 = vld [vmem:[%s500 + $0x24] sm:$0x1]
      %v530 = vld [vmem:[%s500 + $0x2c] sm:$0x1]
      %v531 = vld [vmem:[%s500 + $0x34] sm:$0x1]
      %v532 = vld [vmem:[%s500 + $0x3c] sm:$0x1]
      %vm533 = vsmask.f32 3328
      %vm534 = vsmask.f32 7440
      %vm535 = vmor %vm533, %vm534
      %v537 = vshrl.u32 %v501, 16
      %v539 = vrot.slane %v537, 4
      %v540 = vshll.u32 %v501, 16
      %v542 = vrot.slane %v540, 5
      %v543 = vor.u32 %v539, %v542
      %v544 = vrot.slane %v543, 4
      %v546 = vshll.u32 %v525, 16
      %v548 = vrot.slane %v546, 5
      %v549 = vsel %vm535, %v544, %v548
      %v551 = vshrl.u32 %v502, 16
      %v553 = vrot.slane %v551, 4
      %v554 = vshll.u32 %v502, 16
      %v556 = vrot.slane %v554, 5
      %v557 = vor.u32 %v553, %v556
      %v558 = vrot.slane %v557, 4
      %v560 = vshll.u32 %v526, 16
      %v562 = vrot.slane %v560, 5
      %v563 = vsel %vm535, %v558, %v562
      %v565 = vshrl.u32 %v503, 16
      %v567 = vrot.slane %v565, 4
      %v568 = vshll.u32 %v503, 16
      %v570 = vrot.slane %v568, 5
      %v571 = vor.u32 %v567, %v570
      %v572 = vrot.slane %v571, 4
      %v574 = vshll.u32 %v527, 16
      %v576 = vrot.slane %v574, 5
      %v577 = vsel %vm535, %v572, %v576
      %v579 = vshrl.u32 %v504, 16
      %v581 = vrot.slane %v579, 4
      %v582 = vshll.u32 %v504, 16
      %v584 = vrot.slane %v582, 5
      %v585 = vor.u32 %v581, %v584
      %v586 = vrot.slane %v585, 4
      %v588 = vshll.u32 %v528, 16
      %v590 = vrot.slane %v588, 5
      %v591 = vsel %vm535, %v586, %v590
      %v593 = vshrl.u32 %v505, 16
      %v595 = vrot.slane %v593, 4
      %v596 = vshll.u32 %v505, 16
      %v598 = vrot.slane %v596, 5
      %v599 = vor.u32 %v595, %v598
      %v600 = vrot.slane %v599, 4
      %v602 = vshll.u32 %v529, 16
      %v604 = vrot.slane %v602, 5
      %v605 = vsel %vm535, %v600, %v604
      %v607 = vshrl.u32 %v506, 16
      %v609 = vrot.slane %v607, 4
      %v610 = vshll.u32 %v506, 16
      %v612 = vrot.slane %v610, 5
      %v613 = vor.u32 %v609, %v612
      %v614 = vrot.slane %v613, 4
      %v616 = vshll.u32 %v530, 16
      %v618 = vrot.slane %v616, 5
      %v619 = vsel %vm535, %v614, %v618
      %v621 = vshrl.u32 %v507, 16
      %v623 = vrot.slane %v621, 4
      %v624 = vshll.u32 %v507, 16
      %v626 = vrot.slane %v624, 5
      %v627 = vor.u32 %v623, %v626
      %v628 = vrot.slane %v627, 4
      %v630 = vshll.u32 %v531, 16
      %v632 = vrot.slane %v630, 5
      %v633 = vsel %vm535, %v628, %v632
      %v635 = vshrl.u32 %v508, 16
      %v637 = vrot.slane %v635, 4
      %v638 = vshll.u32 %v508, 16
      %v640 = vrot.slane %v638, 5
      %v641 = vor.u32 %v637, %v640
      %v642 = vrot.slane %v641, 4
      %v644 = vshll.u32 %v532, 16
      %v646 = vrot.slane %v644, 5
      %v647 = vsel %vm535, %v642, %v646
      %s648 = scalar_lea.vmem %s1, 64
      %v649 = vld [vmem:[%s648] sm:$0xf]
      %v650 = vld [vmem:[%s648 + $0x4] sm:$0xf]
      %v651 = vld [vmem:[%s648 + $0x8] sm:$0xf]
      %v652 = vld [vmem:[%s648 + $0xc] sm:$0xf]
      %v653 = vld [vmem:[%s648 + $0x10] sm:$0xf]
      %v654 = vld [vmem:[%s648 + $0x14] sm:$0xf]
      %v655 = vld [vmem:[%s648 + $0x18] sm:$0xf]
      %v656 = vld [vmem:[%s648 + $0x1c] sm:$0xf]
      %v657 = vld [vmem:[%s648 + $0x20] sm:$0xf]
      %v658 = vld [vmem:[%s648 + $0x24] sm:$0xf]
      %v659 = vld [vmem:[%s648 + $0x28] sm:$0xf]
      %v660 = vld [vmem:[%s648 + $0x2c] sm:$0xf]
      %v661 = vld [vmem:[%s648 + $0x30] sm:$0xf]
      %v662 = vld [vmem:[%s648 + $0x34] sm:$0xf]
      %v663 = vld [vmem:[%s648 + $0x38] sm:$0xf]
      %v664 = vld [vmem:[%s648 + $0x3c] sm:$0xf]
      %v665 = vunpack.c.l.b16 %v549
      %v666 = vunpack.c.l.b16 %v563
      %v667 = vunpack.c.l.b16 %v577
      %v668 = vunpack.c.l.b16 %v591
      %v669 = vunpack.c.l.b16 %v605
      %v670 = vunpack.c.l.b16 %v619
      %v671 = vunpack.c.l.b16 %v633
      %v672 = vunpack.c.l.b16 %v647
      %v673 = vpack.c.b16 %v666, %v665
      %v674 = vpack.c.b16 %v668, %v667
      %v675 = vpack.c.b16 %v670, %v669
      %v676 = vpack.c.b16 %v672, %v671
      %v697 = vunpack.c.l.b16 %v649
      %v698 = vunpack.c.l.b16 %v650
      %v699 = vunpack.c.l.b16 %v651
      %v700 = vunpack.c.l.b16 %v652
      %v701 = vunpack.c.l.b16 %v653
      %v702 = vunpack.c.l.b16 %v654
      %v703 = vunpack.c.l.b16 %v655
      %v704 = vunpack.c.l.b16 %v656
      %v705 = vunpack.c.l.b16 %v657
      %v706 = vunpack.c.l.b16 %v658
      %v707 = vunpack.c.l.b16 %v659
      %v708 = vunpack.c.l.b16 %v660
      %v709 = vunpack.c.l.b16 %v661
      %v710 = vunpack.c.l.b16 %v662
      %v711 = vunpack.c.l.b16 %v663
      %v712 = vunpack.c.l.b16 %v664
      %v713 = vpack.c.b16 %v698, %v697
      %v714 = vpack.c.b16 %v700, %v699
      %v715 = vpack.c.b16 %v702, %v701
      %v716 = vpack.c.b16 %v704, %v703
      %v717 = vpack.c.b16 %v706, %v705
      %v718 = vpack.c.b16 %v708, %v707
      %v719 = vpack.c.b16 %v710, %v709
      %v720 = vpack.c.b16 %v712, %v711
      %729 = vmatpush.bf16.msra.mxu0 %v720
      %730 = vmatpush.bf16.msra.mxu0 %v719
      %731 = vmatpush.bf16.msra.mxu0 %v718
      %732 = vmatpush.bf16.msra.mxu0 %v717
      %733 = vmatpush.bf16.msra.mxu0 %v716
      %734 = vmatpush.bf16.msra.mxu0 %v715
      %735 = vmatpush.bf16.msra.mxu0 %v714
      %736 = vmatpush.bf16.msra.mxu0 %v713
      %737 = vmatmul.bf16.gmra.mxu0 %v673
      %v738 = vpop.f32.mrf.mxu0
      %v739 = vadd.f32 0.0, %v738
      %v740 = vpop.f32.mrf.mxu0
      %v741 = vadd.f32 0.0, %v740
      %742 = vmatmul.bf16.gmra.mxu0 %v674
      %v743 = vpop.f32.mrf.mxu0
      %v744 = vadd.f32 0.0, %v743
      %v745 = vpop.f32.mrf.mxu0
      %v746 = vadd.f32 0.0, %v745
      %747 = vmatmul.bf16.gmra.mxu0 %v675
      %v748 = vpop.f32.mrf.mxu0
      %v749 = vadd.f32 0.0, %v748
      %v750 = vpop.f32.mrf.mxu0
      %v751 = vadd.f32 0.0, %v750
      %752 = vmatmul.bf16.gmra.mxu0 %v676
      %v753 = vpop.f32.mrf.mxu0
      %v754 = vadd.f32 0.0, %v753
      %v755 = vpop.f32.mrf.mxu0
      %v756 = vadd.f32 0.0, %v755
      %757 = vdwg.mxu0
      %v766 = vunpack.c.l.b16 %v501
      %v767 = vunpack.c.l.b16 %v502
      %v768 = vunpack.c.l.b16 %v503
      %v769 = vunpack.c.l.b16 %v504
      %v770 = vunpack.c.l.b16 %v505
      %v771 = vunpack.c.l.b16 %v506
      %v772 = vunpack.c.l.b16 %v507
      %v773 = vunpack.c.l.b16 %v508
      %v774 = vpack.c.b16 %v767, %v766
      %v775 = vpack.c.b16 %v769, %v768
      %v776 = vpack.c.b16 %v771, %v770
      %v777 = vpack.c.b16 %v773, %v772
      %v798 = vunpack.c.l.b16 %v509
      %v799 = vunpack.c.l.b16 %v510
      %v800 = vunpack.c.l.b16 %v511
      %v801 = vunpack.c.l.b16 %v512
      %v802 = vunpack.c.l.b16 %v513
      %v803 = vunpack.c.l.b16 %v514
      %v804 = vunpack.c.l.b16 %v515
      %v805 = vunpack.c.l.b16 %v516
      %v806 = vunpack.c.l.b16 %v517
      %v807 = vunpack.c.l.b16 %v518
      %v808 = vunpack.c.l.b16 %v519
      %v809 = vunpack.c.l.b16 %v520
      %v810 = vunpack.c.l.b16 %v521
      %v811 = vunpack.c.l.b16 %v522
      %v812 = vunpack.c.l.b16 %v523
      %v813 = vunpack.c.l.b16 %v524
      %v814 = vpack.c.b16 %v799, %v798
      %v815 = vpack.c.b16 %v801, %v800
      %v816 = vpack.c.b16 %v803, %v802
      %v817 = vpack.c.b16 %v805, %v804
      %v818 = vpack.c.b16 %v807, %v806
      %v819 = vpack.c.b16 %v809, %v808
      %v820 = vpack.c.b16 %v811, %v810
      %v821 = vpack.c.b16 %v813, %v812
      %830 = vmatpush.bf16.msra.mxu0 %v821
      %831 = vmatpush.bf16.msra.mxu0 %v820
      %832 = vmatpush.bf16.msra.mxu0 %v819
      %833 = vmatpush.bf16.msra.mxu0 %v818
      %834 = vmatpush.bf16.msra.mxu0 %v817
      %835 = vmatpush.bf16.msra.mxu0 %v816
      %836 = vmatpush.bf16.msra.mxu0 %v815
      %837 = vmatpush.bf16.msra.mxu0 %v814
      %838 = vmatmul.bf16.gmra.mxu0 %v774
      %v839 = vpop.f32.mrf.mxu0
      %v840 = vadd.f32 %v739, %v839
      %v841 = vpop.f32.mrf.mxu0
      %v842 = vadd.f32 %v741, %v841
      %843 = vmatmul.bf16.gmra.mxu0 %v775
      %v844 = vpop.f32.mrf.mxu0
      %v845 = vadd.f32 %v744, %v844
      %v846 = vpop.f32.mrf.mxu0
      %v847 = vadd.f32 %v746, %v846
      %848 = vmatmul.bf16.gmra.mxu0 %v776
      %v849 = vpop.f32.mrf.mxu0
      %v850 = vadd.f32 %v749, %v849
      %v851 = vpop.f32.mrf.mxu0
      %v852 = vadd.f32 %v751, %v851
      %853 = vmatmul.bf16.gmra.mxu0 %v777
      %v854 = vpop.f32.mrf.mxu0
      %v855 = vadd.f32 %v754, %v854
      %v856 = vpop.f32.mrf.mxu0
      %v857 = vadd.f32 %v756, %v856
      %858 = vdwg.mxu0
      %v859 = vld [vmem:[%s500] sm:$0xe]
      %v860 = vld [vmem:[%s500 + $0x8] sm:$0xe]
      %v861 = vld [vmem:[%s500 + $0x10] sm:$0xe]
      %v862 = vld [vmem:[%s500 + $0x18] sm:$0xe]
      %v863 = vld [vmem:[%s500 + $0x20] sm:$0xe]
      %v864 = vld [vmem:[%s500 + $0x28] sm:$0xe]
      %v865 = vld [vmem:[%s500 + $0x30] sm:$0xe]
      %v866 = vld [vmem:[%s500 + $0x38] sm:$0xe]
      %vm883 = vcmask 1042432
      %vm884 = vcmask 1046532
      %vm885 = vmor %vm883, %vm884
      %v886 = vrot.slane %v859, 5
      %v887 = vrot.slane %v886, 4
      %v888 = vrot.slane %v525, 5
      %v889 = vsel %vm885, %v887, %v888
      %v890 = vrot.slane %v860, 5
      %v891 = vrot.slane %v890, 4
      %v892 = vrot.slane %v526, 5
      %v893 = vsel %vm885, %v891, %v892
      %v894 = vrot.slane %v861, 5
      %v895 = vrot.slane %v894, 4
      %v896 = vrot.slane %v527, 5
      %v897 = vsel %vm885, %v895, %v896
      %v898 = vrot.slane %v862, 5
      %v899 = vrot.slane %v898, 4
      %v900 = vrot.slane %v528, 5
      %v901 = vsel %vm885, %v899, %v900
      %v902 = vrot.slane %v863, 5
      %v903 = vrot.slane %v902, 4
      %v904 = vrot.slane %v529, 5
      %v905 = vsel %vm885, %v903, %v904
      %v906 = vrot.slane %v864, 5
      %v907 = vrot.slane %v906, 4
      %v908 = vrot.slane %v530, 5
      %v909 = vsel %vm885, %v907, %v908
      %v910 = vrot.slane %v865, 5
      %v911 = vrot.slane %v910, 4
      %v912 = vrot.slane %v531, 5
      %v913 = vsel %vm885, %v911, %v912
      %v914 = vrot.slane %v866, 5
      %v915 = vrot.slane %v914, 4
      %v916 = vrot.slane %v532, 5
      %v917 = vsel %vm885, %v915, %v916
      %s918 = scalar_lea.vmem %s1, 128
      %v919 = vld [vmem:[%s918] sm:$0xf]
      %v920 = vld [vmem:[%s918 + $0x4] sm:$0xf]
      %v921 = vld [vmem:[%s918 + $0x8] sm:$0xf]
      %v922 = vld [vmem:[%s918 + $0xc] sm:$0xf]
      %v923 = vld [vmem:[%s918 + $0x10] sm:$0xf]
      %v924 = vld [vmem:[%s918 + $0x14] sm:$0xf]
      %v925 = vld [vmem:[%s918 + $0x18] sm:$0xf]
      %v926 = vld [vmem:[%s918 + $0x1c] sm:$0xf]
      %v927 = vld [vmem:[%s918 + $0x20] sm:$0xf]
      %v928 = vld [vmem:[%s918 + $0x24] sm:$0xf]
      %v929 = vld [vmem:[%s918 + $0x28] sm:$0xf]
      %v930 = vld [vmem:[%s918 + $0x2c] sm:$0xf]
      %v931 = vld [vmem:[%s918 + $0x30] sm:$0xf]
      %v932 = vld [vmem:[%s918 + $0x34] sm:$0xf]
      %v933 = vld [vmem:[%s918 + $0x38] sm:$0xf]
      %v934 = vld [vmem:[%s918 + $0x3c] sm:$0xf]
      %v935 = vunpack.c.l.b16 %v889
      %v936 = vunpack.c.l.b16 %v893
      %v937 = vunpack.c.l.b16 %v897
      %v938 = vunpack.c.l.b16 %v901
      %v939 = vunpack.c.l.b16 %v905
      %v940 = vunpack.c.l.b16 %v909
      %v941 = vunpack.c.l.b16 %v913
      %v942 = vunpack.c.l.b16 %v917
      %v943 = vpack.c.b16 %v936, %v935
      %v944 = vpack.c.b16 %v938, %v937
      %v945 = vpack.c.b16 %v940, %v939
      %v946 = vpack.c.b16 %v942, %v941
      %v967 = vunpack.c.l.b16 %v919
      %v968 = vunpack.c.l.b16 %v920
      %v969 = vunpack.c.l.b16 %v921
      %v970 = vunpack.c.l.b16 %v922
      %v971 = vunpack.c.l.b16 %v923
      %v972 = vunpack.c.l.b16 %v924
      %v973 = vunpack.c.l.b16 %v925
      %v974 = vunpack.c.l.b16 %v926
      %v975 = vunpack.c.l.b16 %v927
      %v976 = vunpack.c.l.b16 %v928
      %v977 = vunpack.c.l.b16 %v929
      %v978 = vunpack.c.l.b16 %v930
      %v979 = vunpack.c.l.b16 %v931
      %v980 = vunpack.c.l.b16 %v932
      %v981 = vunpack.c.l.b16 %v933
      %v982 = vunpack.c.l.b16 %v934
      %v983 = vpack.c.b16 %v968, %v967
      %v984 = vpack.c.b16 %v970, %v969
      %v985 = vpack.c.b16 %v972, %v971
      %v986 = vpack.c.b16 %v974, %v973
      %v987 = vpack.c.b16 %v976, %v975
      %v988 = vpack.c.b16 %v978, %v977
      %v989 = vpack.c.b16 %v980, %v979
      %v990 = vpack.c.b16 %v982, %v981
      %999 = vmatpush.bf16.msra.mxu0 %v990
      %1000 = vmatpush.bf16.msra.mxu0 %v989
      %1001 = vmatpush.bf16.msra.mxu0 %v988
      %1002 = vmatpush.bf16.msra.mxu0 %v987
      %1003 = vmatpush.bf16.msra.mxu0 %v986
      %1004 = vmatpush.bf16.msra.mxu0 %v985
      %1005 = vmatpush.bf16.msra.mxu0 %v984
      %1006 = vmatpush.bf16.msra.mxu0 %v983
      %1007 = vmatmul.bf16.gmra.mxu0 %v943
      %v1008 = vpop.f32.mrf.mxu0
      %v1009 = vadd.f32 0.0, %v1008
      %v1010 = vpop.f32.mrf.mxu0
      %v1011 = vadd.f32 0.0, %v1010
      %1012 = vmatmul.bf16.gmra.mxu0 %v944
      %v1013 = vpop.f32.mrf.mxu0
      %v1014 = vadd.f32 0.0, %v1013
      %v1015 = vpop.f32.mrf.mxu0
      %v1016 = vadd.f32 0.0, %v1015
      %1017 = vmatmul.bf16.gmra.mxu0 %v945
      %v1018 = vpop.f32.mrf.mxu0
      %v1019 = vadd.f32 0.0, %v1018
      %v1020 = vpop.f32.mrf.mxu0
      %v1021 = vadd.f32 0.0, %v1020
      %1022 = vmatmul.bf16.gmra.mxu0 %v946
      %v1023 = vpop.f32.mrf.mxu0
      %v1024 = vadd.f32 0.0, %v1023
      %v1025 = vpop.f32.mrf.mxu0
      %v1026 = vadd.f32 0.0, %v1025
      %1027 = vdwg.mxu0
      %v1028 = vadd.f32 %v840, %v1009
      %v1029 = vadd.f32 %v842, %v1011
      %v1030 = vadd.f32 %v845, %v1014
      %v1031 = vadd.f32 %v847, %v1016
      %v1032 = vadd.f32 %v850, %v1019
      %v1033 = vadd.f32 %v852, %v1021
      %v1034 = vadd.f32 %v855, %v1024
      %v1035 = vadd.f32 %v857, %v1026
      %s1036 = sadd.s32 %s241, 1
      %s1037 = smul.u32 %s1036, 2
      %s1038 = smul.addr %s1037, 4
      %s1039 = scalar_lea.vmem [#allocation2], %s1038
      %v1040 = vld [vmem:[%s1039] sm:$0xf]
      %v1041 = vld [vmem:[%s1039 + $0x8] sm:$0xf]
      %v1042 = vld [vmem:[%s1039 + $0x10] sm:$0xf]
      %v1043 = vld [vmem:[%s1039 + $0x18] sm:$0xf]
      %v1044 = vld [vmem:[%s1039 + $0x20] sm:$0xf]
      %v1045 = vld [vmem:[%s1039 + $0x28] sm:$0xf]
      %v1046 = vld [vmem:[%s1039 + $0x30] sm:$0xf]
      %v1047 = vld [vmem:[%s1039 + $0x38] sm:$0xf]
      %s1048 = scalar_lea.vmem %s1, 192
      %v1049 = vld [vmem:[%s1048] sm:$0xf]
      %v1050 = vld [vmem:[%s1048 + $0x4] sm:$0xf]
      %v1051 = vld [vmem:[%s1048 + $0x8] sm:$0xf]
      %v1052 = vld [vmem:[%s1048 + $0xc] sm:$0xf]
      %v1053 = vld [vmem:[%s1048 + $0x10] sm:$0xf]
      %v1054 = vld [vmem:[%s1048 + $0x14] sm:$0xf]
      %v1055 = vld [vmem:[%s1048 + $0x18] sm:$0xf]
      %v1056 = vld [vmem:[%s1048 + $0x1c] sm:$0xf]
      %v1057 = vld [vmem:[%s1048 + $0x20] sm:$0xf]
      %v1058 = vld [vmem:[%s1048 + $0x24] sm:$0xf]
      %v1059 = vld [vmem:[%s1048 + $0x28] sm:$0xf]
      %v1060 = vld [vmem:[%s1048 + $0x2c] sm:$0xf]
      %v1061 = vld [vmem:[%s1048 + $0x30] sm:$0xf]
      %v1062 = vld [vmem:[%s1048 + $0x34] sm:$0xf]
      %v1063 = vld [vmem:[%s1048 + $0x38] sm:$0xf]
      %v1064 = vld [vmem:[%s1048 + $0x3c] sm:$0xf]
      %v1073 = vunpack.c.l.b16 %v1040
      %v1074 = vunpack.c.l.b16 %v1041
      %v1075 = vunpack.c.l.b16 %v1042
      %v1076 = vunpack.c.l.b16 %v1043
      %v1077 = vunpack.c.l.b16 %v1044
      %v1078 = vunpack.c.l.b16 %v1045
      %v1079 = vunpack.c.l.b16 %v1046
      %v1080 = vunpack.c.l.b16 %v1047
      %v1081 = vpack.c.b16 %v1074, %v1073
      %v1082 = vpack.c.b16 %v1076, %v1075
      %v1083 = vpack.c.b16 %v1078, %v1077
      %v1084 = vpack.c.b16 %v1080, %v1079
      %v1105 = vunpack.c.l.b16 %v1049
      %v1106 = vunpack.c.l.b16 %v1050
      %v1107 = vunpack.c.l.b16 %v1051
      %v1108 = vunpack.c.l.b16 %v1052
      %v1109 = vunpack.c.l.b16 %v1053
      %v1110 = vunpack.c.l.b16 %v1054
      %v1111 = vunpack.c.l.b16 %v1055
      %v1112 = vunpack.c.l.b16 %v1056
      %v1113 = vunpack.c.l.b16 %v1057
      %v1114 = vunpack.c.l.b16 %v1058
      %v1115 = vunpack.c.l.b16 %v1059
      %v1116 = vunpack.c.l.b16 %v1060
      %v1117 = vunpack.c.l.b16 %v1061
      %v1118 = vunpack.c.l.b16 %v1062
      %v1119 = vunpack.c.l.b16 %v1063
      %v1120 = vunpack.c.l.b16 %v1064
      %v1121 = vpack.c.b16 %v1106, %v1105
      %v1122 = vpack.c.b16 %v1108, %v1107
      %v1123 = vpack.c.b16 %v1110, %v1109
      %v1124 = vpack.c.b16 %v1112, %v1111
      %v1125 = vpack.c.b16 %v1114, %v1113
      %v1126 = vpack.c.b16 %v1116, %v1115
      %v1127 = vpack.c.b16 %v1118, %v1117
      %v1128 = vpack.c.b16 %v1120, %v1119
      %1137 = vmatpush.bf16.msra.mxu0 %v1128
      %1138 = vmatpush.bf16.msra.mxu0 %v1127
      %1139 = vmatpush.bf16.msra.mxu0 %v1126
      %1140 = vmatpush.bf16.msra.mxu0 %v1125
      %1141 = vmatpush.bf16.msra.mxu0 %v1124
      %1142 = vmatpush.bf16.msra.mxu0 %v1123
      %1143 = vmatpush.bf16.msra.mxu0 %v1122
      %1144 = vmatpush.bf16.msra.mxu0 %v1121
      %1145 = vmatmul.bf16.gmra.mxu0 %v1081
      %v1146 = vpop.f32.mrf.mxu0
      %v1147 = vadd.f32 0.0, %v1146
      %v1148 = vpop.f32.mrf.mxu0
      %v1149 = vadd.f32 0.0, %v1148
      %1150 = vmatmul.bf16.gmra.mxu0 %v1082
      %v1151 = vpop.f32.mrf.mxu0
      %v1152 = vadd.f32 0.0, %v1151
      %v1153 = vpop.f32.mrf.mxu0
      %v1154 = vadd.f32 0.0, %v1153
      %1155 = vmatmul.bf16.gmra.mxu0 %v1083
      %v1156 = vpop.f32.mrf.mxu0
      %v1157 = vadd.f32 0.0, %v1156
      %v1158 = vpop.f32.mrf.mxu0
      %v1159 = vadd.f32 0.0, %v1158
      %1160 = vmatmul.bf16.gmra.mxu0 %v1084
      %v1161 = vpop.f32.mrf.mxu0
      %v1162 = vadd.f32 0.0, %v1161
      %v1163 = vpop.f32.mrf.mxu0
      %v1164 = vadd.f32 0.0, %v1163
      %1165 = vdwg.mxu0
      %v1166 = vadd.f32 %v1028, %v1147
      %v1167 = vadd.f32 %v1029, %v1149
      %v1168 = vadd.f32 %v1030, %v1152
      %v1169 = vadd.f32 %v1031, %v1154
      %v1170 = vadd.f32 %v1032, %v1157
      %v1171 = vadd.f32 %v1033, %v1159
      %v1172 = vadd.f32 %v1034, %v1162
      %v1173 = vadd.f32 %v1035, %v1164
      %v1174 = vld [vmem:[%s1039] sm:$0xf]
      %v1175 = vld [vmem:[%s1039 + $0x4] sm:$0x1]
      %v1176 = vld [vmem:[%s1039 + $0x8] sm:$0xf]
      %v1177 = vld [vmem:[%s1039 + $0xc] sm:$0x1]
      %v1178 = vld [vmem:[%s1039 + $0x10] sm:$0xf]
      %v1179 = vld [vmem:[%s1039 + $0x14] sm:$0x1]
      %v1180 = vld [vmem:[%s1039 + $0x18] sm:$0xf]
      %v1181 = vld [vmem:[%s1039 + $0x1c] sm:$0x1]
      %v1182 = vld [vmem:[%s1039 + $0x20] sm:$0xf]
      %v1183 = vld [vmem:[%s1039 + $0x24] sm:$0x1]
      %v1184 = vld [vmem:[%s1039 + $0x28] sm:$0xf]
      %v1185 = vld [vmem:[%s1039 + $0x2c] sm:$0x1]
      %v1186 = vld [vmem:[%s1039 + $0x30] sm:$0xf]
      %v1187 = vld [vmem:[%s1039 + $0x34] sm:$0x1]
      %v1188 = vld [vmem:[%s1039 + $0x38] sm:$0xf]
      %v1189 = vld [vmem:[%s1039 + $0x3c] sm:$0x1]
      %v1191 = vshrl.u32 %v1174, 16
      %v1193 = vrot.slane %v1191, 4
      %v1194 = vshll.u32 %v1174, 16
      %v1196 = vrot.slane %v1194, 5
      %v1197 = vor.u32 %v1193, %v1196
      %v1198 = vrot.slane %v1197, 4
      %v1200 = vshll.u32 %v1175, 16
      %v1202 = vrot.slane %v1200, 5
      %v1203 = vsel %vm535, %v1198, %v1202
      %v1205 = vshrl.u32 %v1176, 16
      %v1207 = vrot.slane %v1205, 4
      %v1208 = vshll.u32 %v1176, 16
      %v1210 = vrot.slane %v1208, 5
      %v1211 = vor.u32 %v1207, %v1210
      %v1212 = vrot.slane %v1211, 4
      %v1214 = vshll.u32 %v1177, 16
      %v1216 = vrot.slane %v1214, 5
      %v1217 = vsel %vm535, %v1212, %v1216
      %v1219 = vshrl.u32 %v1178, 16
      %v1221 = vrot.slane %v1219, 4
      %v1222 = vshll.u32 %v1178, 16
      %v1224 = vrot.slane %v1222, 5
      %v1225 = vor.u32 %v1221, %v1224
      %v1226 = vrot.slane %v1225, 4
      %v1228 = vshll.u32 %v1179, 16
      %v1230 = vrot.slane %v1228, 5
      %v1231 = vsel %vm535, %v1226, %v1230
      %v1233 = vshrl.u32 %v1180, 16
      %v1235 = vrot.slane %v1233, 4
      %v1236 = vshll.u32 %v1180, 16
      %v1238 = vrot.slane %v1236, 5
      %v1239 = vor.u32 %v1235, %v1238
      %v1240 = vrot.slane %v1239, 4
      %v1242 = vshll.u32 %v1181, 16
      %v1244 = vrot.slane %v1242, 5
      %v1245 = vsel %vm535, %v1240, %v1244
      %v1247 = vshrl.u32 %v1182, 16
      %v1249 = vrot.slane %v1247, 4
      %v1250 = vshll.u32 %v1182, 16
      %v1252 = vrot.slane %v1250, 5
      %v1253 = vor.u32 %v1249, %v1252
      %v1254 = vrot.slane %v1253, 4
      %v1256 = vshll.u32 %v1183, 16
      %v1258 = vrot.slane %v1256, 5
      %v1259 = vsel %vm535, %v1254, %v1258
      %v1261 = vshrl.u32 %v1184, 16
      %v1263 = vrot.slane %v1261, 4
      %v1264 = vshll.u32 %v1184, 16
      %v1266 = vrot.slane %v1264, 5
      %v1267 = vor.u32 %v1263, %v1266
      %v1268 = vrot.slane %v1267, 4
      %v1270 = vshll.u32 %v1185, 16
      %v1272 = vrot.slane %v1270, 5
      %v1273 = vsel %vm535, %v1268, %v1272
      %v1275 = vshrl.u32 %v1186, 16
      %v1277 = vrot.slane %v1275, 4
      %v1278 = vshll.u32 %v1186, 16
      %v1280 = vrot.slane %v1278, 5
      %v1281 = vor.u32 %v1277, %v1280
      %v1282 = vrot.slane %v1281, 4
      %v1284 = vshll.u32 %v1187, 16
      %v1286 = vrot.slane %v1284, 5
      %v1287 = vsel %vm535, %v1282, %v1286
      %v1289 = vshrl.u32 %v1188, 16
      %v1291 = vrot.slane %v1289, 4
      %v1292 = vshll.u32 %v1188, 16
      %v1294 = vrot.slane %v1292, 5
      %v1295 = vor.u32 %v1291, %v1294
      %v1296 = vrot.slane %v1295, 4
      %v1298 = vshll.u32 %v1189, 16
      %v1300 = vrot.slane %v1298, 5
      %v1301 = vsel %vm535, %v1296, %v1300
      %s1302 = scalar_lea.vmem %s1, 256
      %v1303 = vld [vmem:[%s1302] sm:$0xf]
      %v1304 = vld [vmem:[%s1302 + $0x4] sm:$0xf]
      %v1305 = vld [vmem:[%s1302 + $0x8] sm:$0xf]
      %v1306 = vld [vmem:[%s1302 + $0xc] sm:$0xf]
      %v1307 = vld [vmem:[%s1302 + $0x10] sm:$0xf]
      %v1308 = vld [vmem:[%s1302 + $0x14] sm:$0xf]
      %v1309 = vld [vmem:[%s1302 + $0x18] sm:$0xf]
      %v1310 = vld [vmem:[%s1302 + $0x1c] sm:$0xf]
      %v1311 = vld [vmem:[%s1302 + $0x20] sm:$0xf]
      %v1312 = vld [vmem:[%s1302 + $0x24] sm:$0xf]
      %v1313 = vld [vmem:[%s1302 + $0x28] sm:$0xf]
      %v1314 = vld [vmem:[%s1302 + $0x2c] sm:$0xf]
      %v1315 = vld [vmem:[%s1302 + $0x30] sm:$0xf]
      %v1316 = vld [vmem:[%s1302 + $0x34] sm:$0xf]
      %v1317 = vld [vmem:[%s1302 + $0x38] sm:$0xf]
      %v1318 = vld [vmem:[%s1302 + $0x3c] sm:$0xf]
      %v1319 = vunpack.c.l.b16 %v1203
      %v1320 = vunpack.c.l.b16 %v1217
      %v1321 = vunpack.c.l.b16 %v1231
      %v1322 = vunpack.c.l.b16 %v1245
      %v1323 = vunpack.c.l.b16 %v1259
      %v1324 = vunpack.c.l.b16 %v1273
      %v1325 = vunpack.c.l.b16 %v1287
      %v1326 = vunpack.c.l.b16 %v1301
      %v1327 = vpack.c.b16 %v1320, %v1319
      %v1328 = vpack.c.b16 %v1322, %v1321
      %v1329 = vpack.c.b16 %v1324, %v1323
      %v1330 = vpack.c.b16 %v1326, %v1325
      %v1351 = vunpack.c.l.b16 %v1303
      %v1352 = vunpack.c.l.b16 %v1304
      %v1353 = vunpack.c.l.b16 %v1305
      %v1354 = vunpack.c.l.b16 %v1306
      %v1355 = vunpack.c.l.b16 %v1307
      %v1356 = vunpack.c.l.b16 %v1308
      %v1357 = vunpack.c.l.b16 %v1309
      %v1358 = vunpack.c.l.b16 %v1310
      %v1359 = vunpack.c.l.b16 %v1311
      %v1360 = vunpack.c.l.b16 %v1312
      %v1361 = vunpack.c.l.b16 %v1313
      %v1362 = vunpack.c.l.b16 %v1314
      %v1363 = vunpack.c.l.b16 %v1315
      %v1364 = vunpack.c.l.b16 %v1316
      %v1365 = vunpack.c.l.b16 %v1317
      %v1366 = vunpack.c.l.b16 %v1318
      %v1367 = vpack.c.b16 %v1352, %v1351
      %v1368 = vpack.c.b16 %v1354, %v1353
      %v1369 = vpack.c.b16 %v1356, %v1355
      %v1370 = vpack.c.b16 %v1358, %v1357
      %v1371 = vpack.c.b16 %v1360, %v1359
      %v1372 = vpack.c.b16 %v1362, %v1361
      %v1373 = vpack.c.b16 %v1364, %v1363
      %v1374 = vpack.c.b16 %v1366, %v1365
      %1383 = vmatpush.bf16.msra.mxu0 %v1374
      %1384 = vmatpush.bf16.msra.mxu0 %v1373
      %1385 = vmatpush.bf16.msra.mxu0 %v1372
      %1386 = vmatpush.bf16.msra.mxu0 %v1371
      %1387 = vmatpush.bf16.msra.mxu0 %v1370
      %1388 = vmatpush.bf16.msra.mxu0 %v1369
      %1389 = vmatpush.bf16.msra.mxu0 %v1368
      %1390 = vmatpush.bf16.msra.mxu0 %v1367
      %1391 = vmatmul.bf16.gmra.mxu0 %v1327
      %v1392 = vpop.f32.mrf.mxu0
      %v1393 = vadd.f32 0.0, %v1392
      %v1394 = vpop.f32.mrf.mxu0
      %v1395 = vadd.f32 0.0, %v1394
      %1396 = vmatmul.bf16.gmra.mxu0 %v1328
      %v1397 = vpop.f32.mrf.mxu0
      %v1398 = vadd.f32 0.0, %v1397
      %v1399 = vpop.f32.mrf.mxu0
      %v1400 = vadd.f32 0.0, %v1399
      %1401 = vmatmul.bf16.gmra.mxu0 %v1329
      %v1402 = vpop.f32.mrf.mxu0
      %v1403 = vadd.f32 0.0, %v1402
      %v1404 = vpop.f32.mrf.mxu0
      %v1405 = vadd.f32 0.0, %v1404
      %1406 = vmatmul.bf16.gmra.mxu0 %v1330
      %v1407 = vpop.f32.mrf.mxu0
      %v1408 = vadd.f32 0.0, %v1407
      %v1409 = vpop.f32.mrf.mxu0
      %v1410 = vadd.f32 0.0, %v1409
      %1411 = vdwg.mxu0
      %v1412 = vadd.f32 %v1166, %v1393
      %v1413 = vadd.f32 %v1167, %v1395
      %v1414 = vadd.f32 %v1168, %v1398
      %v1415 = vadd.f32 %v1169, %v1400
      %v1416 = vadd.f32 %v1170, %v1403
      %v1417 = vadd.f32 %v1171, %v1405
      %v1418 = vadd.f32 %v1172, %v1408
      %v1419 = vadd.f32 %v1173, %v1410
      %v1420 = vld [vmem:[%s1039] sm:$0xe]
      %v1421 = vld [vmem:[%s1039 + $0x8] sm:$0xe]
      %v1422 = vld [vmem:[%s1039 + $0x10] sm:$0xe]
      %v1423 = vld [vmem:[%s1039 + $0x18] sm:$0xe]
      %v1424 = vld [vmem:[%s1039 + $0x20] sm:$0xe]
      %v1425 = vld [vmem:[%s1039 + $0x28] sm:$0xe]
      %v1426 = vld [vmem:[%s1039 + $0x30] sm:$0xe]
      %v1427 = vld [vmem:[%s1039 + $0x38] sm:$0xe]
      %v1444 = vrot.slane %v1420, 5
      %v1445 = vrot.slane %v1444, 4
      %v1446 = vrot.slane %v1175, 5
      %v1447 = vsel %vm885, %v1445, %v1446
      %v1448 = vrot.slane %v1421, 5
      %v1449 = vrot.slane %v1448, 4
      %v1450 = vrot.slane %v1177, 5
      %v1451 = vsel %vm885, %v1449, %v1450
      %v1452 = vrot.slane %v1422, 5
      %v1453 = vrot.slane %v1452, 4
      %v1454 = vrot.slane %v1179, 5
      %v1455 = vsel %vm885, %v1453, %v1454
      %v1456 = vrot.slane %v1423, 5
      %v1457 = vrot.slane %v1456, 4
      %v1458 = vrot.slane %v1181, 5
      %v1459 = vsel %vm885, %v1457, %v1458
      %v1460 = vrot.slane %v1424, 5
      %v1461 = vrot.slane %v1460, 4
      %v1462 = vrot.slane %v1183, 5
      %v1463 = vsel %vm885, %v1461, %v1462
      %v1464 = vrot.slane %v1425, 5
      %v1465 = vrot.slane %v1464, 4
      %v1466 = vrot.slane %v1185, 5
      %v1467 = vsel %vm885, %v1465, %v1466
      %v1468 = vrot.slane %v1426, 5
      %v1469 = vrot.slane %v1468, 4
      %v1470 = vrot.slane %v1187, 5
      %v1471 = vsel %vm885, %v1469, %v1470
      %v1472 = vrot.slane %v1427, 5
      %v1473 = vrot.slane %v1472, 4
      %v1474 = vrot.slane %v1189, 5
      %v1475 = vsel %vm885, %v1473, %v1474
      %s1476 = scalar_lea.vmem %s1, 320
      %v1477 = vld [vmem:[%s1476] sm:$0xf]
      %v1478 = vld [vmem:[%s1476 + $0x4] sm:$0xf]
      %v1479 = vld [vmem:[%s1476 + $0x8] sm:$0xf]
      %v1480 = vld [vmem:[%s1476 + $0xc] sm:$0xf]
      %v1481 = vld [vmem:[%s1476 + $0x10] sm:$0xf]
      %v1482 = vld [vmem:[%s1476 + $0x14] sm:$0xf]
      %v1483 = vld [vmem:[%s1476 + $0x18] sm:$0xf]
      %v1484 = vld [vmem:[%s1476 + $0x1c] sm:$0xf]
      %v1485 = vld [vmem:[%s1476 + $0x20] sm:$0xf]
      %v1486 = vld [vmem:[%s1476 + $0x24] sm:$0xf]
      %v1487 = vld [vmem:[%s1476 + $0x28] sm:$0xf]
      %v1488 = vld [vmem:[%s1476 + $0x2c] sm:$0xf]
      %v1489 = vld [vmem:[%s1476 + $0x30] sm:$0xf]
      %v1490 = vld [vmem:[%s1476 + $0x34] sm:$0xf]
      %v1491 = vld [vmem:[%s1476 + $0x38] sm:$0xf]
      %v1492 = vld [vmem:[%s1476 + $0x3c] sm:$0xf]
      %v1493 = vunpack.c.l.b16 %v1447
      %v1494 = vunpack.c.l.b16 %v1451
      %v1495 = vunpack.c.l.b16 %v1455
      %v1496 = vunpack.c.l.b16 %v1459
      %v1497 = vunpack.c.l.b16 %v1463
      %v1498 = vunpack.c.l.b16 %v1467
      %v1499 = vunpack.c.l.b16 %v1471
      %v1500 = vunpack.c.l.b16 %v1475
      %v1501 = vpack.c.b16 %v1494, %v1493
      %v1502 = vpack.c.b16 %v1496, %v1495
      %v1503 = vpack.c.b16 %v1498, %v1497
      %v1504 = vpack.c.b16 %v1500, %v1499
      %v1525 = vunpack.c.l.b16 %v1477
      %v1526 = vunpack.c.l.b16 %v1478
      %v1527 = vunpack.c.l.b16 %v1479
      %v1528 = vunpack.c.l.b16 %v1480
      %v1529 = vunpack.c.l.b16 %v1481
      %v1530 = vunpack.c.l.b16 %v1482
      %v1531 = vunpack.c.l.b16 %v1483
      %v1532 = vunpack.c.l.b16 %v1484
      %v1533 = vunpack.c.l.b16 %v1485
      %v1534 = vunpack.c.l.b16 %v1486
      %v1535 = vunpack.c.l.b16 %v1487
      %v1536 = vunpack.c.l.b16 %v1488
      %v1537 = vunpack.c.l.b16 %v1489
      %v1538 = vunpack.c.l.b16 %v1490
      %v1539 = vunpack.c.l.b16 %v1491
      %v1540 = vunpack.c.l.b16 %v1492
      %v1541 = vpack.c.b16 %v1526, %v1525
      %v1542 = vpack.c.b16 %v1528, %v1527
      %v1543 = vpack.c.b16 %v1530, %v1529
      %v1544 = vpack.c.b16 %v1532, %v1531
      %v1545 = vpack.c.b16 %v1534, %v1533
      %v1546 = vpack.c.b16 %v1536, %v1535
      %v1547 = vpack.c.b16 %v1538, %v1537
      %v1548 = vpack.c.b16 %v1540, %v1539
      %1557 = vmatpush.bf16.msra.mxu0 %v1548
      %1558 = vmatpush.bf16.msra.mxu0 %v1547
      %1559 = vmatpush.bf16.msra.mxu0 %v1546
      %1560 = vmatpush.bf16.msra.mxu0 %v1545
      %1561 = vmatpush.bf16.msra.mxu0 %v1544
      %1562 = vmatpush.bf16.msra.mxu0 %v1543
      %1563 = vmatpush.bf16.msra.mxu0 %v1542
      %1564 = vmatpush.bf16.msra.mxu0 %v1541
      %1565 = vmatmul.bf16.gmra.mxu0 %v1501
      %v1566 = vpop.f32.mrf.mxu0
      %v1567 = vadd.f32 0.0, %v1566
      %v1568 = vpop.f32.mrf.mxu0
      %v1569 = vadd.f32 0.0, %v1568
      %1570 = vmatmul.bf16.gmra.mxu0 %v1502
      %v1571 = vpop.f32.mrf.mxu0
      %v1572 = vadd.f32 0.0, %v1571
      %v1573 = vpop.f32.mrf.mxu0
      %v1574 = vadd.f32 0.0, %v1573
      %1575 = vmatmul.bf16.gmra.mxu0 %v1503
      %v1576 = vpop.f32.mrf.mxu0
      %v1577 = vadd.f32 0.0, %v1576
      %v1578 = vpop.f32.mrf.mxu0
      %v1579 = vadd.f32 0.0, %v1578
      %1580 = vmatmul.bf16.gmra.mxu0 %v1504
      %v1581 = vpop.f32.mrf.mxu0
      %v1582 = vadd.f32 0.0, %v1581
      %v1583 = vpop.f32.mrf.mxu0
      %v1584 = vadd.f32 0.0, %v1583
      %1585 = vdwg.mxu0
      %v1586 = vadd.f32 %v1412, %v1567
      %v1587 = vadd.f32 %v1413, %v1569
      %v1588 = vadd.f32 %v1414, %v1572
      %v1589 = vadd.f32 %v1415, %v1574
      %v1590 = vadd.f32 %v1416, %v1577
      %v1591 = vadd.f32 %v1417, %v1579
      %v1592 = vadd.f32 %v1418, %v1582
      %v1593 = vadd.f32 %v1419, %v1584
      %s1594 = sadd.s32 %s241, 2
      %s1595 = smul.u32 %s1594, 2
      %s1596 = smul.addr %s1595, 4
      %s1597 = scalar_lea.vmem [#allocation2], %s1596
      %v1598 = vld [vmem:[%s1597] sm:$0xf]
      %v1599 = vld [vmem:[%s1597 + $0x8] sm:$0xf]
      %v1600 = vld [vmem:[%s1597 + $0x10] sm:$0xf]
      %v1601 = vld [vmem:[%s1597 + $0x18] sm:$0xf]
      %v1602 = vld [vmem:[%s1597 + $0x20] sm:$0xf]
      %v1603 = vld [vmem:[%s1597 + $0x28] sm:$0xf]
      %v1604 = vld [vmem:[%s1597 + $0x30] sm:$0xf]
      %v1605 = vld [vmem:[%s1597 + $0x38] sm:$0xf]
      %s1606 = scalar_lea.vmem %s1, 384
      %v1607 = vld [vmem:[%s1606] sm:$0xf]
      %v1608 = vld [vmem:[%s1606 + $0x4] sm:$0xf]
      %v1609 = vld [vmem:[%s1606 + $0x8] sm:$0xf]
      %v1610 = vld [vmem:[%s1606 + $0xc] sm:$0xf]
      %v1611 = vld [vmem:[%s1606 + $0x10] sm:$0xf]
      %v1612 = vld [vmem:[%s1606 + $0x14] sm:$0xf]
      %v1613 = vld [vmem:[%s1606 + $0x18] sm:$0xf]
      %v1614 = vld [vmem:[%s1606 + $0x1c] sm:$0xf]
      %v1615 = vld [vmem:[%s1606 + $0x20] sm:$0xf]
      %v1616 = vld [vmem:[%s1606 + $0x24] sm:$0xf]
      %v1617 = vld [vmem:[%s1606 + $0x28] sm:$0xf]
      %v1618 = vld [vmem:[%s1606 + $0x2c] sm:$0xf]
      %v1619 = vld [vmem:[%s1606 + $0x30] sm:$0xf]
      %v1620 = vld [vmem:[%s1606 + $0x34] sm:$0xf]
      %v1621 = vld [vmem:[%s1606 + $0x38] sm:$0xf]
      %v1622 = vld [vmem:[%s1606 + $0x3c] sm:$0xf]
      %v1631 = vunpack.c.l.b16 %v1598
      %v1632 = vunpack.c.l.b16 %v1599
      %v1633 = vunpack.c.l.b16 %v1600
      %v1634 = vunpack.c.l.b16 %v1601
      %v1635 = vunpack.c.l.b16 %v1602
      %v1636 = vunpack.c.l.b16 %v1603
      %v1637 = vunpack.c.l.b16 %v1604
      %v1638 = vunpack.c.l.b16 %v1605
      %v1639 = vpack.c.b16 %v1632, %v1631
      %v1640 = vpack.c.b16 %v1634, %v1633
      %v1641 = vpack.c.b16 %v1636, %v1635
      %v1642 = vpack.c.b16 %v1638, %v1637
      %v1663 = vunpack.c.l.b16 %v1607
      %v1664 = vunpack.c.l.b16 %v1608
      %v1665 = vunpack.c.l.b16 %v1609
      %v1666 = vunpack.c.l.b16 %v1610
      %v1667 = vunpack.c.l.b16 %v1611
      %v1668 = vunpack.c.l.b16 %v1612
      %v1669 = vunpack.c.l.b16 %v1613
      %v1670 = vunpack.c.l.b16 %v1614
      %v1671 = vunpack.c.l.b16 %v1615
      %v1672 = vunpack.c.l.b16 %v1616
      %v1673 = vunpack.c.l.b16 %v1617
      %v1674 = vunpack.c.l.b16 %v1618
      %v1675 = vunpack.c.l.b16 %v1619
      %v1676 = vunpack.c.l.b16 %v1620
      %v1677 = vunpack.c.l.b16 %v1621
      %v1678 = vunpack.c.l.b16 %v1622
      %v1679 = vpack.c.b16 %v1664, %v1663
      %v1680 = vpack.c.b16 %v1666, %v1665
      %v1681 = vpack.c.b16 %v1668, %v1667
      %v1682 = vpack.c.b16 %v1670, %v1669
      %v1683 = vpack.c.b16 %v1672, %v1671
      %v1684 = vpack.c.b16 %v1674, %v1673
      %v1685 = vpack.c.b16 %v1676, %v1675
      %v1686 = vpack.c.b16 %v1678, %v1677
      %1695 = vmatpush.bf16.msra.mxu0 %v1686
      %1696 = vmatpush.bf16.msra.mxu0 %v1685
      %1697 = vmatpush.bf16.msra.mxu0 %v1684
      %1698 = vmatpush.bf16.msra.mxu0 %v1683
      %1699 = vmatpush.bf16.msra.mxu0 %v1682
      %1700 = vmatpush.bf16.msra.mxu0 %v1681
      %1701 = vmatpush.bf16.msra.mxu0 %v1680
      %1702 = vmatpush.bf16.msra.mxu0 %v1679
      %1703 = vmatmul.bf16.gmra.mxu0 %v1639
      %v1704 = vpop.f32.mrf.mxu0
      %v1705 = vadd.f32 0.0, %v1704
      %v1706 = vpop.f32.mrf.mxu0
      %v1707 = vadd.f32 0.0, %v1706
      %1708 = vmatmul.bf16.gmra.mxu0 %v1640
      %v1709 = vpop.f32.mrf.mxu0
      %v1710 = vadd.f32 0.0, %v1709
      %v1711 = vpop.f32.mrf.mxu0
      %v1712 = vadd.f32 0.0, %v1711
      %1713 = vmatmul.bf16.gmra.mxu0 %v1641
      %v1714 = vpop.f32.mrf.mxu0
      %v1715 = vadd.f32 0.0, %v1714
      %v1716 = vpop.f32.mrf.mxu0
      %v1717 = vadd.f32 0.0, %v1716
      %1718 = vmatmul.bf16.gmra.mxu0 %v1642
      %v1719 = vpop.f32.mrf.mxu0
      %v1720 = vadd.f32 0.0, %v1719
      %v1721 = vpop.f32.mrf.mxu0
      %v1722 = vadd.f32 0.0, %v1721
      %1723 = vdwg.mxu0
      %v1724 = vadd.f32 %v1586, %v1705
      %v1725 = vadd.f32 %v1587, %v1707
      %v1726 = vadd.f32 %v1588, %v1710
      %v1727 = vadd.f32 %v1589, %v1712
      %v1728 = vadd.f32 %v1590, %v1715
      %v1729 = vadd.f32 %v1591, %v1717
      %v1730 = vadd.f32 %v1592, %v1720
      %v1731 = vadd.f32 %v1593, %v1722
      %v1732 = vld [vmem:[%s1597] sm:$0xf]
      %v1733 = vld [vmem:[%s1597 + $0x4] sm:$0x1]
      %v1734 = vld [vmem:[%s1597 + $0x8] sm:$0xf]
      %v1735 = vld [vmem:[%s1597 + $0xc] sm:$0x1]
      %v1736 = vld [vmem:[%s1597 + $0x10] sm:$0xf]
      %v1737 = vld [vmem:[%s1597 + $0x14] sm:$0x1]
      %v1738 = vld [vmem:[%s1597 + $0x18] sm:$0xf]
      %v1739 = vld [vmem:[%s1597 + $0x1c] sm:$0x1]
      %v1740 = vld [vmem:[%s1597 + $0x20] sm:$0xf]
      %v1741 = vld [vmem:[%s1597 + $0x24] sm:$0x1]
      %v1742 = vld [vmem:[%s1597 + $0x28] sm:$0xf]
      %v1743 = vld [vmem:[%s1597 + $0x2c] sm:$0x1]
      %v1744 = vld [vmem:[%s1597 + $0x30] sm:$0xf]
      %v1745 = vld [vmem:[%s1597 + $0x34] sm:$0x1]
      %v1746 = vld [vmem:[%s1597 + $0x38] sm:$0xf]
      %v1747 = vld [vmem:[%s1597 + $0x3c] sm:$0x1]
      %v1749 = vshrl.u32 %v1732, 16
      %v1751 = vrot.slane %v1749, 4
      %v1752 = vshll.u32 %v1732, 16
      %v1754 = vrot.slane %v1752, 5
      %v1755 = vor.u32 %v1751, %v1754
      %v1756 = vrot.slane %v1755, 4
      %v1758 = vshll.u32 %v1733, 16
      %v1760 = vrot.slane %v1758, 5
      %v1761 = vsel %vm535, %v1756, %v1760
      %v1763 = vshrl.u32 %v1734, 16
      %v1765 = vrot.slane %v1763, 4
      %v1766 = vshll.u32 %v1734, 16
      %v1768 = vrot.slane %v1766, 5
      %v1769 = vor.u32 %v1765, %v1768
      %v1770 = vrot.slane %v1769, 4
      %v1772 = vshll.u32 %v1735, 16
      %v1774 = vrot.slane %v1772, 5
      %v1775 = vsel %vm535, %v1770, %v1774
      %v1777 = vshrl.u32 %v1736, 16
      %v1779 = vrot.slane %v1777, 4
      %v1780 = vshll.u32 %v1736, 16
      %v1782 = vrot.slane %v1780, 5
      %v1783 = vor.u32 %v1779, %v1782
      %v1784 = vrot.slane %v1783, 4
      %v1786 = vshll.u32 %v1737, 16
      %v1788 = vrot.slane %v1786, 5
      %v1789 = vsel %vm535, %v1784, %v1788
      %v1791 = vshrl.u32 %v1738, 16
      %v1793 = vrot.slane %v1791, 4
      %v1794 = vshll.u32 %v1738, 16
      %v1796 = vrot.slane %v1794, 5
      %v1797 = vor.u32 %v1793, %v1796
      %v1798 = vrot.slane %v1797, 4
      %v1800 = vshll.u32 %v1739, 16
      %v1802 = vrot.slane %v1800, 5
      %v1803 = vsel %vm535, %v1798, %v1802
      %v1805 = vshrl.u32 %v1740, 16
      %v1807 = vrot.slane %v1805, 4
      %v1808 = vshll.u32 %v1740, 16
      %v1810 = vrot.slane %v1808, 5
      %v1811 = vor.u32 %v1807, %v1810
      %v1812 = vrot.slane %v1811, 4
      %v1814 = vshll.u32 %v1741, 16
      %v1816 = vrot.slane %v1814, 5
      %v1817 = vsel %vm535, %v1812, %v1816
      %v1819 = vshrl.u32 %v1742, 16
      %v1821 = vrot.slane %v1819, 4
      %v1822 = vshll.u32 %v1742, 16
      %v1824 = vrot.slane %v1822, 5
      %v1825 = vor.u32 %v1821, %v1824
      %v1826 = vrot.slane %v1825, 4
      %v1828 = vshll.u32 %v1743, 16
      %v1830 = vrot.slane %v1828, 5
      %v1831 = vsel %vm535, %v1826, %v1830
      %v1833 = vshrl.u32 %v1744, 16
      %v1835 = vrot.slane %v1833, 4
      %v1836 = vshll.u32 %v1744, 16
      %v1838 = vrot.slane %v1836, 5
      %v1839 = vor.u32 %v1835, %v1838
      %v1840 = vrot.slane %v1839, 4
      %v1842 = vshll.u32 %v1745, 16
      %v1844 = vrot.slane %v1842, 5
      %v1845 = vsel %vm535, %v1840, %v1844
      %v1847 = vshrl.u32 %v1746, 16
      %v1849 = vrot.slane %v1847, 4
      %v1850 = vshll.u32 %v1746, 16
      %v1852 = vrot.slane %v1850, 5
      %v1853 = vor.u32 %v1849, %v1852
      %v1854 = vrot.slane %v1853, 4
      %v1856 = vshll.u32 %v1747, 16
      %v1858 = vrot.slane %v1856, 5
      %v1859 = vsel %vm535, %v1854, %v1858
      %s1860 = scalar_lea.vmem %s1, 448
      %v1861 = vld [vmem:[%s1860] sm:$0xf]
      %v1862 = vld [vmem:[%s1860 + $0x4] sm:$0xf]
      %v1863 = vld [vmem:[%s1860 + $0x8] sm:$0xf]
      %v1864 = vld [vmem:[%s1860 + $0xc] sm:$0xf]
      %v1865 = vld [vmem:[%s1860 + $0x10] sm:$0xf]
      %v1866 = vld [vmem:[%s1860 + $0x14] sm:$0xf]
      %v1867 = vld [vmem:[%s1860 + $0x18] sm:$0xf]
      %v1868 = vld [vmem:[%s1860 + $0x1c] sm:$0xf]
      %v1869 = vld [vmem:[%s1860 + $0x20] sm:$0xf]
      %v1870 = vld [vmem:[%s1860 + $0x24] sm:$0xf]
      %v1871 = vld [vmem:[%s1860 + $0x28] sm:$0xf]
      %v1872 = vld [vmem:[%s1860 + $0x2c] sm:$0xf]
      %v1873 = vld [vmem:[%s1860 + $0x30] sm:$0xf]
      %v1874 = vld [vmem:[%s1860 + $0x34] sm:$0xf]
      %v1875 = vld [vmem:[%s1860 + $0x38] sm:$0xf]
      %v1876 = vld [vmem:[%s1860 + $0x3c] sm:$0xf]
      %v1877 = vunpack.c.l.b16 %v1761
      %v1878 = vunpack.c.l.b16 %v1775
      %v1879 = vunpack.c.l.b16 %v1789
      %v1880 = vunpack.c.l.b16 %v1803
      %v1881 = vunpack.c.l.b16 %v1817
      %v1882 = vunpack.c.l.b16 %v1831
      %v1883 = vunpack.c.l.b16 %v1845
      %v1884 = vunpack.c.l.b16 %v1859
      %v1885 = vpack.c.b16 %v1878, %v1877
      %v1886 = vpack.c.b16 %v1880, %v1879
      %v1887 = vpack.c.b16 %v1882, %v1881
      %v1888 = vpack.c.b16 %v1884, %v1883
      %v1909 = vunpack.c.l.b16 %v1861
      %v1910 = vunpack.c.l.b16 %v1862
      %v1911 = vunpack.c.l.b16 %v1863
      %v1912 = vunpack.c.l.b16 %v1864
      %v1913 = vunpack.c.l.b16 %v1865
      %v1914 = vunpack.c.l.b16 %v1866
      %v1915 = vunpack.c.l.b16 %v1867
      %v1916 = vunpack.c.l.b16 %v1868
      %v1917 = vunpack.c.l.b16 %v1869
      %v1918 = vunpack.c.l.b16 %v1870
      %v1919 = vunpack.c.l.b16 %v1871
      %v1920 = vunpack.c.l.b16 %v1872
      %v1921 = vunpack.c.l.b16 %v1873
      %v1922 = vunpack.c.l.b16 %v1874
      %v1923 = vunpack.c.l.b16 %v1875
      %v1924 = vunpack.c.l.b16 %v1876
      %v1925 = vpack.c.b16 %v1910, %v1909
      %v1926 = vpack.c.b16 %v1912, %v1911
      %v1927 = vpack.c.b16 %v1914, %v1913
      %v1928 = vpack.c.b16 %v1916, %v1915
      %v1929 = vpack.c.b16 %v1918, %v1917
      %v1930 = vpack.c.b16 %v1920, %v1919
      %v1931 = vpack.c.b16 %v1922, %v1921
      %v1932 = vpack.c.b16 %v1924, %v1923
      %1941 = vmatpush.bf16.msra.mxu0 %v1932
      %1942 = vmatpush.bf16.msra.mxu0 %v1931
      %1943 = vmatpush.bf16.msra.mxu0 %v1930
      %1944 = vmatpush.bf16.msra.mxu0 %v1929
      %1945 = vmatpush.bf16.msra.mxu0 %v1928
      %1946 = vmatpush.bf16.msra.mxu0 %v1927
      %1947 = vmatpush.bf16.msra.mxu0 %v1926
      %1948 = vmatpush.bf16.msra.mxu0 %v1925
      %1949 = vmatmul.bf16.gmra.mxu0 %v1885
      %v1950 = vpop.f32.mrf.mxu0
      %v1951 = vadd.f32 0.0, %v1950
      %v1952 = vpop.f32.mrf.mxu0
      %v1953 = vadd.f32 0.0, %v1952
      %1954 = vmatmul.bf16.gmra.mxu0 %v1886
      %v1955 = vpop.f32.mrf.mxu0
      %v1956 = vadd.f32 0.0, %v1955
      %v1957 = vpop.f32.mrf.mxu0
      %v1958 = vadd.f32 0.0, %v1957
      %1959 = vmatmul.bf16.gmra.mxu0 %v1887
      %v1960 = vpop.f32.mrf.mxu0
      %v1961 = vadd.f32 0.0, %v1960
      %v1962 = vpop.f32.mrf.mxu0
      %v1963 = vadd.f32 0.0, %v1962
      %1964 = vmatmul.bf16.gmra.mxu0 %v1888
      %v1965 = vpop.f32.mrf.mxu0
      %v1966 = vadd.f32 0.0, %v1965
      %v1967 = vpop.f32.mrf.mxu0
      %v1968 = vadd.f32 0.0, %v1967
      %1969 = vdwg.mxu0
      %v1970 = vadd.f32 %v1724, %v1951
      %v1971 = vadd.f32 %v1725, %v1953
      %v1972 = vadd.f32 %v1726, %v1956
      %v1973 = vadd.f32 %v1727, %v1958
      %v1974 = vadd.f32 %v1728, %v1961
      %v1975 = vadd.f32 %v1729, %v1963
      %v1976 = vadd.f32 %v1730, %v1966
      %v1977 = vadd.f32 %v1731, %v1968
      %v1978 = vld [vmem:[%s1597] sm:$0xe]
      %v1979 = vld [vmem:[%s1597 + $0x8] sm:$0xe]
      %v1980 = vld [vmem:[%s1597 + $0x10] sm:$0xe]
      %v1981 = vld [vmem:[%s1597 + $0x18] sm:$0xe]
      %v1982 = vld [vmem:[%s1597 + $0x20] sm:$0xe]
      %v1983 = vld [vmem:[%s1597 + $0x28] sm:$0xe]
      %v1984 = vld [vmem:[%s1597 + $0x30] sm:$0xe]
      %v1985 = vld [vmem:[%s1597 + $0x38] sm:$0xe]
      %v2002 = vrot.slane %v1978, 5
      %v2003 = vrot.slane %v2002, 4
      %v2004 = vrot.slane %v1733, 5
      %v2005 = vsel %vm885, %v2003, %v2004
      %v2006 = vrot.slane %v1979, 5
      %v2007 = vrot.slane %v2006, 4
      %v2008 = vrot.slane %v1735, 5
      %v2009 = vsel %vm885, %v2007, %v2008
      %v2010 = vrot.slane %v1980, 5
      %v2011 = vrot.slane %v2010, 4
      %v2012 = vrot.slane %v1737, 5
      %v2013 = vsel %vm885, %v2011, %v2012
      %v2014 = vrot.slane %v1981, 5
      %v2015 = vrot.slane %v2014, 4
      %v2016 = vrot.slane %v1739, 5
      %v2017 = vsel %vm885, %v2015, %v2016
      %v2018 = vrot.slane %v1982, 5
      %v2019 = vrot.slane %v2018, 4
      %v2020 = vrot.slane %v1741, 5
      %v2021 = vsel %vm885, %v2019, %v2020
      %v2022 = vrot.slane %v1983, 5
      %v2023 = vrot.slane %v2022, 4
      %v2024 = vrot.slane %v1743, 5
      %v2025 = vsel %vm885, %v2023, %v2024
      %v2026 = vrot.slane %v1984, 5
      %v2027 = vrot.slane %v2026, 4
      %v2028 = vrot.slane %v1745, 5
      %v2029 = vsel %vm885, %v2027, %v2028
      %v2030 = vrot.slane %v1985, 5
      %v2031 = vrot.slane %v2030, 4
      %v2032 = vrot.slane %v1747, 5
      %v2033 = vsel %vm885, %v2031, %v2032
      %s2034 = scalar_lea.vmem %s1, 512
      %v2035 = vld [vmem:[%s2034] sm:$0xf]
      %v2036 = vld [vmem:[%s2034 + $0x4] sm:$0xf]
      %v2037 = vld [vmem:[%s2034 + $0x8] sm:$0xf]
      %v2038 = vld [vmem:[%s2034 + $0xc] sm:$0xf]
      %v2039 = vld [vmem:[%s2034 + $0x10] sm:$0xf]
      %v2040 = vld [vmem:[%s2034 + $0x14] sm:$0xf]
      %v2041 = vld [vmem:[%s2034 + $0x18] sm:$0xf]
      %v2042 = vld [vmem:[%s2034 + $0x1c] sm:$0xf]
      %v2043 = vld [vmem:[%s2034 + $0x20] sm:$0xf]
      %v2044 = vld [vmem:[%s2034 + $0x24] sm:$0xf]
      %v2045 = vld [vmem:[%s2034 + $0x28] sm:$0xf]
      %v2046 = vld [vmem:[%s2034 + $0x2c] sm:$0xf]
      %v2047 = vld [vmem:[%s2034 + $0x30] sm:$0xf]
      %v2048 = vld [vmem:[%s2034 + $0x34] sm:$0xf]
      %v2049 = vld [vmem:[%s2034 + $0x38] sm:$0xf]
      %v2050 = vld [vmem:[%s2034 + $0x3c] sm:$0xf]
      %v2051 = vunpack.c.l.b16 %v2005
      %v2052 = vunpack.c.l.b16 %v2009
      %v2053 = vunpack.c.l.b16 %v2013
      %v2054 = vunpack.c.l.b16 %v2017
      %v2055 = vunpack.c.l.b16 %v2021
      %v2056 = vunpack.c.l.b16 %v2025
      %v2057 = vunpack.c.l.b16 %v2029
      %v2058 = vunpack.c.l.b16 %v2033
      %v2059 = vpack.c.b16 %v2052, %v2051
      %v2060 = vpack.c.b16 %v2054, %v2053
      %v2061 = vpack.c.b16 %v2056, %v2055
      %v2062 = vpack.c.b16 %v2058, %v2057
      %v2083 = vunpack.c.l.b16 %v2035
      %v2084 = vunpack.c.l.b16 %v2036
      %v2085 = vunpack.c.l.b16 %v2037
      %v2086 = vunpack.c.l.b16 %v2038
      %v2087 = vunpack.c.l.b16 %v2039
      %v2088 = vunpack.c.l.b16 %v2040
      %v2089 = vunpack.c.l.b16 %v2041
      %v2090 = vunpack.c.l.b16 %v2042
      %v2091 = vunpack.c.l.b16 %v2043
      %v2092 = vunpack.c.l.b16 %v2044
      %v2093 = vunpack.c.l.b16 %v2045
      %v2094 = vunpack.c.l.b16 %v2046
      %v2095 = vunpack.c.l.b16 %v2047
      %v2096 = vunpack.c.l.b16 %v2048
      %v2097 = vunpack.c.l.b16 %v2049
      %v2098 = vunpack.c.l.b16 %v2050
      %v2099 = vpack.c.b16 %v2084, %v2083
      %v2100 = vpack.c.b16 %v2086, %v2085
      %v2101 = vpack.c.b16 %v2088, %v2087
      %v2102 = vpack.c.b16 %v2090, %v2089
      %v2103 = vpack.c.b16 %v2092, %v2091
      %v2104 = vpack.c.b16 %v2094, %v2093
      %v2105 = vpack.c.b16 %v2096, %v2095
      %v2106 = vpack.c.b16 %v2098, %v2097
      %2115 = vmatpush.bf16.msra.mxu0 %v2106
      %2116 = vmatpush.bf16.msra.mxu0 %v2105
      %2117 = vmatpush.bf16.msra.mxu0 %v2104
      %2118 = vmatpush.bf16.msra.mxu0 %v2103
      %2119 = vmatpush.bf16.msra.mxu0 %v2102
      %2120 = vmatpush.bf16.msra.mxu0 %v2101
      %2121 = vmatpush.bf16.msra.mxu0 %v2100
      %2122 = vmatpush.bf16.msra.mxu0 %v2099
      %2123 = vmatmul.bf16.gmra.mxu0 %v2059
      %v2124 = vpop.f32.mrf.mxu0
      %v2125 = vadd.f32 0.0, %v2124
      %v2126 = vpop.f32.mrf.mxu0
      %v2127 = vadd.f32 0.0, %v2126
      %2128 = vmatmul.bf16.gmra.mxu0 %v2060
      %v2129 = vpop.f32.mrf.mxu0
      %v2130 = vadd.f32 0.0, %v2129
      %v2131 = vpop.f32.mrf.mxu0
      %v2132 = vadd.f32 0.0, %v2131
      %2133 = vmatmul.bf16.gmra.mxu0 %v2061
      %v2134 = vpop.f32.mrf.mxu0
      %v2135 = vadd.f32 0.0, %v2134
      %v2136 = vpop.f32.mrf.mxu0
      %v2137 = vadd.f32 0.0, %v2136
      %2138 = vmatmul.bf16.gmra.mxu0 %v2062
      %v2139 = vpop.f32.mrf.mxu0
      %v2140 = vadd.f32 0.0, %v2139
      %v2141 = vpop.f32.mrf.mxu0
      %v2142 = vadd.f32 0.0, %v2141
      %2143 = vdwg.mxu0
      %v2144 = vadd.f32 %v1970, %v2125
      %v2145 = vadd.f32 %v1971, %v2127
      %v2146 = vadd.f32 %v1972, %v2130
      %v2147 = vadd.f32 %v1973, %v2132
      %v2148 = vadd.f32 %v1974, %v2135
      %v2149 = vadd.f32 %v1975, %v2137
      %v2150 = vadd.f32 %v1976, %v2140
      %v2151 = vadd.f32 %v1977, %v2142
      %v2152 = vpack.c.bf16 %v2144, %v2144
      %v2153 = vpack.c.bf16 %v2145, %v2145
      %v2154 = vpack.c.bf16 %v2146, %v2146
      %v2155 = vpack.c.bf16 %v2147, %v2147
      %v2156 = vpack.c.bf16 %v2148, %v2148
      %v2157 = vpack.c.bf16 %v2149, %v2149
      %v2158 = vpack.c.bf16 %v2150, %v2150
      %v2159 = vpack.c.bf16 %v2151, %v2151
      %2160 = vst [vmem:[%s231] sm:$0xf] %v2152
      %2161 = vst [vmem:[%s231 + $0x4] sm:$0xf] %v2153
      %2162 = vst [vmem:[%s231 + $0x8] sm:$0xf] %v2154
      %2163 = vst [vmem:[%s231 + $0xc] sm:$0xf] %v2155
      %2164 = vst [vmem:[%s231 + $0x10] sm:$0xf] %v2156
      %2165 = vst [vmem:[%s231 + $0x14] sm:$0xf] %v2157
      %2166 = vst [vmem:[%s231 + $0x18] sm:$0xf] %v2158
      %2167 = vst [vmem:[%s231 + $0x1c] sm:$0xf] %v2159
      %v2168 = vadd.f32 %v2144, %v2145
      %v2169 = vadd.f32 %v2168, %v2146
      %v2170 = vadd.f32 %v2169, %v2147
      %v2171 = vadd.f32 %v2170, %v2148
      %v2172 = vadd.f32 %v2171, %v2149
      %v2173 = vadd.f32 %v2172, %v2150
      %v2174 = vadd.f32 %v2173, %v2151
      %v2175 = vrot.slane %v2174, 4
      %v2176 = vadd.f32 %v2174, %v2175
      %v2177 = vrot.slane %v2176, 2
      %v2178 = vadd.f32 %v2176, %v2177
      %v2179 = vrot.slane %v2178, 1
      %v2180 = vadd.f32 %v2178, %v2179
      %v2181 = vmul.f32 %v2144, %v2144
      %v2182 = vmul.f32 %v2145, %v2145
      %v2183 = vmul.f32 %v2146, %v2146
      %v2184 = vmul.f32 %v2147, %v2147
      %v2185 = vmul.f32 %v2148, %v2148
      %v2186 = vmul.f32 %v2149, %v2149
      %v2187 = vmul.f32 %v2150, %v2150
      %v2188 = vmul.f32 %v2151, %v2151
      %v2189 = vadd.f32 %v2181, %v2182
      %v2190 = vadd.f32 %v2189, %v2183
      %v2191 = vadd.f32 %v2190, %v2184
      %v2192 = vadd.f32 %v2191, %v2185
      %v2193 = vadd.f32 %v2192, %v2186
      %v2194 = vadd.f32 %v2193, %v2187
      %v2195 = vadd.f32 %v2194, %v2188
      %v2196 = vrot.slane %v2195, 4
      %v2197 = vadd.f32 %v2195, %v2196
      %v2198 = vrot.slane %v2197, 2
      %v2199 = vadd.f32 %v2197, %v2198
      %v2200 = vrot.slane %v2199, 1
      %v2201 = vadd.f32 %v2199, %v2200
      %vm2202 = vcmask 1040384
      %v2203 = vsel %vm2202, %v2180, %v2201
      %2204 = vst [vmem:[%s239] sm:$0x3] %v2203
      %s2205 = smul.u32 8, %s21
      %p2206 = scmp.lt.s32.totalorder %s20, 1
      %s2207 = scalar_select %p2206, %s20, 1
      %p2208 = scmp.lt.s32.totalorder %s2205, 7
      %s2209 = scalar_select %p2208, %s2205, 7
      %s2210 = smul.addr %s2207, 8
      %s2211 = sadd.s32 %s2209, %s2210
      %s2212 = smul.addr %s2211, 4
      %s2213 = scalar_lea.vmem %s3, %s2212
      %p2214 = scmp.lt.s32.totalorder %s20, 1
      %s2215 = scalar_select %p2214, %s20, 1
      %p2216 = scmp.lt.s32.totalorder %s21, 0
      %s2217 = scalar_select %p2216, %s21, 0
      %s2218 = sadd.s32 %s2217, %s2215
      %s2219 = smul.addr %s2218, 2
      %s2220 = scalar_lea.vmem %s4, %s2219
      // Predicated region
      $region37: #{basic_block_forward.4} parent=31 // pred_check
        %p2221 = pneg %p116
      $region38: #{basic_block_forward.4} parent=31 // pred_check_branch
        %2223 = sbr.rel (%p2221) target = $region40
      $region39: #{basic_block_forward.4} parent=31 // pred_region
        %s2224 = smul.u32 8, %s21
      $region40: #{basic_block_forward.4} parent=31 // pred_fallthru
        _
      // Predicated region
      $region41: #{basic_block_forward.4} parent=31 // pred_check
        %p2225 = pneg %p144
      $region42: #{basic_block_forward.4} parent=31 // pred_check_branch
        %2227 = sbr.rel (%p2225) target = $region44
      $region43: #{basic_block_forward.4} parent=31 // pred_region
        _
      $region44: #{basic_block_forward.4} parent=31 // pred_fallthru
        _
    $region32: #{basic_block_forward.4} parent=5 // pred_fallthru
      _
    %p2228 = scmp.le.s32.totalorder 2, %s11
    // Predicated region
    $region45: #{basic_block_forward.4} parent=5 // pred_check
      %p2229 = pneg %p2228
    $region46: #{basic_block_forward.4} parent=5 // pred_check_branch
      %2231 = sbr.rel (%p2229) target = $region48
    $region47: #{basic_block_forward.4} parent=5 // pred_region
      %s2232 = ssub.s32 %s11, 2
      // Predicated region
      $region49: #{basic_block_forward.4} parent=47 // pred_check
        %p2233 = pneg %p122
      $region50: #{basic_block_forward.4} parent=47 // pred_check_branch
        %2235 = sbr.rel (%p2233) target = $region52
      $region51: #{basic_block_forward.4} parent=47 // pred_region
        %s2236 = smul.u32 8, %s23
        %p2237 = scmp.lt.s32.totalorder %s22, 1
        %s2238 = scalar_select %p2237, %s22, 1
        %p2239 = scmp.lt.s32.totalorder %s2236, 7
        %s2240 = scalar_select %p2239, %s2236, 7
        %s2241 = smul.addr %s2238, 8
        %s2242 = sadd.s32 %s2240, %s2241
        %s2243 = smul.addr %s2242, 4
        %s2244 = scalar_lea.vmem %s3, %s2243
      $region52: #{basic_block_forward.4} parent=47 // pred_fallthru
        _
      // Predicated region
      $region53: #{basic_block_forward.4} parent=47 // pred_check
        %p2245 = pneg %p150
      $region54: #{basic_block_forward.4} parent=47 // pred_check_branch
        %2247 = sbr.rel (%p2245) target = $region56
      $region55: #{basic_block_forward.4} parent=47 // pred_region
        %p2248 = scmp.lt.s32.totalorder %s22, 1
        %s2249 = scalar_select %p2248, %s22, 1
        %p2250 = scmp.lt.s32.totalorder %s23, 0
        %s2251 = scalar_select %p2250, %s23, 0
        %s2252 = sadd.s32 %s2251, %s2249
        %s2253 = smul.addr %s2252, 2
        %s2254 = scalar_lea.vmem %s4, %s2253
      $region56: #{basic_block_forward.4} parent=47 // pred_fallthru
        _
    $region48: #{basic_block_forward.4} parent=5 // pred_fallthru
      _
  $region6: #{basic_block_forward.4} parent=0 // loop_footer
    %s15 = sadd.s32 1, %s11
  $region7: #{basic_block_forward.4} parent=0 // loop_footer_branch
    %10 = sbr.rel target = $region3
  $region8: #{basic_block_forward.4} parent=0 // loop_exit
    _

</llo_original>
